<compile_context>
chip_gen: v5e
topology: v5e:2x2
jax: 0.10.0
libtpu: 0.0.40
codegen_flags: <defaults>
</compile_context>

<pallas_src>
from functools import partial

import jax
import jax.numpy as jnp
from jax.experimental import pallas as pl
from jax.experimental.pallas import tpu as pltpu


def _resblock_kernel(x_ref, xt0_ref, xt1_ref, xb0_ref, xb1_ref,
                     w1_ref, b1_ref, w2_ref, b2_ref,
                     out_ref, f1_ref, f2_ref, *, TH, H, W, K):
    """Fused ResBlock body for one (batch, row-tile) grid step.

    x_ref    : (1, TH*Wp, Cin)   bf16  W-padded row tile (flattened rows; also residual)
    xt0/xt1  : (1, 1, Wp, Cin)   bf16  input rows i*TH-2 / i*TH-1 (clamped at border)
    xb0/xb1  : (1, 1, Wp, Cin)   bf16  input rows i*TH+TH / i*TH+TH+1 (clamped)
    w1_ref   : (K, K*Cin, Cout)  bf16  conv1 weights, kx taps stacked along contraction
    b1_ref   : (1, Cout)         f32
    w2_ref   : (K, K*Cout, Cout) bf16
    b2_ref   : (1, Cout)         f32
    out_ref  : (1, TH*Wp, Cout)  f32   flattened output rows (padded cols are garbage)
    f1_ref   : VMEM ((TH+4)*Wp, 3*Cin)  bf16  kx-fused conv1 operand
    f2_ref   : VMEM ((TH+2)*Wp, 3*Cout) bf16  kx-fused conv2 operand
    """
    i = pl.program_id(1)
    p = K // 2
    Wp = W + 2 * p
    M = TH * Wp                  # conv2 output positions (flattened)
    M2 = (TH + 2) * Wp           # conv1 output positions (tile rows + 1 halo row/side)
    L1 = (TH + 4) * Wp           # padded-input positions feeding conv1
    Cin = x_ref.shape[-1]
    Cout = out_ref.shape[-1]
    f32, bf16 = jnp.float32, jnp.bfloat16

    # ---- stage the centre (kx=1) column block of conv1's fused operand ------
    # f1[:, Cin:2Cin][r] == padded-input position r+1 of the window
    #   [row i*TH-2, row i*TH-1, tile rows, row i*TH+TH, row i*TH+TH+1]
    zrow_in = jnp.zeros((Wp, Cin), bf16)
    top0 = jnp.where(i * TH >= 2, xt0_ref[0, 0], zrow_in)
    top1 = jnp.where(i * TH >= 1, xt1_ref[0, 0], zrow_in)
    bot0 = jnp.where((i + 1) * TH <= H - 1, xb0_ref[0, 0], zrow_in)
    bot1 = jnp.where((i + 1) * TH + 1 <= H - 1, xb1_ref[0, 0], zrow_in)
    x_tile = x_ref[0]                                  # (M, Cin) bf16

    c0, c1, c2, c3 = 0, Cin, 2 * Cin, 3 * Cin
    f1_ref[0:Wp, c1:c2] = top0
    f1_ref[Wp:2 * Wp, c1:c2] = top1
    f1_ref[2 * Wp:2 * Wp + M, c1:c2] = x_tile
    f1_ref[2 * Wp + M:3 * Wp + M, c1:c2] = bot0
    f1_ref[3 * Wp + M:L1, c1:c2] = bot1
    # kx=0 / kx=2 column blocks = centre block shifted by +/- one position.
    f1_ref[0:1, c0:c1] = jnp.zeros((1, Cin), bf16)
    f1_ref[1:L1, c0:c1] = f1_ref[0:L1 - 1, c1:c2]
    f1_ref[0:L1 - 1, c2:c3] = f1_ref[1:L1, c1:c2]
    f1_ref[L1 - 1:L1, c2:c3] = jnp.zeros((1, Cin), bf16)

    # ---- conv1 + bias + ReLU over TH+2 rows: 3 matmuls, contraction 3*Cin ---
    acc = jnp.zeros((M2, Cout), f32)
    for ky in range(K):
        acc = acc + jnp.dot(f1_ref[ky * Wp:ky * Wp + M2, :], w1_ref[ky],
                            preferred_element_type=f32)
    h = jnp.maximum(acc + b1_ref[...], 0.0)

    # Zero the two W-padding columns, and (only at the real image border) the
    # halo rows, so they act as conv2's SAME zero padding.  Interior tile
    # boundaries keep the true neighbour conv1 activations (the bug fix).
    r = jax.lax.broadcasted_iota(jnp.int32, (M2, 1), 0)
    col = r % Wp
    mask = (col >= 1) & (col <= W)
    mask = mask & ((r >= Wp) | (i * TH >= 1))
    mask = mask & ((r < M2 - Wp) | ((i + 1) * TH <= H - 1))
    hb = jnp.where(mask, h, 0.0).astype(bf16)          # single cast per tile

    # ---- stage conv2's kx-fused operand -------------------------------------
    d0, d1, d2, d3 = 0, Cout, 2 * Cout, 3 * Cout
    f2_ref[:, d1:d2] = hb
    f2_ref[0:1, d0:d1] = jnp.zeros((1, Cout), bf16)
    f2_ref[1:M2, d0:d1] = hb[0:M2 - 1, :]
    f2_ref[0:M2 - 1, d2:d3] = hb[1:M2, :]
    f2_ref[M2 - 1:M2, d2:d3] = jnp.zeros((1, Cout), bf16)

    # ---- conv2 + bias + residual add ----------------------------------------
    acc2 = jnp.zeros((M, Cout), f32)
    for ky in range(K):
        acc2 = acc2 + jnp.dot(f2_ref[ky * Wp:ky * Wp + M, :], w2_ref[ky],
                              preferred_element_type=f32)
    out_ref[0] = (acc2 + b2_ref[...] + x_tile.astype(f32)).astype(out_ref.dtype)


def _vmem_capacity_bytes():
    """Generation-aware VMEM capacity (falls back to v7x's 64 MiB per core)."""
    try:
        cap = int(pltpu.get_tpu_info().vmem_capacity_bytes)
        if cap > 0:
            return cap
    except Exception:
        pass
    return 64 << 20


def _tile_footprint_bytes(TH, Wp, Cin, Cout, K):
    """Whole-tile VMEM footprint: double-buffered blocks + scratch + weights +
    an allowance for compiler-managed intermediates."""
    M, M2, L1 = TH * Wp, (TH + 2) * Wp, (TH + 4) * Wp
    bf2, f4 = 2, 4
    blocks = 2 * (M * Cin * bf2 + 4 * Wp * Cin * bf2 + M * Cout * f4)
    scratch = L1 * 3 * Cin * bf2 + M2 * 3 * Cout * bf2
    weights = 2 * (K * K * (Cin + Cout) * Cout * bf2 + 2 * Cout * f4)
    interm = M2 * Cout * (f4 + bf2) + M * Cout * f4 + M2 * 3 * max(Cin, Cout) * bf2
    return blocks + scratch + weights + interm


def _pick_row_tile(N, H, Wp, Cin, Cout, K, budget_bytes):
    """Largest row tile TH dividing H whose whole footprint fits the budget.
    Prefers tiles that keep the (batch x row-tile) grid even (v7x megacore
    balance) and keep the flattened block a multiple of 16 (bf16 packing)."""
    cands = [d for d in range(1, H + 1)
             if H % d == 0 and ((d * Wp) % 8 == 0 or d == H)]
    fit = [d for d in cands
           if _tile_footprint_bytes(d, Wp, Cin, Cout, K) <= budget_bytes]
    if not fit:
        return min(cands)            # correctness fallback (perf-degenerate)
    even = [d for d in fit if (N * (H // d)) % 2 == 0]
    pool = even if even else fit
    al16 = [d for d in pool if (d * Wp) % 16 == 0]
    pool = al16 if al16 else pool
    return max(pool)


def resblock_pallas_nhwc(x_nhwc, w1_pt, b1, w2_pt, b2, kernel_size=3,
                         row_tile=None):
    """NHWC ResBlock. x_nhwc: (N,H,W,Cin); w*_pt: (Cout,Cin,K,K); b*: (Cout,)."""
    N, H, W, Cin = x_nhwc.shape
    Cout = w1_pt.shape[0]
    K = kernel_size
    if K != 3:
        raise NotImplementedError("halo exchange implemented for kernel_size=3")
    if Cin != Cout:
        raise ValueError("residual add requires in_channels == out_channels")
    assert w1_pt.shape == (Cout, Cin, K, K) and w2_pt.shape == (Cout, Cout, K, K)
    p = K // 2
    Wp = W + 2 * p

    cap = _vmem_capacity_bytes()
    budget = min(int(cap * 0.45), 48 << 20)
    if row_tile is None:
        TH = _pick_row_tile(N, H, Wp, Cin, Cout, K, budget)
    else:
        TH = int(row_tile)
    if H % TH != 0:
        raise ValueError("row_tile must divide H")
    if (TH * Wp) % 8 != 0 and TH != H:
        raise ValueError("row_tile*(W+2) must be a multiple of 8 unless it spans H")
    n_rows = H // TH
    M = TH * Wp
    M2 = (TH + 2) * Wp
    L1 = (TH + 4) * Wp

    # Single wrapper pass: W-only zero pad fused with the bf16 shipping cast.
    xw = jnp.pad(x_nhwc.astype(jnp.bfloat16), ((0, 0), (0, 0), (p, p), (0, 0)))
    x3d = xw.reshape(N, H * Wp, Cin)                   # flattened-rows view (free)
    # Weights: (Cout,Cin,ky,kx) -> (ky, kx*Cin+cin, cout) so the kx taps stack
    # along the matmul contraction, matching the fused operand layout.
    w1 = jnp.transpose(w1_pt, (2, 3, 1, 0)).reshape(K, K * Cin, Cout).astype(jnp.bfloat16)
    w2 = jnp.transpose(w2_pt, (2, 3, 1, 0)).reshape(K, K * Cout, Cout).astype(jnp.bfloat16)
    b1r = b1.reshape(1, Cout).astype(jnp.float32)
    b2r = b2.reshape(1, Cout).astype(jnp.float32)

    kernel = partial(_resblock_kernel, TH=TH, H=H, W=W, K=K)

    fp = _tile_footprint_bytes(TH, Wp, Cin, Cout, K)
    vmem_limit = int(min(cap * 0.9, max(32 << 20, 2 * fp)))

    flops = 2 * 2 * K * K * (Cin + Cout) * Cout * N * H * W
    bytes_accessed = (x3d.size * 2                       # bf16 main tiles
                      + 4 * N * n_rows * Wp * Cin * 2    # halo rows
                      + (w1.size + w2.size) * 2
                      + (b1r.size + b2r.size) * 4
                      + N * H * Wp * Cout * 4)           # f32 output write

    out_flat = pl.pallas_call(
        kernel,
        grid=(N, n_rows),
        in_specs=[
            pl.BlockSpec((1, M, Cin), lambda n, i: (n, i, 0)),
            pl.BlockSpec((1, 1, Wp, Cin),
                         lambda n, i: (n, jnp.maximum(i * TH - 2, 0), 0, 0)),
            pl.BlockSpec((1, 1, Wp, Cin),
                         lambda n, i: (n, jnp.maximum(i * TH - 1, 0), 0, 0)),
            pl.BlockSpec((1, 1, Wp, Cin),
                         lambda n, i: (n, jnp.minimum(i * TH + TH, H - 1), 0, 0)),
            pl.BlockSpec((1, 1, Wp, Cin),
                         lambda n, i: (n, jnp.minimum(i * TH + TH + 1, H - 1), 0, 0)),
            pl.BlockSpec((K, K * Cin, Cout), lambda n, i: (0, 0, 0)),
            pl.BlockSpec((1, Cout), lambda n, i: (0, 0)),
            pl.BlockSpec((K, K * Cout, Cout), lambda n, i: (0, 0, 0)),
            pl.BlockSpec((1, Cout), lambda n, i: (0, 0)),
        ],
        out_specs=pl.BlockSpec((1, M, Cout), lambda n, i: (n, i, 0)),
        out_shape=jax.ShapeDtypeStruct((N, H * Wp, Cout), jnp.float32),
        scratch_shapes=[
            pltpu.VMEM((L1, 3 * Cin), jnp.bfloat16),
            pltpu.VMEM((M2, 3 * Cout), jnp.bfloat16),
        ],
        compiler_params=pltpu.CompilerParams(
            dimension_semantics=("parallel", "parallel"),
            vmem_limit_bytes=vmem_limit),
        cost_estimate=pl.CostEstimate(flops=flops, transcendentals=0,
                                      bytes_accessed=bytes_accessed),
    )(x3d, xw, xw, xw, xw, w1, b1r, w2, b2r)

    # Drop the two padded columns (fuses with the NCHW transpose downstream).
    return out_flat.reshape(N, H, Wp, Cout)[:, :, p:p + W, :]


def resblock_pallas(x_nchw, w1_pt, b1, w2_pt, b2, kernel_size=3, row_tile=None):
    """PyTorch-layout entry point (NCHW in / NCHW out).

    Perf note: callers that already hold NHWC activations should use
    resblock_pallas_nhwc directly and skip these two transposes (each is a
    full HBM round trip of the activation).
    """
    x_nhwc = jnp.transpose(x_nchw, (0, 2, 3, 1))
    out_nhwc = resblock_pallas_nhwc(x_nhwc, w1_pt, b1, w2_pt, b2,
                                    kernel_size=kernel_size, row_tile=row_tile)
    return jnp.transpose(out_nhwc, (0, 3, 1, 2))


def resblock_reference(x_nchw, w1_pt, b1, w2_pt, b2):
    """Pure-JAX fp32 reference matching PyTorch semantics."""
    dn = ('NCHW', 'OIHW', 'NCHW')
    y = jax.lax.conv_general_dilated(x_nchw, w1_pt, (1, 1), 'SAME',
                                     dimension_numbers=dn)
    y = jnp.maximum(y + b1[None, :, None, None], 0.0)
    y = jax.lax.conv_general_dilated(y, w2_pt, (1, 1), 'SAME',
                                     dimension_numbers=dn)
    y = y + b2[None, :, None, None]
    return y + x_nchw


if __name__ == "__main__":
    key = jax.random.PRNGKey(0)
    k_x, k_w1, k_b1, k_w2, k_b2 = jax.random.split(key, 5)

    N, C, H, W, K = 2, 4, 16, 16, 3   # in_channels == out_channels (residual add)

    x = jax.random.normal(k_x, (N, C, H, W), dtype=jnp.float32)
    w1 = jax.random.normal(k_w1, (C, C, K, K), dtype=jnp.float32) * 0.1
    b1 = jax.random.normal(k_b1, (C,), dtype=jnp.float32) * 0.1
    w2 = jax.random.normal(k_w2, (C, C, K, K), dtype=jnp.float32) * 0.1
    b2 = jax.random.normal(k_b2, (C,), dtype=jnp.float32) * 0.1

    ref = resblock_reference(x, w1, b1, w2, b2)

    # row_tile=8 exercises the interior tile-boundary halo path (the fixed
    # case); None exercises the auto-sized tile.  bf16 MXU operands + bf16
    # residual -> loosened tolerance vs the fp32 reference.
    for rt in (8, None):
        out = resblock_pallas(x, w1, b1, w2, b2, kernel_size=K, row_tile=rt)
        out = jax.block_until_ready(out)
        assert out.shape == (N, C, H, W)
        err = float(jnp.max(jnp.abs(out - ref)))
        assert bool(jnp.allclose(out, ref, rtol=2e-2, atol=2e-2)), \
            f"mismatch vs reference (row_tile={rt}, max abs err {err})"

    print("KERNEL_OK")
</pallas_src>

<mosaic_0001>
module attributes {stable_mosaic.version = 11 : i64} {
  func.func @_resblock_kernel(%arg0: i32, %arg1: i32, %arg2: memref<1x144x4xbf16, #tpu.memory_space<vmem>>, %arg3: memref<1x1x18x4xbf16, #tpu.memory_space<vmem>>, %arg4: memref<1x1x18x4xbf16, #tpu.memory_space<vmem>>, %arg5: memref<1x1x18x4xbf16, #tpu.memory_space<vmem>>, %arg6: memref<1x1x18x4xbf16, #tpu.memory_space<vmem>>, %arg7: memref<3x12x4xbf16, #tpu.memory_space<vmem>>, %arg8: memref<1x4xf32, #tpu.memory_space<vmem>>, %arg9: memref<3x12x4xbf16, #tpu.memory_space<vmem>>, %arg10: memref<1x4xf32, #tpu.memory_space<vmem>>, %arg11: memref<1x144x4xf32, #tpu.memory_space<vmem>>, %arg12: memref<216x12xbf16, #tpu.memory_space<vmem>>, %arg13: memref<180x12xbf16, #tpu.memory_space<vmem>>) attributes {dimension_semantics = [#tpu.dimension_semantics<parallel>, #tpu.dimension_semantics<parallel>], iteration_bounds = array<i64: 2, 2>, scalar_prefetch = 0 : i64, scratch_operands = 2 : i64, tpu.core_type = #tpu.core_type<tc>, window_params = [{transform_indices = @transform_0, window_bounds = array<i64: 1, 144, 4>}, {transform_indices = @transform_1, window_bounds = array<i64: 1, 1, 18, 4>}, {transform_indices = @transform_2, window_bounds = array<i64: 1, 1, 18, 4>}, {transform_indices = @transform_3, window_bounds = array<i64: 1, 1, 18, 4>}, {transform_indices = @transform_4, window_bounds = array<i64: 1, 1, 18, 4>}, {pipeline_mode = #tpu.pipeline_mode<synchronous>, transform_indices = @transform_5, window_bounds = array<i64: 3, 12, 4>}, {pipeline_mode = #tpu.pipeline_mode<synchronous>, transform_indices = @transform_6, window_bounds = array<i64: 1, 4>}, {pipeline_mode = #tpu.pipeline_mode<synchronous>, transform_indices = @transform_7, window_bounds = array<i64: 3, 12, 4>}, {pipeline_mode = #tpu.pipeline_mode<synchronous>, transform_indices = @transform_8, window_bounds = array<i64: 1, 4>}, {transform_indices = @transform_9, window_bounds = array<i64: 1, 144, 4>}]} {
    %cst = arith.constant 0.000000e+00 : bf16
    %0 = vector.broadcast %cst : bf16 to vector<18x4xbf16>
    %c8_i32 = arith.constant 8 : i32
    %1 = arith.muli %arg1, %c8_i32 : i32
    %c2_i32 = arith.constant 2 : i32
    %2 = arith.cmpi sge, %1, %c2_i32 : i32
    %c0 = arith.constant 0 : index
    %c0_0 = arith.constant 0 : index
    %c0_1 = arith.constant 0 : index
    %c0_2 = arith.constant 0 : index
    %3 = vector.load %arg3[%c0, %c0_0, %c0_1, %c0_2] : memref<1x1x18x4xbf16, #tpu.memory_space<vmem>>, vector<1x1x18x4xbf16>
    %4 = vector.shape_cast %3 : vector<1x1x18x4xbf16> to vector<18x4xbf16>
    %5 = arith.select %2, %4, %0 : vector<18x4xbf16>
    %c8_i32_3 = arith.constant 8 : i32
    %6 = arith.muli %arg1, %c8_i32_3 : i32
    %c1_i32 = arith.constant 1 : i32
    %7 = arith.cmpi sge, %6, %c1_i32 : i32
    %c0_4 = arith.constant 0 : index
    %c0_5 = arith.constant 0 : index
    %c0_6 = arith.constant 0 : index
    %c0_7 = arith.constant 0 : index
    %8 = vector.load %arg4[%c0_4, %c0_5, %c0_6, %c0_7] : memref<1x1x18x4xbf16, #tpu.memory_space<vmem>>, vector<1x1x18x4xbf16>
    %9 = vector.shape_cast %8 : vector<1x1x18x4xbf16> to vector<18x4xbf16>
    %10 = arith.select %7, %9, %0 : vector<18x4xbf16>
    %c1_i32_8 = arith.constant 1 : i32
    %11 = arith.addi %arg1, %c1_i32_8 : i32
    %c8_i32_9 = arith.constant 8 : i32
    %12 = arith.muli %11, %c8_i32_9 : i32
    %c15_i32 = arith.constant 15 : i32
    %13 = arith.cmpi sle, %12, %c15_i32 : i32
    %c0_10 = arith.constant 0 : index
    %c0_11 = arith.constant 0 : index
    %c0_12 = arith.constant 0 : index
    %c0_13 = arith.constant 0 : index
    %14 = vector.load %arg5[%c0_10, %c0_11, %c0_12, %c0_13] : memref<1x1x18x4xbf16, #tpu.memory_space<vmem>>, vector<1x1x18x4xbf16>
    %15 = vector.shape_cast %14 : vector<1x1x18x4xbf16> to vector<18x4xbf16>
    %16 = arith.select %13, %15, %0 : vector<18x4xbf16>
    %c1_i32_14 = arith.constant 1 : i32
    %17 = arith.addi %arg1, %c1_i32_14 : i32
    %c8_i32_15 = arith.constant 8 : i32
    %18 = arith.muli %17, %c8_i32_15 : i32
    %c1_i32_16 = arith.constant 1 : i32
    %19 = arith.addi %18, %c1_i32_16 : i32
    %c15_i32_17 = arith.constant 15 : i32
    %20 = arith.cmpi sle, %19, %c15_i32_17 : i32
    %c0_18 = arith.constant 0 : index
    %c0_19 = arith.constant 0 : index
    %c0_20 = arith.constant 0 : index
    %c0_21 = arith.constant 0 : index
    %21 = vector.load %arg6[%c0_18, %c0_19, %c0_20, %c0_21] : memref<1x1x18x4xbf16, #tpu.memory_space<vmem>>, vector<1x1x18x4xbf16>
    %22 = vector.shape_cast %21 : vector<1x1x18x4xbf16> to vector<18x4xbf16>
    %23 = arith.select %20, %22, %0 : vector<18x4xbf16>
    %c0_22 = arith.constant 0 : index
    %c0_23 = arith.constant 0 : index
    %c0_24 = arith.constant 0 : index
    %24 = vector.load %arg2[%c0_22, %c0_23, %c0_24] : memref<1x144x4xbf16, #tpu.memory_space<vmem>>, vector<1x144x4xbf16>
    %25 = vector.shape_cast %24 : vector<1x144x4xbf16> to vector<144x4xbf16>
    %c0_25 = arith.constant 0 : index
    %c4 = arith.constant 4 : index
    %26 = vector.load %arg12[%c0_25, %c4] : memref<216x12xbf16, #tpu.memory_space<vmem>>, vector<18x4xbf16>
    tpu.vector_store %arg12[%c0_25, %c4], %5 {strides = array<i32>} : memref<216x12xbf16, #tpu.memory_space<vmem>>, vector<18x4xbf16>,
    %c18 = arith.constant 18 : index
    %c4_26 = arith.constant 4 : index
    %27 = vector.load %arg12[%c18, %c4_26] : memref<216x12xbf16, #tpu.memory_space<vmem>>, vector<18x4xbf16>
    tpu.vector_store %arg12[%c18, %c4_26], %10 {strides = array<i32>} : memref<216x12xbf16, #tpu.memory_space<vmem>>, vector<18x4xbf16>,
    %c36 = arith.constant 36 : index
    %c4_27 = arith.constant 4 : index
    %28 = vector.load %arg12[%c36, %c4_27] : memref<216x12xbf16, #tpu.memory_space<vmem>>, vector<144x4xbf16>
    tpu.vector_store %arg12[%c36, %c4_27], %25 {strides = array<i32>} : memref<216x12xbf16, #tpu.memory_space<vmem>>, vector<144x4xbf16>,
    %c180 = arith.constant 180 : index
    %c4_28 = arith.constant 4 : index
    %29 = vector.load %arg12[%c180, %c4_28] : memref<216x12xbf16, #tpu.memory_space<vmem>>, vector<18x4xbf16>
    tpu.vector_store %arg12[%c180, %c4_28], %16 {strides = array<i32>} : memref<216x12xbf16, #tpu.memory_space<vmem>>, vector<18x4xbf16>,
    %c198 = arith.constant 198 : index
    %c4_29 = arith.constant 4 : index
    %30 = vector.load %arg12[%c198, %c4_29] : memref<216x12xbf16, #tpu.memory_space<vmem>>, vector<18x4xbf16>
    tpu.vector_store %arg12[%c198, %c4_29], %23 {strides = array<i32>} : memref<216x12xbf16, #tpu.memory_space<vmem>>, vector<18x4xbf16>,
    %cst_30 = arith.constant 0.000000e+00 : bf16
    %31 = vector.broadcast %cst_30 : bf16 to vector<1x4xbf16>
    %c0_31 = arith.constant 0 : index
    %c0_32 = arith.constant 0 : index
    %32 = vector.load %arg12[%c0_31, %c0_32] : memref<216x12xbf16, #tpu.memory_space<vmem>>, vector<1x4xbf16>
    tpu.vector_store %arg12[%c0_31, %c0_32], %31 {strides = array<i32>} : memref<216x12xbf16, #tpu.memory_space<vmem>>, vector<1x4xbf16>,
    %c0_33 = arith.constant 0 : index
    %c4_34 = arith.constant 4 : index
    %33 = vector.load %arg12[%c0_33, %c4_34] : memref<216x12xbf16, #tpu.memory_space<vmem>>, vector<215x4xbf16>
    %c1 = arith.constant 1 : index
    %c0_35 = arith.constant 0 : index
    %34 = vector.load %arg12[%c1, %c0_35] : memref<216x12xbf16, #tpu.memory_space<vmem>>, vector<215x4xbf16>
    tpu.vector_store %arg12[%c1, %c0_35], %33 {strides = array<i32>} : memref<216x12xbf16, #tpu.memory_space<vmem>>, vector<215x4xbf16>,
    %c1_36 = arith.constant 1 : index
    %c4_37 = arith.constant 4 : index
    %35 = vector.load %arg12[%c1_36, %c4_37] : memref<216x12xbf16, #tpu.memory_space<vmem>>, vector<215x4xbf16>
    %c0_38 = arith.constant 0 : index
    %c8 = arith.constant 8 : index
    %36 = vector.load %arg12[%c0_38, %c8] : memref<216x12xbf16, #tpu.memory_space<vmem>>, vector<215x4xbf16>
    tpu.vector_store %arg12[%c0_38, %c8], %35 {strides = array<i32>} : memref<216x12xbf16, #tpu.memory_space<vmem>>, vector<215x4xbf16>,
    %cst_39 = arith.constant 0.000000e+00 : bf16
    %37 = vector.broadcast %cst_39 : bf16 to vector<1x4xbf16>
    %c215 = arith.constant 215 : index
    %c8_40 = arith.constant 8 : index
    %38 = vector.load %arg12[%c215, %c8_40] : memref<216x12xbf16, #tpu.memory_space<vmem>>, vector<1x4xbf16>
    tpu.vector_store %arg12[%c215, %c8_40], %37 {strides = array<i32>} : memref<216x12xbf16, #tpu.memory_space<vmem>>, vector<1x4xbf16>,
    %cst_41 = arith.constant 0.000000e+00 : f32
    %39 = vector.broadcast %cst_41 : f32 to vector<180x4xf32>
    %c0_42 = arith.constant 0 : index
    %c0_43 = arith.constant 0 : index
    %40 = vector.load %arg12[%c0_42, %c0_43] : memref<216x12xbf16, #tpu.memory_space<vmem>>, vector<180x12xbf16>
    %c0_44 = arith.constant 0 : index
    %c0_45 = arith.constant 0 : index
    %c0_46 = arith.constant 0 : index
    %41 = vector.load %arg7[%c0_44, %c0_45, %c0_46] : memref<3x12x4xbf16, #tpu.memory_space<vmem>>, vector<1x12x4xbf16>
    %42 = vector.shape_cast %41 : vector<1x12x4xbf16> to vector<12x4xbf16>
    %cst_47 = arith.constant dense<0.000000e+00> : vector<180x4xf32>
    %43 = tpu.matmul %40, %42, %cst_47 {dimension_numbers = #tpu.dot_dimension_numbers<[1], [0], [0], [1], [0, 0, 1, 1], [], []>} : vector<180x12xbf16>, vector<12x4xbf16>, vector<180x4xf32> -> vector<180x4xf32>
    %44 = arith.addf %39, %43 : vector<180x4xf32>
    %c18_48 = arith.constant 18 : index
    %c0_49 = arith.constant 0 : index
    %45 = vector.load %arg12[%c18_48, %c0_49] : memref<216x12xbf16, #tpu.memory_space<vmem>>, vector<180x12xbf16>
    %c1_50 = arith.constant 1 : index
    %c0_51 = arith.constant 0 : index
    %c0_52 = arith.constant 0 : index
    %46 = vector.load %arg7[%c1_50, %c0_51, %c0_52] : memref<3x12x4xbf16, #tpu.memory_space<vmem>>, vector<1x12x4xbf16>
    %47 = vector.shape_cast %46 : vector<1x12x4xbf16> to vector<12x4xbf16>
    %cst_53 = arith.constant dense<0.000000e+00> : vector<180x4xf32>
    %48 = tpu.matmul %45, %47, %cst_53 {dimension_numbers = #tpu.dot_dimension_numbers<[1], [0], [0], [1], [0, 0, 1, 1], [], []>} : vector<180x12xbf16>, vector<12x4xbf16>, vector<180x4xf32> -> vector<180x4xf32>
    %49 = arith.addf %44, %48 : vector<180x4xf32>
    %c36_54 = arith.constant 36 : index
    %c0_55 = arith.constant 0 : index
    %50 = vector.load %arg12[%c36_54, %c0_55] : memref<216x12xbf16, #tpu.memory_space<vmem>>, vector<180x12xbf16>
    %c2 = arith.constant 2 : index
    %c0_56 = arith.constant 0 : index
    %c0_57 = arith.constant 0 : index
    %51 = vector.load %arg7[%c2, %c0_56, %c0_57] : memref<3x12x4xbf16, #tpu.memory_space<vmem>>, vector<1x12x4xbf16>
    %52 = vector.shape_cast %51 : vector<1x12x4xbf16> to vector<12x4xbf16>
    %cst_58 = arith.constant dense<0.000000e+00> : vector<180x4xf32>
    %53 = tpu.matmul %50, %52, %cst_58 {dimension_numbers = #tpu.dot_dimension_numbers<[1], [0], [0], [1], [0, 0, 1, 1], [], []>} : vector<180x12xbf16>, vector<12x4xbf16>, vector<180x4xf32> -> vector<180x4xf32>
    %54 = arith.addf %49, %53 : vector<180x4xf32>
    %c0_59 = arith.constant 0 : index
    %c0_60 = arith.constant 0 : index
    %55 = vector.load %arg8[%c0_59, %c0_60] : memref<1x4xf32, #tpu.memory_space<vmem>>, vector<1x4xf32>
    %56 = vector.broadcast %55 : vector<1x4xf32> to vector<180x4xf32>
    %57 = arith.addf %54, %56 : vector<180x4xf32>
    %cst_61 = arith.constant 0.000000e+00 : f32
    %58 = vector.broadcast %cst_61 : f32 to vector<180x4xf32>
    %59 = arith.maximumf %57, %58 : vector<180x4xf32>
    %60 = tpu.iota {dimensions = array<i32: 0>} : vector<180x1xi32>
    %c18_i32 = arith.constant 18 : i32
    %c0_i32 = arith.constant 0 : i32
    %61 = arith.cmpi eq, %c18_i32, %c0_i32 : i32
    %c1_i32_62 = arith.constant 1 : i32
    %62 = arith.select %61, %c1_i32_62, %c18_i32 : i32
    %63 = vector.broadcast %62 : i32 to vector<180x1xi32>
    %64 = arith.remsi %60, %63 : vector<180x1xi32>
    %c0_i32_63 = arith.constant 0 : i32
    %65 = vector.broadcast %c0_i32_63 : i32 to vector<180x1xi32>
    %66 = arith.cmpi ne, %64, %65 : vector<180x1xi32>
    %c0_i32_64 = arith.constant 0 : i32
    %67 = vector.broadcast %c0_i32_64 : i32 to vector<180x1xi32>
    %68 = arith.cmpi slt, %64, %67 : vector<180x1xi32>
    %c0_i32_65 = arith.constant 0 : i32
    %69 = arith.cmpi slt, %62, %c0_i32_65 : i32
    %70 = vector.broadcast %69 : i1 to vector<180x1xi1>
    %71 = vector.broadcast %70 : vector<180x1xi1> to vector<180x1xi1>
    %72 = arith.xori %68, %71 : vector<180x1xi1>
    %73 = arith.andi %72, %66 : vector<180x1xi1>
    %74 = vector.broadcast %62 : i32 to vector<180x1xi32>
    %75 = arith.addi %64, %74 : vector<180x1xi32>
    %76 = arith.select %73, %75, %64 : vector<180x1xi1>, vector<180x1xi32>
    %c1_i32_66 = arith.constant 1 : i32
    %77 = vector.broadcast %c1_i32_66 : i32 to vector<180x1xi32>
    %78 = arith.cmpi sge, %76, %77 : vector<180x1xi32>
    %c16_i32 = arith.constant 16 : i32
    %79 = vector.broadcast %c16_i32 : i32 to vector<180x1xi32>
    %80 = arith.cmpi sle, %76, %79 : vector<180x1xi32>
    %81 = arith.andi %78, %80 : vector<180x1xi1>
    %c18_i32_67 = arith.constant 18 : i32
    %82 = vector.broadcast %c18_i32_67 : i32 to vector<180x1xi32>
    %83 = arith.cmpi sge, %60, %82 : vector<180x1xi32>
    %c8_i32_68 = arith.constant 8 : i32
    %84 = arith.muli %arg1, %c8_i32_68 : i32
    %c1_i32_69 = arith.constant 1 : i32
    %85 = arith.cmpi sge, %84, %c1_i32_69 : i32
    %86 = vector.broadcast %85 : i1 to vector<180x1xi1>
    %87 = arith.ori %83, %86 : vector<180x1xi1>
    %88 = arith.andi %81, %87 : vector<180x1xi1>
    %c162_i32 = arith.constant 162 : i32
    %89 = vector.broadcast %c162_i32 : i32 to vector<180x1xi32>
    %90 = arith.cmpi slt, %60, %89 : vector<180x1xi32>
    %c1_i32_70 = arith.constant 1 : i32
    %91 = arith.addi %arg1, %c1_i32_70 : i32
    %c8_i32_71 = arith.constant 8 : i32
    %92 = arith.muli %91, %c8_i32_71 : i32
    %c15_i32_72 = arith.constant 15 : i32
    %93 = arith.cmpi sle, %92, %c15_i32_72 : i32
    %94 = vector.broadcast %93 : i1 to vector<180x1xi1>
    %95 = arith.ori %90, %94 : vector<180x1xi1>
    %96 = arith.andi %88, %95 : vector<180x1xi1>
    %cst_73 = arith.constant 0.000000e+00 : f32
    %97 = vector.shape_cast %96 : vector<180x1xi1> to vector<180x1xi1>
    %98 = vector.broadcast %97 : vector<180x1xi1> to vector<180x4xi1>
    %99 = vector.broadcast %cst_73 : f32 to vector<180x4xf32>
    %100 = arith.select %98, %59, %99 : vector<180x4xi1>, vector<180x4xf32>
    %101 = arith.truncf %100 : vector<180x4xf32> to vector<180x4xbf16>
    %c0_74 = arith.constant 0 : index
    %c4_75 = arith.constant 4 : index
    %102 = vector.load %arg13[%c0_74, %c4_75] : memref<180x12xbf16, #tpu.memory_space<vmem>>, vector<180x4xbf16>
    tpu.vector_store %arg13[%c0_74, %c4_75], %101 {strides = array<i32>} : memref<180x12xbf16, #tpu.memory_space<vmem>>, vector<180x4xbf16>,
    %cst_76 = arith.constant 0.000000e+00 : bf16
    %103 = vector.broadcast %cst_76 : bf16 to vector<1x4xbf16>
    %c0_77 = arith.constant 0 : index
    %c0_78 = arith.constant 0 : index
    %104 = vector.load %arg13[%c0_77, %c0_78] : memref<180x12xbf16, #tpu.memory_space<vmem>>, vector<1x4xbf16>
    tpu.vector_store %arg13[%c0_77, %c0_78], %103 {strides = array<i32>} : memref<180x12xbf16, #tpu.memory_space<vmem>>, vector<1x4xbf16>,
    %105 = vector.extract_strided_slice %101 {offsets = [0, 0], sizes = [179, 4], strides = [1, 1]} : vector<180x4xbf16> to vector<179x4xbf16>
    %c1_79 = arith.constant 1 : index
    %c0_80 = arith.constant 0 : index
    %106 = vector.load %arg13[%c1_79, %c0_80] : memref<180x12xbf16, #tpu.memory_space<vmem>>, vector<179x4xbf16>
    tpu.vector_store %arg13[%c1_79, %c0_80], %105 {strides = array<i32>} : memref<180x12xbf16, #tpu.memory_space<vmem>>, vector<179x4xbf16>,
    %107 = vector.extract_strided_slice %101 {offsets = [1, 0], sizes = [179, 4], strides = [1, 1]} : vector<180x4xbf16> to vector<179x4xbf16>
    %c0_81 = arith.constant 0 : index
    %c8_82 = arith.constant 8 : index
    %108 = vector.load %arg13[%c0_81, %c8_82] : memref<180x12xbf16, #tpu.memory_space<vmem>>, vector<179x4xbf16>
    tpu.vector_store %arg13[%c0_81, %c8_82], %107 {strides = array<i32>} : memref<180x12xbf16, #tpu.memory_space<vmem>>, vector<179x4xbf16>,
    %cst_83 = arith.constant 0.000000e+00 : bf16
    %109 = vector.broadcast %cst_83 : bf16 to vector<1x4xbf16>
    %c179 = arith.constant 179 : index
    %c8_84 = arith.constant 8 : index
    %110 = vector.load %arg13[%c179, %c8_84] : memref<180x12xbf16, #tpu.memory_space<vmem>>, vector<1x4xbf16>
    tpu.vector_store %arg13[%c179, %c8_84], %109 {strides = array<i32>} : memref<180x12xbf16, #tpu.memory_space<vmem>>, vector<1x4xbf16>,
    %cst_85 = arith.constant 0.000000e+00 : f32
    %111 = vector.broadcast %cst_85 : f32 to vector<144x4xf32>
    %c0_86 = arith.constant 0 : index
    %c0_87 = arith.constant 0 : index
    %112 = vector.load %arg13[%c0_86, %c0_87] : memref<180x12xbf16, #tpu.memory_space<vmem>>, vector<144x12xbf16>
    %c0_88 = arith.constant 0 : index
    %c0_89 = arith.constant 0 : index
    %c0_90 = arith.constant 0 : index
    %113 = vector.load %arg9[%c0_88, %c0_89, %c0_90] : memref<3x12x4xbf16, #tpu.memory_space<vmem>>, vector<1x12x4xbf16>
    %114 = vector.shape_cast %113 : vector<1x12x4xbf16> to vector<12x4xbf16>
    %cst_91 = arith.constant dense<0.000000e+00> : vector<144x4xf32>
    %115 = tpu.matmul %112, %114, %cst_91 {dimension_numbers = #tpu.dot_dimension_numbers<[1], [0], [0], [1], [0, 0, 1, 1], [], []>} : vector<144x12xbf16>, vector<12x4xbf16>, vector<144x4xf32> -> vector<144x4xf32>
    %116 = arith.addf %111, %115 : vector<144x4xf32>
    %c18_92 = arith.constant 18 : index
    %c0_93 = arith.constant 0 : index
    %117 = vector.load %arg13[%c18_92, %c0_93] : memref<180x12xbf16, #tpu.memory_space<vmem>>, vector<144x12xbf16>
    %c1_94 = arith.constant 1 : index
    %c0_95 = arith.constant 0 : index
    %c0_96 = arith.constant 0 : index
    %118 = vector.load %arg9[%c1_94, %c0_95, %c0_96] : memref<3x12x4xbf16, #tpu.memory_space<vmem>>, vector<1x12x4xbf16>
    %119 = vector.shape_cast %118 : vector<1x12x4xbf16> to vector<12x4xbf16>
    %cst_97 = arith.constant dense<0.000000e+00> : vector<144x4xf32>
    %120 = tpu.matmul %117, %119, %cst_97 {dimension_numbers = #tpu.dot_dimension_numbers<[1], [0], [0], [1], [0, 0, 1, 1], [], []>} : vector<144x12xbf16>, vector<12x4xbf16>, vector<144x4xf32> -> vector<144x4xf32>
    %121 = arith.addf %116, %120 : vector<144x4xf32>
    %c36_98 = arith.constant 36 : index
    %c0_99 = arith.constant 0 : index
    %122 = vector.load %arg13[%c36_98, %c0_99] : memref<180x12xbf16, #tpu.memory_space<vmem>>, vector<144x12xbf16>
    %c2_100 = arith.constant 2 : index
    %c0_101 = arith.constant 0 : index
    %c0_102 = arith.constant 0 : index
    %123 = vector.load %arg9[%c2_100, %c0_101, %c0_102] : memref<3x12x4xbf16, #tpu.memory_space<vmem>>, vector<1x12x4xbf16>
    %124 = vector.shape_cast %123 : vector<1x12x4xbf16> to vector<12x4xbf16>
    %cst_103 = arith.constant dense<0.000000e+00> : vector<144x4xf32>
    %125 = tpu.matmul %122, %124, %cst_103 {dimension_numbers = #tpu.dot_dimension_numbers<[1], [0], [0], [1], [0, 0, 1, 1], [], []>} : vector<144x12xbf16>, vector<12x4xbf16>, vector<144x4xf32> -> vector<144x4xf32>
    %126 = arith.addf %121, %125 : vector<144x4xf32>
    %c0_104 = arith.constant 0 : index
    %c0_105 = arith.constant 0 : index
    %127 = vector.load %arg10[%c0_104, %c0_105] : memref<1x4xf32, #tpu.memory_space<vmem>>, vector<1x4xf32>
    %128 = vector.broadcast %127 : vector<1x4xf32> to vector<144x4xf32>
    %129 = arith.addf %126, %128 : vector<144x4xf32>
    %130 = arith.extf %25 : vector<144x4xbf16> to vector<144x4xf32>
    %131 = arith.addf %129, %130 : vector<144x4xf32>
    %c0_106 = arith.constant 0 : index
    %c0_107 = arith.constant 0 : index
    %c0_108 = arith.constant 0 : index
    %132 = vector.load %arg11[%c0_106, %c0_107, %c0_108] : memref<1x144x4xf32, #tpu.memory_space<vmem>>, vector<1x144x4xf32>
    %133 = vector.shape_cast %132 : vector<1x144x4xf32> to vector<144x4xf32>
    %134 = vector.shape_cast %131 : vector<144x4xf32> to vector<1x144x4xf32>
    tpu.vector_store %arg11[%c0_106, %c0_107, %c0_108], %134 {strides = array<i32>} : memref<1x144x4xf32, #tpu.memory_space<vmem>>, vector<1x144x4xf32>,
    return
  }
  func.func @transform_0(%arg0: i32, %arg1: i32) -> (i32, i32, i32) {
    %c0_i32 = arith.constant 0 : i32
    %c0_i32_0 = arith.constant 0 : i32
    return %arg0, %arg1, %c0_i32 : i32, i32, i32
  }
  func.func @transform_1(%arg0: i32, %arg1: i32) -> (i32, i32, i32, i32) {
    %c8_i32 = arith.constant 8 : i32
    %0 = arith.muli %arg1, %c8_i32 : i32
    %c2_i32 = arith.constant 2 : i32
    %1 = arith.subi %0, %c2_i32 : i32
    %c0_i32 = arith.constant 0 : i32
    %2 = arith.maxsi %1, %c0_i32 : i32
    %c0_i32_0 = arith.constant 0 : i32
    %c0_i32_1 = arith.constant 0 : i32
    %c0_i32_2 = arith.constant 0 : i32
    return %arg0, %2, %c0_i32_0, %c0_i32_1 : i32, i32, i32, i32
  }
  func.func @transform_2(%arg0: i32, %arg1: i32) -> (i32, i32, i32, i32) {
    %c8_i32 = arith.constant 8 : i32
    %0 = arith.muli %arg1, %c8_i32 : i32
    %c1_i32 = arith.constant 1 : i32
    %1 = arith.subi %0, %c1_i32 : i32
    %c0_i32 = arith.constant 0 : i32
    %2 = arith.maxsi %1, %c0_i32 : i32
    %c0_i32_0 = arith.constant 0 : i32
    %c0_i32_1 = arith.constant 0 : i32
    %c0_i32_2 = arith.constant 0 : i32
    return %arg0, %2, %c0_i32_0, %c0_i32_1 : i32, i32, i32, i32
  }
  func.func @transform_3(%arg0: i32, %arg1: i32) -> (i32, i32, i32, i32) {
    %c8_i32 = arith.constant 8 : i32
    %0 = arith.muli %arg1, %c8_i32 : i32
    %c8_i32_0 = arith.constant 8 : i32
    %1 = arith.addi %0, %c8_i32_0 : i32
    %c15_i32 = arith.constant 15 : i32
    %2 = arith.minsi %1, %c15_i32 : i32
    %c0_i32 = arith.constant 0 : i32
    %c0_i32_1 = arith.constant 0 : i32
    %c0_i32_2 = arith.constant 0 : i32
    return %arg0, %2, %c0_i32, %c0_i32_1 : i32, i32, i32, i32
  }
  func.func @transform_4(%arg0: i32, %arg1: i32) -> (i32, i32, i32, i32) {
    %c8_i32 = arith.constant 8 : i32
    %0 = arith.muli %arg1, %c8_i32 : i32
    %c8_i32_0 = arith.constant 8 : i32
    %1 = arith.addi %0, %c8_i32_0 : i32
    %c1_i32 = arith.constant 1 : i32
    %2 = arith.addi %1, %c1_i32 : i32
    %c15_i32 = arith.constant 15 : i32
    %3 = arith.minsi %2, %c15_i32 : i32
    %c0_i32 = arith.constant 0 : i32
    %c0_i32_1 = arith.constant 0 : i32
    %c0_i32_2 = arith.constant 0 : i32
    return %arg0, %3, %c0_i32, %c0_i32_1 : i32, i32, i32, i32
  }
  func.func @transform_5(%arg0: i32, %arg1: i32) -> (i32, i32, i32) {
    %c0_i32 = arith.constant 0 : i32
    %c0_i32_0 = arith.constant 0 : i32
    %c0_i32_1 = arith.constant 0 : i32
    %c0_i32_2 = arith.constant 0 : i32
    return %c0_i32, %c0_i32_0, %c0_i32_1 : i32, i32, i32
  }
  func.func @transform_6(%arg0: i32, %arg1: i32) -> (i32, i32) {
    %c0_i32 = arith.constant 0 : i32
    %c0_i32_0 = arith.constant 0 : i32
    %c0_i32_1 = arith.constant 0 : i32
    return %c0_i32, %c0_i32_0 : i32, i32
  }
  func.func @transform_7(%arg0: i32, %arg1: i32) -> (i32, i32, i32) {
    %c0_i32 = arith.constant 0 : i32
    %c0_i32_0 = arith.constant 0 : i32
    %c0_i32_1 = arith.constant 0 : i32
    %c0_i32_2 = arith.constant 0 : i32
    return %c0_i32, %c0_i32_0, %c0_i32_1 : i32, i32, i32
  }
  func.func @transform_8(%arg0: i32, %arg1: i32) -> (i32, i32) {
    %c0_i32 = arith.constant 0 : i32
    %c0_i32_0 = arith.constant 0 : i32
    %c0_i32_1 = arith.constant 0 : i32
    return %c0_i32, %c0_i32_0 : i32, i32
  }
  func.func @transform_9(%arg0: i32, %arg1: i32) -> (i32, i32, i32) {
    %c0_i32 = arith.constant 0 : i32
    %c0_i32_0 = arith.constant 0 : i32
    return %arg0, %arg1, %c0_i32 : i32, i32, i32
  }
}

</mosaic_0001>

<llo_original>
// kernel: tpu_custom_call.1
$region0: #{tpu_custom_call.1}
  #allocation0 [shape = 'u32[]', space=smem, size = 0x4, offset = 0x4, fixed_abs, tag = 'smem constant byte address 0x4 - core index']
  #allocation1 [shape = 'u32[72,128]{1,0:T(1,128)}', space=vmem, size = 0x9000, scoped, tag = 'internal scratch']
  #allocation2 [shape = 'bf16[216,12]{1,0:T(8,128)(2,1)}', space=vmem, size = 0xd800, scoped, tag = 'scratch operand']
  #allocation3 [shape = 'bf16[180,12]{1,0:T(8,128)(2,1)}', space=vmem, size = 0xb800, scoped, tag = 'scratch operand']
  %s0 = inlined_call_operand.vmem [shape: bf16[2,288,4], index: 0, kind: input, shape index: {}]
  %s1 = inlined_call_operand.vmem [shape: bf16[2,16,18,4], index: 1, kind: input, shape index: {}]
  %s2 = inlined_call_operand.vmem [shape: bf16[2,16,18,4], index: 2, kind: input, shape index: {}]
  %s3 = inlined_call_operand.vmem [shape: bf16[2,16,18,4], index: 3, kind: input, shape index: {}]
  %s4 = inlined_call_operand.vmem [shape: bf16[2,16,18,4], index: 4, kind: input, shape index: {}]
  %s5 = inlined_call_operand.vmem [shape: bf16[3,12,4], index: 5, kind: input, shape index: {}]
  %s6 = inlined_call_operand.vmem [shape: f32[1,4], index: 6, kind: input, shape index: {}]
  %s7 = inlined_call_operand.vmem [shape: bf16[3,12,4], index: 7, kind: input, shape index: {}]
  %s8 = inlined_call_operand.vmem [shape: f32[1,4], index: 8, kind: input, shape index: {}]
  %s9 = inlined_call_operand.vmem [shape: f32[2,288,4], index: 9, kind: output, shape index: {}]
  %s10 = sld [smem:[#allocation0]]
  $region69: #{tpu_custom_call.1} parent=0
    _
  %s12 = ssub.s32 1, %s10
  %s13 = scalar_select 0, %s12, %s10
  loop: start=0, step=1, limit=6
  $region2: #{tpu_custom_call.1} parent=0 // loop_pre_header
    _
  $region3: #{tpu_custom_call.1} parent=0 // loop_header
    %s15 = sphi 0, %s19
    %p16 = scmp.ge.s32.totalorder %s15, 6
    %s22 = sphi 0, %s34
    %s23 = sphi 0, %s30
    %s24 = sphi 0, %s22
    %s25 = sphi 0, %s23
    %s26 = sphi 0, %s24
    %s27 = sphi 0, %s25
    %s39 = sphi 0, %s41
    %s42 = sphi 0, %s39
    %s43 = sphi 0, %s42
    %s59 = sphi 0, %s43
    %s75 = sphi 0, %s77
    %s78 = sphi 0, %s75
    %s79 = sphi 0, %s78
    %s95 = sphi 0, %s79
    %s111 = sphi 0, %s113
    %s114 = sphi 0, %s111
    %s115 = sphi 0, %s114
    %s131 = sphi 0, %s115
    %s147 = sphi 0, %s149
    %s150 = sphi 0, %s147
    %s151 = sphi 0, %s150
    %s167 = sphi 0, %s151
    %s183 = sphi 0, %s185
    %s186 = sphi 0, %s183
    %s187 = sphi 0, %s186
    %s203 = sphi 0, %s187
    %s207 = sphi 0, %s207
    %s209 = sphi 0, %s207
    %s210 = sphi 0, %s209
    %s224 = sphi 0, %s210
    %s228 = sphi 0, %s228
    %s230 = sphi 0, %s228
    %s231 = sphi 0, %s230
    %s245 = sphi 0, %s231
    %s249 = sphi 0, %s249
    %s251 = sphi 0, %s249
    %s252 = sphi 0, %s251
    %s266 = sphi 0, %s252
    %s270 = sphi 0, %s270
    %s272 = sphi 0, %s270
    %s273 = sphi 0, %s272
    %s287 = sphi 0, %s273
    %s295 = sphi 0, %s297
    %s298 = sphi 0, %s295
    %s299 = sphi 0, %s298
    %s315 = sphi 0, %s299
  $region4: #{tpu_custom_call.1} parent=0 // loop_header_branch
    %18 = sbr.rel (%p16) target = $region8
  $region5: #{tpu_custom_call.1} parent=0 // loop_body
    %s20 = ssub.s32 %s15, 1
    %s21 = ssub.s32 %s15, 2
    %s28 = sadd.s32 1, %s23
    %p29 = scmp.ge.s32.totalorder %s28, 2
    %s30 = scalar_select %p29, 0, %s28
    %s31 = sadd.s32 1, %s22
    %s32 = scalar_select %p29, %s31, %s22
    %p33 = scmp.ge.s32.totalorder %s32, 2
    %s34 = scalar_select %p33, 0, %s32
    %s35 = ssub.s32 %s22, %s34
    %s36 = ssub.s32 %s23, %s30
    %s37 = sor.u32 %s35, %s36
    %p38 = scmp.eq.s32.totalorder %s37, 0
    %s40 = sadd.s32 %s39, 1
    %s41 = scalar_select %p38, %s39, %s40
    %p44 = pneg %p38
    %p45 = scmp.eq.s32.totalorder %s15, 3
    %p46 = por %p44, %p45
    %p47 = scmp.ne.s32.totalorder %s39, %s42
    %p48 = scmp.eq.s32.totalorder %s15, 0
    %p49 = por %p47, %p48
    %p50 = scmp.ne.s32.totalorder %s39, %s42
    %p51 = scmp.eq.s32.totalorder %s20, 3
    %p52 = por %p50, %p51
    %p53 = scmp.ne.s32.totalorder %s42, %s43
    %p54 = scmp.eq.s32.totalorder %s20, 0
    %p55 = por %p53, %p54
    %p56 = scmp.ne.s32.totalorder %s42, %s43
    %p57 = scmp.eq.s32.totalorder %s21, 3
    %p58 = por %p56, %p57
    %p60 = scmp.ne.s32.totalorder %s43, %s59
    %p61 = scmp.eq.s32.totalorder %s21, 0
    %p62 = por %p60, %p61
    %s63 = smul.u32 %s23, 8
    %s64 = ssub.s32 %s63, 2
    %p65 = scmp.gt.s32.totalorder %s64, 0
    %s66 = scalar_select %p65, %s64, 0
    %s67 = smul.u32 %s30, 8
    %s68 = ssub.s32 %s67, 2
    %p69 = scmp.gt.s32.totalorder %s68, 0
    %s70 = scalar_select %p69, %s68, 0
    %s71 = ssub.s32 %s22, %s34
    %s72 = ssub.s32 %s66, %s70
    %s73 = sor.u32 %s71, %s72
    %p74 = scmp.eq.s32.totalorder %s73, 0
    %s76 = sadd.s32 %s75, 1
    %s77 = scalar_select %p74, %s75, %s76
    %p80 = pneg %p74
    %p81 = scmp.eq.s32.totalorder %s15, 3
    %p82 = por %p80, %p81
    %p83 = scmp.ne.s32.totalorder %s75, %s78
    %p84 = scmp.eq.s32.totalorder %s15, 0
    %p85 = por %p83, %p84
    %p86 = scmp.ne.s32.totalorder %s75, %s78
    %p87 = scmp.eq.s32.totalorder %s20, 3
    %p88 = por %p86, %p87
    %p89 = scmp.ne.s32.totalorder %s78, %s79
    %p90 = scmp.eq.s32.totalorder %s20, 0
    %p91 = por %p89, %p90
    %p92 = scmp.ne.s32.totalorder %s78, %s79
    %p93 = scmp.eq.s32.totalorder %s21, 3
    %p94 = por %p92, %p93
    %p96 = scmp.ne.s32.totalorder %s79, %s95
    %p97 = scmp.eq.s32.totalorder %s21, 0
    %p98 = por %p96, %p97
    %s99 = smul.u32 %s23, 8
    %s100 = ssub.s32 %s99, 1
    %p101 = scmp.gt.s32.totalorder %s100, 0
    %s102 = scalar_select %p101, %s100, 0
    %s103 = smul.u32 %s30, 8
    %s104 = ssub.s32 %s103, 1
    %p105 = scmp.gt.s32.totalorder %s104, 0
    %s106 = scalar_select %p105, %s104, 0
    %s107 = ssub.s32 %s22, %s34
    %s108 = ssub.s32 %s102, %s106
    %s109 = sor.u32 %s107, %s108
    %p110 = scmp.eq.s32.totalorder %s109, 0
    %s112 = sadd.s32 %s111, 1
    %s113 = scalar_select %p110, %s111, %s112
    %p116 = pneg %p110
    %p117 = scmp.eq.s32.totalorder %s15, 3
    %p118 = por %p116, %p117
    %p119 = scmp.ne.s32.totalorder %s111, %s114
    %p120 = scmp.eq.s32.totalorder %s15, 0
    %p121 = por %p119, %p120
    %p122 = scmp.ne.s32.totalorder %s111, %s114
    %p123 = scmp.eq.s32.totalorder %s20, 3
    %p124 = por %p122, %p123
    %p125 = scmp.ne.s32.totalorder %s114, %s115
    %p126 = scmp.eq.s32.totalorder %s20, 0
    %p127 = por %p125, %p126
    %p128 = scmp.ne.s32.totalorder %s114, %s115
    %p129 = scmp.eq.s32.totalorder %s21, 3
    %p130 = por %p128, %p129
    %p132 = scmp.ne.s32.totalorder %s115, %s131
    %p133 = scmp.eq.s32.totalorder %s21, 0
    %p134 = por %p132, %p133
    %s135 = smul.u32 %s23, 8
    %s136 = sadd.s32 %s135, 8
    %p137 = scmp.lt.s32.totalorder %s136, 15
    %s138 = scalar_select %p137, %s136, 15
    %s139 = smul.u32 %s30, 8
    %s140 = sadd.s32 %s139, 8
    %p141 = scmp.lt.s32.totalorder %s140, 15
    %s142 = scalar_select %p141, %s140, 15
    %s143 = ssub.s32 %s22, %s34
    %s144 = ssub.s32 %s138, %s142
    %s145 = sor.u32 %s143, %s144
    %p146 = scmp.eq.s32.totalorder %s145, 0
    %s148 = sadd.s32 %s147, 1
    %s149 = scalar_select %p146, %s147, %s148
    %p152 = pneg %p146
    %p153 = scmp.eq.s32.totalorder %s15, 3
    %p154 = por %p152, %p153
    %p155 = scmp.ne.s32.totalorder %s147, %s150
    %p156 = scmp.eq.s32.totalorder %s15, 0
    %p157 = por %p155, %p156
    %p158 = scmp.ne.s32.totalorder %s147, %s150
    %p159 = scmp.eq.s32.totalorder %s20, 3
    %p160 = por %p158, %p159
    %p161 = scmp.ne.s32.totalorder %s150, %s151
    %p162 = scmp.eq.s32.totalorder %s20, 0
    %p163 = por %p161, %p162
    %p164 = scmp.ne.s32.totalorder %s150, %s151
    %p165 = scmp.eq.s32.totalorder %s21, 3
    %p166 = por %p164, %p165
    %p168 = scmp.ne.s32.totalorder %s151, %s167
    %p169 = scmp.eq.s32.totalorder %s21, 0
    %p170 = por %p168, %p169
    %s171 = smul.u32 %s23, 8
    %s172 = sadd.s32 %s171, 9
    %p173 = scmp.lt.s32.totalorder %s172, 15
    %s174 = scalar_select %p173, %s172, 15
    %s175 = smul.u32 %s30, 8
    %s176 = sadd.s32 %s175, 9
    %p177 = scmp.lt.s32.totalorder %s176, 15
    %s178 = scalar_select %p177, %s176, 15
    %s179 = ssub.s32 %s22, %s34
    %s180 = ssub.s32 %s174, %s178
    %s181 = sor.u32 %s179, %s180
    %p182 = scmp.eq.s32.totalorder %s181, 0
    %s184 = sadd.s32 %s183, 1
    %s185 = scalar_select %p182, %s183, %s184
    %p188 = pneg %p182
    %p189 = scmp.eq.s32.totalorder %s15, 3
    %p190 = por %p188, %p189
    %p191 = scmp.ne.s32.totalorder %s183, %s186
    %p192 = scmp.eq.s32.totalorder %s15, 0
    %p193 = por %p191, %p192
    %p194 = scmp.ne.s32.totalorder %s183, %s186
    %p195 = scmp.eq.s32.totalorder %s20, 3
    %p196 = por %p194, %p195
    %p197 = scmp.ne.s32.totalorder %s186, %s187
    %p198 = scmp.eq.s32.totalorder %s20, 0
    %p199 = por %p197, %p198
    %p200 = scmp.ne.s32.totalorder %s186, %s187
    %p201 = scmp.eq.s32.totalorder %s21, 3
    %p202 = por %p200, %p201
    %p204 = scmp.ne.s32.totalorder %s187, %s203
    %p205 = scmp.eq.s32.totalorder %s21, 0
    %p206 = por %p204, %p205
    %s208 = sadd.s32 %s207, 1
    %p211 = scmp.eq.s32.totalorder %s15, 3
    %p212 = scmp.ne.s32.totalorder %s207, %s209
    %p213 = scmp.eq.s32.totalorder %s15, 0
    %p214 = por %p212, %p213
    %p215 = scmp.ne.s32.totalorder %s207, %s209
    %p216 = scmp.eq.s32.totalorder %s20, 3
    %p217 = por %p215, %p216
    %p218 = scmp.ne.s32.totalorder %s209, %s210
    %p219 = scmp.eq.s32.totalorder %s20, 0
    %p220 = por %p218, %p219
    %p221 = scmp.ne.s32.totalorder %s209, %s210
    %p222 = scmp.eq.s32.totalorder %s21, 3
    %p223 = por %p221, %p222
    %p225 = scmp.ne.s32.totalorder %s210, %s224
    %p226 = scmp.eq.s32.totalorder %s21, 0
    %p227 = por %p225, %p226
    %s229 = sadd.s32 %s228, 1
    %p232 = scmp.eq.s32.totalorder %s15, 3
    %p233 = scmp.ne.s32.totalorder %s228, %s230
    %p234 = scmp.eq.s32.totalorder %s15, 0
    %p235 = por %p233, %p234
    %p236 = scmp.ne.s32.totalorder %s228, %s230
    %p237 = scmp.eq.s32.totalorder %s20, 3
    %p238 = por %p236, %p237
    %p239 = scmp.ne.s32.totalorder %s230, %s231
    %p240 = scmp.eq.s32.totalorder %s20, 0
    %p241 = por %p239, %p240
    %p242 = scmp.ne.s32.totalorder %s230, %s231
    %p243 = scmp.eq.s32.totalorder %s21, 3
    %p244 = por %p242, %p243
    %p246 = scmp.ne.s32.totalorder %s231, %s245
    %p247 = scmp.eq.s32.totalorder %s21, 0
    %p248 = por %p246, %p247
    %s250 = sadd.s32 %s249, 1
    %p253 = scmp.eq.s32.totalorder %s15, 3
    %p254 = scmp.ne.s32.totalorder %s249, %s251
    %p255 = scmp.eq.s32.totalorder %s15, 0
    %p256 = por %p254, %p255
    %p257 = scmp.ne.s32.totalorder %s249, %s251
    %p258 = scmp.eq.s32.totalorder %s20, 3
    %p259 = por %p257, %p258
    %p260 = scmp.ne.s32.totalorder %s251, %s252
    %p261 = scmp.eq.s32.totalorder %s20, 0
    %p262 = por %p260, %p261
    %p263 = scmp.ne.s32.totalorder %s251, %s252
    %p264 = scmp.eq.s32.totalorder %s21, 3
    %p265 = por %p263, %p264
    %p267 = scmp.ne.s32.totalorder %s252, %s266
    %p268 = scmp.eq.s32.totalorder %s21, 0
    %p269 = por %p267, %p268
    %s271 = sadd.s32 %s270, 1
    %p274 = scmp.eq.s32.totalorder %s15, 3
    %p275 = scmp.ne.s32.totalorder %s270, %s272
    %p276 = scmp.eq.s32.totalorder %s15, 0
    %p277 = por %p275, %p276
    %p278 = scmp.ne.s32.totalorder %s270, %s272
    %p279 = scmp.eq.s32.totalorder %s20, 3
    %p280 = por %p278, %p279
    %p281 = scmp.ne.s32.totalorder %s272, %s273
    %p282 = scmp.eq.s32.totalorder %s20, 0
    %p283 = por %p281, %p282
    %p284 = scmp.ne.s32.totalorder %s272, %s273
    %p285 = scmp.eq.s32.totalorder %s21, 3
    %p286 = por %p284, %p285
    %p288 = scmp.ne.s32.totalorder %s273, %s287
    %p289 = scmp.eq.s32.totalorder %s21, 0
    %p290 = por %p288, %p289
    %s291 = ssub.s32 %s22, %s34
    %s292 = ssub.s32 %s23, %s30
    %s293 = sor.u32 %s291, %s292
    %p294 = scmp.eq.s32.totalorder %s293, 0
    %s296 = sadd.s32 %s295, 1
    %s297 = scalar_select %p294, %s295, %s296
    %p300 = pneg %p294
    %p301 = scmp.eq.s32.totalorder %s15, 3
    %p302 = por %p300, %p301
    %p303 = scmp.ne.s32.totalorder %s295, %s298
    %p304 = scmp.eq.s32.totalorder %s15, 0
    %p305 = por %p303, %p304
    %p306 = scmp.ne.s32.totalorder %s295, %s298
    %p307 = scmp.eq.s32.totalorder %s20, 3
    %p308 = por %p306, %p307
    %p309 = scmp.ne.s32.totalorder %s298, %s299
    %p310 = scmp.eq.s32.totalorder %s20, 0
    %p311 = por %p309, %p310
    %p312 = scmp.ne.s32.totalorder %s298, %s299
    %p313 = scmp.eq.s32.totalorder %s21, 3
    %p314 = por %p312, %p313
    %p316 = scmp.ne.s32.totalorder %s299, %s315
    %p317 = scmp.eq.s32.totalorder %s21, 0
    %p318 = por %p316, %p317
    %p319 = scmp.le.s32.totalorder 1, %s15
    %p320 = scmp.lt.s32.totalorder %s15, 5
    %p321 = pnand %p319, %p320
    %p322 = pneg %p321
    // Predicated region
    $region9: #{tpu_custom_call.1} parent=5 // pred_check
      _
    $region10: #{tpu_custom_call.1} parent=5 // pred_check_branch
      %324 = sbr.rel (%p321) target = $region12
    $region11: #{tpu_custom_call.1} parent=5 // pred_region
      %s325 = ssub.s32 %s15, 1
      // Predicated region
      $region13: #{tpu_custom_call.1} parent=11 // pred_check
        %p326 = pneg %p220
      $region14: #{tpu_custom_call.1} parent=11 // pred_check_branch
        %328 = sbr.rel (%p326) target = $region16
      $region15: #{tpu_custom_call.1} parent=11 // pred_region
        _
      $region16: #{tpu_custom_call.1} parent=11 // pred_fallthru
        _
      // Predicated region
      $region17: #{tpu_custom_call.1} parent=11 // pred_check
        %p329 = pneg %p241
      $region18: #{tpu_custom_call.1} parent=11 // pred_check_branch
        %331 = sbr.rel (%p329) target = $region20
      $region19: #{tpu_custom_call.1} parent=11 // pred_region
        _
      $region20: #{tpu_custom_call.1} parent=11 // pred_fallthru
        _
      // Predicated region
      $region21: #{tpu_custom_call.1} parent=11 // pred_check
        %p332 = pneg %p262
      $region22: #{tpu_custom_call.1} parent=11 // pred_check_branch
        %334 = sbr.rel (%p332) target = $region24
      $region23: #{tpu_custom_call.1} parent=11 // pred_region
        _
      $region24: #{tpu_custom_call.1} parent=11 // pred_fallthru
        _
      // Predicated region
      $region25: #{tpu_custom_call.1} parent=11 // pred_check
        %p335 = pneg %p283
      $region26: #{tpu_custom_call.1} parent=11 // pred_check_branch
        %337 = sbr.rel (%p335) target = $region28
      $region27: #{tpu_custom_call.1} parent=11 // pred_region
        _
      $region28: #{tpu_custom_call.1} parent=11 // pred_fallthru
        _
    $region12: #{tpu_custom_call.1} parent=5 // pred_fallthru
      _
    %p338 = scmp.lt.s32.totalorder %s15, 4
    // Predicated region
    $region29: #{tpu_custom_call.1} parent=5 // pred_check
      %p339 = pneg %p338
    $region30: #{tpu_custom_call.1} parent=5 // pred_check_branch
      %341 = sbr.rel (%p339) target = $region32
    $region31: #{tpu_custom_call.1} parent=5 // pred_region
      // Predicated region
      $region33: #{tpu_custom_call.1} parent=31 // pred_check
        %p342 = pneg %p49
      $region34: #{tpu_custom_call.1} parent=31 // pred_check_branch
        %344 = sbr.rel (%p342) target = $region36
      $region35: #{tpu_custom_call.1} parent=31 // pred_region
        %s345 = smul.u32 18, %s23
        %p346 = scmp.lt.s32.totalorder %s22, 1
        %s347 = scalar_select %p346, %s22, 1
        %p348 = scmp.lt.s32.totalorder %s345, 35
        %s349 = scalar_select %p348, %s345, 35
        %s350 = smul.addr %s347, 36
        %s351 = sadd.s32 %s349, %s350
        %s352 = smul.addr %s351, 4
        %s353 = scalar_lea.vmem %s0, %s352
        %s354 = smul.u32 18, %s23
      $region36: #{tpu_custom_call.1} parent=31 // pred_fallthru
        _
      // Predicated region
      $region37: #{tpu_custom_call.1} parent=31 // pred_check
        %p355 = pneg %p85
      $region38: #{tpu_custom_call.1} parent=31 // pred_check_branch
        %357 = sbr.rel (%p355) target = $region40
      $region39: #{tpu_custom_call.1} parent=31 // pred_region
        %s358 = smul.u32 %s23, 8
        %s359 = ssub.s32 %s358, 2
        %p360 = scmp.gt.s32.totalorder %s359, 0
        %s361 = scalar_select %p360, %s359, 0
        %p362 = scmp.lt.s32.totalorder %s22, 1
        %s363 = scalar_select %p362, %s22, 1
        %p364 = scmp.lt.s32.totalorder %s361, 15
        %s365 = scalar_select %p364, %s361, 15
        %s366 = smul.addr %s365, 3
        %s367 = smul.addr %s363, 48
        %s368 = sadd.s32 %s366, %s367
        %s369 = smul.addr %s368, 4
        %s370 = scalar_lea.vmem %s1, %s369
        %s371 = smul.u32 %s23, 8
        %s372 = ssub.s32 %s371, 2
        %p373 = scmp.gt.s32.totalorder %s372, 0
        %s374 = scalar_select %p373, %s372, 0
      $region40: #{tpu_custom_call.1} parent=31 // pred_fallthru
        _
      // Predicated region
      $region41: #{tpu_custom_call.1} parent=31 // pred_check
        %p375 = pneg %p121
      $region42: #{tpu_custom_call.1} parent=31 // pred_check_branch
        %377 = sbr.rel (%p375) target = $region44
      $region43: #{tpu_custom_call.1} parent=31 // pred_region
        %s378 = smul.u32 %s23, 8
        %s379 = ssub.s32 %s378, 1
        %p380 = scmp.gt.s32.totalorder %s379, 0
        %s381 = scalar_select %p380, %s379, 0
        %p382 = scmp.lt.s32.totalorder %s22, 1
        %s383 = scalar_select %p382, %s22, 1
        %p384 = scmp.lt.s32.totalorder %s381, 15
        %s385 = scalar_select %p384, %s381, 15
        %s386 = smul.addr %s385, 3
        %s387 = smul.addr %s383, 48
        %s388 = sadd.s32 %s386, %s387
        %s389 = smul.addr %s388, 4
        %s390 = scalar_lea.vmem %s2, %s389
        %s391 = smul.u32 %s23, 8
        %s392 = ssub.s32 %s391, 1
        %p393 = scmp.gt.s32.totalorder %s392, 0
        %s394 = scalar_select %p393, %s392, 0
      $region44: #{tpu_custom_call.1} parent=31 // pred_fallthru
        _
      // Predicated region
      $region45: #{tpu_custom_call.1} parent=31 // pred_check
        %p395 = pneg %p157
      $region46: #{tpu_custom_call.1} parent=31 // pred_check_branch
        %397 = sbr.rel (%p395) target = $region48
      $region47: #{tpu_custom_call.1} parent=31 // pred_region
        %s398 = smul.u32 %s23, 8
        %s399 = sadd.s32 %s398, 8
        %p400 = scmp.lt.s32.totalorder %s399, 15
        %s401 = scalar_select %p400, %s399, 15
        %p402 = scmp.lt.s32.totalorder %s22, 1
        %s403 = scalar_select %p402, %s22, 1
        %p404 = scmp.lt.s32.totalorder %s401, 15
        %s405 = scalar_select %p404, %s401, 15
        %s406 = smul.addr %s405, 3
        %s407 = smul.addr %s403, 48
        %s408 = sadd.s32 %s406, %s407
        %s409 = smul.addr %s408, 4
        %s410 = scalar_lea.vmem %s3, %s409
        %s411 = smul.u32 %s23, 8
        %s412 = sadd.s32 %s411, 8
        %p413 = scmp.lt.s32.totalorder %s412, 15
        %s414 = scalar_select %p413, %s412, 15
      $region48: #{tpu_custom_call.1} parent=31 // pred_fallthru
        _
      // Predicated region
      $region49: #{tpu_custom_call.1} parent=31 // pred_check
        %p415 = pneg %p193
      $region50: #{tpu_custom_call.1} parent=31 // pred_check_branch
        %417 = sbr.rel (%p415) target = $region52
      $region51: #{tpu_custom_call.1} parent=31 // pred_region
        %s418 = smul.u32 %s23, 8
        %s419 = sadd.s32 %s418, 9
        %p420 = scmp.lt.s32.totalorder %s419, 15
        %s421 = scalar_select %p420, %s419, 15
        %p422 = scmp.lt.s32.totalorder %s22, 1
        %s423 = scalar_select %p422, %s22, 1
        %p424 = scmp.lt.s32.totalorder %s421, 15
        %s425 = scalar_select %p424, %s421, 15
        %s426 = smul.addr %s425, 3
        %s427 = smul.addr %s423, 48
        %s428 = sadd.s32 %s426, %s427
        %s429 = smul.addr %s428, 4
        %s430 = scalar_lea.vmem %s4, %s429
        %s431 = smul.u32 %s23, 8
        %s432 = sadd.s32 %s431, 9
        %p433 = scmp.lt.s32.totalorder %s432, 15
        %s434 = scalar_select %p433, %s432, 15
      $region52: #{tpu_custom_call.1} parent=31 // pred_fallthru
        _
    $region32: #{tpu_custom_call.1} parent=5 // pred_fallthru
      _
    %p435 = scmp.le.s32.totalorder 1, %s15
    %p436 = scmp.lt.s32.totalorder %s15, 5
    %p437 = pnand %p435, %p436
    %p438 = pneg %p437
    // Predicated region
    $region53: #{tpu_custom_call.1} parent=5 // pred_check
      _
    $region54: #{tpu_custom_call.1} parent=5 // pred_check_branch
      %440 = sbr.rel (%p437) target = $region56
    $region55: #{tpu_custom_call.1} parent=5 // pred_region
      %s441 = ssub.s32 %s15, 1
      %s442 = smul.u32 18, %s25
      %p443 = scmp.lt.s32.totalorder %s24, 1
      %s444 = scalar_select %p443, %s24, 1
      %p445 = scmp.lt.s32.totalorder %s442, 35
      %s446 = scalar_select %p445, %s442, 35
      %s447 = smul.addr %s444, 36
      %s448 = sadd.s32 %s446, %s447
      %s449 = smul.addr %s448, 4
      %s450 = scalar_lea.vmem %s0, %s449
      %p451 = pneg %p55
      %p452 = pneg %p52
      %s453 = smul.u32 %s25, 8
      %s454 = ssub.s32 %s453, 2
      %p455 = scmp.gt.s32.totalorder %s454, 0
      %s456 = scalar_select %p455, %s454, 0
      %p457 = scmp.lt.s32.totalorder %s24, 1
      %s458 = scalar_select %p457, %s24, 1
      %p459 = scmp.lt.s32.totalorder %s456, 15
      %s460 = scalar_select %p459, %s456, 15
      %s461 = smul.addr %s460, 3
      %s462 = smul.addr %s458, 48
      %s463 = sadd.s32 %s461, %s462
      %s464 = smul.addr %s463, 4
      %s465 = scalar_lea.vmem %s1, %s464
      %p466 = pneg %p91
      %p467 = pneg %p88
      %s468 = smul.u32 %s25, 8
      %s469 = ssub.s32 %s468, 1
      %p470 = scmp.gt.s32.totalorder %s469, 0
      %s471 = scalar_select %p470, %s469, 0
      %p472 = scmp.lt.s32.totalorder %s24, 1
      %s473 = scalar_select %p472, %s24, 1
      %p474 = scmp.lt.s32.totalorder %s471, 15
      %s475 = scalar_select %p474, %s471, 15
      %s476 = smul.addr %s475, 3
      %s477 = smul.addr %s473, 48
      %s478 = sadd.s32 %s476, %s477
      %s479 = smul.addr %s478, 4
      %s480 = scalar_lea.vmem %s2, %s479
      %p481 = pneg %p127
      %p482 = pneg %p124
      %s483 = smul.u32 %s25, 8
      %s484 = sadd.s32 %s483, 8
      %p485 = scmp.lt.s32.totalorder %s484, 15
      %s486 = scalar_select %p485, %s484, 15
      %p487 = scmp.lt.s32.totalorder %s24, 1
      %s488 = scalar_select %p487, %s24, 1
      %p489 = scmp.lt.s32.totalorder %s486, 15
      %s490 = scalar_select %p489, %s486, 15
      %s491 = smul.addr %s490, 3
      %s492 = smul.addr %s488, 48
      %s493 = sadd.s32 %s491, %s492
      %s494 = smul.addr %s493, 4
      %s495 = scalar_lea.vmem %s3, %s494
      %p496 = pneg %p163
      %p497 = pneg %p160
      %s498 = smul.u32 %s25, 8
      %s499 = sadd.s32 %s498, 9
      %p500 = scmp.lt.s32.totalorder %s499, 15
      %s501 = scalar_select %p500, %s499, 15
      %p502 = scmp.lt.s32.totalorder %s24, 1
      %s503 = scalar_select %p502, %s24, 1
      %p504 = scmp.lt.s32.totalorder %s501, 15
      %s505 = scalar_select %p504, %s501, 15
      %s506 = smul.addr %s505, 3
      %s507 = smul.addr %s503, 48
      %s508 = sadd.s32 %s506, %s507
      %s509 = smul.addr %s508, 4
      %s510 = scalar_lea.vmem %s4, %s509
      %p511 = pneg %p199
      %p512 = pneg %p196
      %p513 = pneg %p220
      %p514 = pneg %p217
      %p515 = pneg %p241
      %p516 = pneg %p238
      %p517 = pneg %p262
      %p518 = pneg %p259
      %p519 = pneg %p283
      %p520 = pneg %p280
      %p521 = pneg %p311
      %p522 = pneg %p308
      %s523 = smul.u32 18, %s25
      %p524 = scmp.lt.s32.totalorder %s24, 1
      %s525 = scalar_select %p524, %s24, 1
      %p526 = scmp.lt.s32.totalorder %s523, 35
      %s527 = scalar_select %p526, %s523, 35
      %s528 = smul.addr %s525, 36
      %s529 = sadd.s32 %s527, %s528
      %s530 = smul.addr %s529, 8
      %s531 = scalar_lea.vmem %s9, %s530
      %s532 = smul.u32 18, %s25
      %p533 = scmp.lt.s32.totalorder %s24, 1
      %s534 = scalar_select %p533, %s24, 1
      %p535 = scmp.lt.s32.totalorder %s532, 35
      %s536 = scalar_select %p535, %s532, 35
      %s537 = smul.addr %s534, 36
      %s538 = sadd.s32 %s536, %s537
      %s539 = smul.addr %s538, 4
      %s540 = scalar_lea.vmem %s0, %s539
      %s541 = smul.u32 18, %s25
      %s542 = smul.u32 %s25, 8
      %s543 = ssub.s32 %s542, 2
      %p544 = scmp.gt.s32.totalorder %s543, 0
      %s545 = scalar_select %p544, %s543, 0
      %p546 = scmp.lt.s32.totalorder %s24, 1
      %s547 = scalar_select %p546, %s24, 1
      %p548 = scmp.lt.s32.totalorder %s545, 15
      %s549 = scalar_select %p548, %s545, 15
      %s550 = smul.addr %s549, 3
      %s551 = smul.addr %s547, 48
      %s552 = sadd.s32 %s550, %s551
      %s553 = smul.addr %s552, 4
      %s554 = scalar_lea.vmem %s1, %s553
      %s555 = smul.u32 %s25, 8
      %s556 = ssub.s32 %s555, 2
      %p557 = scmp.gt.s32.totalorder %s556, 0
      %s558 = scalar_select %p557, %s556, 0
      %s559 = smul.u32 %s25, 8
      %s560 = ssub.s32 %s559, 1
      %p561 = scmp.gt.s32.totalorder %s560, 0
      %s562 = scalar_select %p561, %s560, 0
      %p563 = scmp.lt.s32.totalorder %s24, 1
      %s564 = scalar_select %p563, %s24, 1
      %p565 = scmp.lt.s32.totalorder %s562, 15
      %s566 = scalar_select %p565, %s562, 15
      %s567 = smul.addr %s566, 3
      %s568 = smul.addr %s564, 48
      %s569 = sadd.s32 %s567, %s568
      %s570 = smul.addr %s569, 4
      %s571 = scalar_lea.vmem %s2, %s570
      %s572 = smul.u32 %s25, 8
      %s573 = ssub.s32 %s572, 1
      %p574 = scmp.gt.s32.totalorder %s573, 0
      %s575 = scalar_select %p574, %s573, 0
      %s576 = smul.u32 %s25, 8
      %s577 = sadd.s32 %s576, 8
      %p578 = scmp.lt.s32.totalorder %s577, 15
      %s579 = scalar_select %p578, %s577, 15
      %p580 = scmp.lt.s32.totalorder %s24, 1
      %s581 = scalar_select %p580, %s24, 1
      %p582 = scmp.lt.s32.totalorder %s579, 15
      %s583 = scalar_select %p582, %s579, 15
      %s584 = smul.addr %s583, 3
      %s585 = smul.addr %s581, 48
      %s586 = sadd.s32 %s584, %s585
      %s587 = smul.addr %s586, 4
      %s588 = scalar_lea.vmem %s3, %s587
      %s589 = smul.u32 %s25, 8
      %s590 = sadd.s32 %s589, 8
      %p591 = scmp.lt.s32.totalorder %s590, 15
      %s592 = scalar_select %p591, %s590, 15
      %s593 = smul.u32 %s25, 8
      %s594 = sadd.s32 %s593, 9
      %p595 = scmp.lt.s32.totalorder %s594, 15
      %s596 = scalar_select %p595, %s594, 15
      %p597 = scmp.lt.s32.totalorder %s24, 1
      %s598 = scalar_select %p597, %s24, 1
      %p599 = scmp.lt.s32.totalorder %s596, 15
      %s600 = scalar_select %p599, %s596, 15
      %s601 = smul.addr %s600, 3
      %s602 = smul.addr %s598, 48
      %s603 = sadd.s32 %s601, %s602
      %s604 = smul.addr %s603, 4
      %s605 = scalar_lea.vmem %s4, %s604
      %s606 = smul.u32 %s25, 8
      %s607 = sadd.s32 %s606, 9
      %p608 = scmp.lt.s32.totalorder %s607, 15
      %s609 = scalar_select %p608, %s607, 15
      %s610 = smul.u32 18, %s25
      %p611 = scmp.lt.s32.totalorder %s24, 1
      %s612 = scalar_select %p611, %s24, 1
      %p613 = scmp.lt.s32.totalorder %s610, 35
      %s614 = scalar_select %p613, %s610, 35
      %s615 = smul.addr %s612, 36
      %s616 = sadd.s32 %s614, %s615
      %s617 = smul.addr %s616, 8
      %s618 = scalar_lea.vmem %s9, %s617
      %s619 = smul.u32 18, %s25
      %s621 = smul.u32 %s25, 8
      %p622 = scmp.ge.s32.totalorder %s621, 2
      %v623 = vld [vmem:[%s554] sm:$0xf]
      %v624 = vld [vmem:[%s554 + $0x4] sm:$0xf]
      %v625 = vld [vmem:[%s554 + $0x8] sm:$0x1]
      %s626 = scalar_select %p622, 1, 0
      %v627 = vstv %s626
      %vm628 = vcmp.eq.s32.totalorder %v627, 1
      %v629 = vsel %vm628, %v623, 0
      %v630 = vsel %vm628, %v624, 0
      %v631 = vsel %vm628, %v625, 0
      %p632 = scmp.ge.s32.totalorder %s621, 1
      %v633 = vld [vmem:[%s571] sm:$0xf]
      %v634 = vld [vmem:[%s571 + $0x4] sm:$0xf]
      %v635 = vld [vmem:[%s571 + $0x8] sm:$0x1]
      %s636 = scalar_select %p632, 1, 0
      %v637 = vstv %s636
      %vm638 = vcmp.eq.s32.totalorder %v637, 1
      %v639 = vsel %vm638, %v633, 0
      %v640 = vsel %vm638, %v634, 0
      %v641 = vsel %vm638, %v635, 0
      %s642 = sadd.s32 %s25, 1
      %s643 = smul.u32 %s642, 8
      %p644 = scmp.le.s32.totalorder %s643, 15
      %v645 = vld [vmem:[%s588] sm:$0xf]
      %v646 = vld [vmem:[%s588 + $0x4] sm:$0xf]
      %v647 = vld [vmem:[%s588 + $0x8] sm:$0x1]
      %s648 = scalar_select %p644, 1, 0
      %v649 = vstv %s648
      %vm650 = vcmp.eq.s32.totalorder %v649, 1
      %v651 = vsel %vm650, %v645, 0
      %v652 = vsel %vm650, %v646, 0
      %v653 = vsel %vm650, %v647, 0
      %s654 = sadd.s32 %s643, 1
      %p655 = scmp.le.s32.totalorder %s654, 15
      %v656 = vld [vmem:[%s605] sm:$0xf]
      %v657 = vld [vmem:[%s605 + $0x4] sm:$0xf]
      %v658 = vld [vmem:[%s605 + $0x8] sm:$0x1]
      %s659 = scalar_select %p655, 1, 0
      %v660 = vstv %s659
      %vm661 = vcmp.eq.s32.totalorder %v660, 1
      %v662 = vsel %vm661, %v656, 0
      %v663 = vsel %vm661, %v657, 0
      %v664 = vsel %vm661, %v658, 0
      %v665 = vld [vmem:[%s540] sm:$0xf]
      %v666 = vld [vmem:[%s540 + $0x4] sm:$0xf]
      %v667 = vld [vmem:[%s540 + $0x8] sm:$0xf]
      %v668 = vld [vmem:[%s540 + $0xc] sm:$0xf]
      %v669 = vld [vmem:[%s540 + $0x10] sm:$0xf]
      %v670 = vld [vmem:[%s540 + $0x14] sm:$0xf]
      %v671 = vld [vmem:[%s540 + $0x18] sm:$0xf]
      %v672 = vld [vmem:[%s540 + $0x1c] sm:$0xf]
      %v673 = vld [vmem:[%s540 + $0x20] sm:$0xf]
      %v674 = vld [vmem:[%s540 + $0x24] sm:$0xf]
      %v675 = vld [vmem:[%s540 + $0x28] sm:$0xf]
      %v676 = vld [vmem:[%s540 + $0x2c] sm:$0xf]
      %v677 = vld [vmem:[%s540 + $0x30] sm:$0xf]
      %v678 = vld [vmem:[%s540 + $0x34] sm:$0xf]
      %v679 = vld [vmem:[%s540 + $0x38] sm:$0xf]
      %v680 = vld [vmem:[%s540 + $0x3c] sm:$0xf]
      %v681 = vld [vmem:[%s540 + $0x40] sm:$0xf]
      %v682 = vld [vmem:[%s540 + $0x44] sm:$0xf]
      %686 = vrot.lane.b32.xlu0 %v629, 4
      %v687 = vpop.permute.xlu0 %686
      %688 = vrot.lane.b32.xlu0 %v630, 4
      %v689 = vpop.permute.xlu0 %688
      %690 = vrot.lane.b32.xlu0 %v631, 4
      %v691 = vpop.permute.xlu0 %690
      %vm695 = vcmask 60448
      %696 = vst.msk [vmem:[#allocation2] sm:$0xf] %vm695, %v687
      %697 = vst.msk [vmem:[#allocation2 + $0x4] sm:$0xf] %vm695, %v689
      %vm698 = vcmask 57376
      %699 = vst.msk [vmem:[#allocation2 + $0x8] sm:$0x1] %vm698, %v691
      %vm703 = vcmask 1040384
      %vm704 = vcmask 1044484
      %vm705 = vmor %vm703, %vm704
      %v706 = vrot.slane %v639, 7
      %v707 = vrot.slane %v706, 4
      %v708 = vrot.slane %v640, 7
      %v709 = vsel %vm705, %v707, %v708
      %v710 = vrot.slane %v708, 4
      %v711 = vrot.slane %v641, 7
      %v712 = vsel %vm705, %v710, %v711
      %713 = vrot.lane.b32.xlu0 %v706, 4
      %v714 = vpop.permute.xlu0 %713
      %715 = vrot.lane.b32.xlu0 %v709, 4
      %v716 = vpop.permute.xlu0 %715
      %717 = vrot.lane.b32.xlu0 %v712, 4
      %v718 = vpop.permute.xlu0 %717
      %vm722 = vcmask 60449
      %723 = vst.msk [vmem:[#allocation2 + $0x8] sm:$0xe] %vm722, %v714
      %724 = vst.msk [vmem:[#allocation2 + $0xc] sm:$0xf] %vm695, %v716
      %vm725 = vcmask 58400
      %726 = vst.msk [vmem:[#allocation2 + $0x10] sm:$0x3] %vm725, %v718
      %vm745 = vcmask 1041408
      %vm746 = vcmask 1045508
      %vm747 = vmor %vm745, %vm746
      %v748 = vrot.slane %v665, 6
      %v749 = vrot.slane %v748, 4
      %v750 = vrot.slane %v666, 6
      %v751 = vsel %vm747, %v749, %v750
      %v752 = vrot.slane %v750, 4
      %v753 = vrot.slane %v667, 6
      %v754 = vsel %vm747, %v752, %v753
      %v755 = vrot.slane %v753, 4
      %v756 = vrot.slane %v668, 6
      %v757 = vsel %vm747, %v755, %v756
      %v758 = vrot.slane %v756, 4
      %v759 = vrot.slane %v669, 6
      %v760 = vsel %vm747, %v758, %v759
      %v761 = vrot.slane %v759, 4
      %v762 = vrot.slane %v670, 6
      %v763 = vsel %vm747, %v761, %v762
      %v764 = vrot.slane %v762, 4
      %v765 = vrot.slane %v671, 6
      %v766 = vsel %vm747, %v764, %v765
      %v767 = vrot.slane %v765, 4
      %v768 = vrot.slane %v672, 6
      %v769 = vsel %vm747, %v767, %v768
      %v770 = vrot.slane %v768, 4
      %v771 = vrot.slane %v673, 6
      %v772 = vsel %vm747, %v770, %v771
      %v773 = vrot.slane %v771, 4
      %v774 = vrot.slane %v674, 6
      %v775 = vsel %vm747, %v773, %v774
      %v776 = vrot.slane %v774, 4
      %v777 = vrot.slane %v675, 6
      %v778 = vsel %vm747, %v776, %v777
      %v779 = vrot.slane %v777, 4
      %v780 = vrot.slane %v676, 6
      %v781 = vsel %vm747, %v779, %v780
      %v782 = vrot.slane %v780, 4
      %v783 = vrot.slane %v677, 6
      %v784 = vsel %vm747, %v782, %v783
      %v785 = vrot.slane %v783, 4
      %v786 = vrot.slane %v678, 6
      %v787 = vsel %vm747, %v785, %v786
      %v788 = vrot.slane %v786, 4
      %v789 = vrot.slane %v679, 6
      %v790 = vsel %vm747, %v788, %v789
      %v791 = vrot.slane %v789, 4
      %v792 = vrot.slane %v680, 6
      %v793 = vsel %vm747, %v791, %v792
      %v794 = vrot.slane %v792, 4
      %v795 = vrot.slane %v681, 6
      %v796 = vsel %vm747, %v794, %v795
      %v797 = vrot.slane %v795, 4
      %v798 = vrot.slane %v682, 6
      %v799 = vsel %vm747, %v797, %v798
      %v800 = vrot.slane %v798, 4
      %801 = vrot.lane.b32.xlu0 %v748, 4
      %v802 = vpop.permute.xlu0 %801
      %803 = vrot.lane.b32.xlu0 %v751, 4
      %v804 = vpop.permute.xlu0 %803
      %805 = vrot.lane.b32.xlu0 %v754, 4
      %v806 = vpop.permute.xlu0 %805
      %807 = vrot.lane.b32.xlu0 %v757, 4
      %v808 = vpop.permute.xlu0 %807
      %809 = vrot.lane.b32.xlu0 %v760, 4
      %v810 = vpop.permute.xlu0 %809
      %811 = vrot.lane.b32.xlu0 %v763, 4
      %v812 = vpop.permute.xlu0 %811
      %813 = vrot.lane.b32.xlu0 %v766, 4
      %v814 = vpop.permute.xlu0 %813
      %815 = vrot.lane.b32.xlu0 %v769, 4
      %v816 = vpop.permute.xlu0 %815
      %817 = vrot.lane.b32.xlu0 %v772, 4
      %v818 = vpop.permute.xlu0 %817
      %819 = vrot.lane.b32.xlu0 %v775, 4
      %v820 = vpop.permute.xlu0 %819
      %821 = vrot.lane.b32.xlu0 %v778, 4
      %v822 = vpop.permute.xlu0 %821
      %823 = vrot.lane.b32.xlu0 %v781, 4
      %v824 = vpop.permute.xlu0 %823
      %825 = vrot.lane.b32.xlu0 %v784, 4
      %v826 = vpop.permute.xlu0 %825
      %827 = vrot.lane.b32.xlu0 %v787, 4
      %v828 = vpop.permute.xlu0 %827
      %829 = vrot.lane.b32.xlu0 %v790, 4
      %v830 = vpop.permute.xlu0 %829
      %831 = vrot.lane.b32.xlu0 %v793, 4
      %v832 = vpop.permute.xlu0 %831
      %833 = vrot.lane.b32.xlu0 %v796, 4
      %v834 = vpop.permute.xlu0 %833
      %835 = vrot.lane.b32.xlu0 %v799, 4
      %v836 = vpop.permute.xlu0 %835
      %837 = vrot.lane.b32.xlu0 %v800, 4
      %v838 = vpop.permute.xlu0 %837
      %vm858 = vcmask 60450
      %859 = vst.msk [vmem:[#allocation2 + $0x10] sm:$0xc] %vm858, %v802
      %860 = vst.msk [vmem:[#allocation2 + $0x14] sm:$0xf] %vm695, %v804
      %861 = vst.msk [vmem:[#allocation2 + $0x18] sm:$0xf] %vm695, %v806
      %862 = vst.msk [vmem:[#allocation2 + $0x1c] sm:$0xf] %vm695, %v808
      %863 = vst.msk [vmem:[#allocation2 + $0x20] sm:$0xf] %vm695, %v810
      %864 = vst.msk [vmem:[#allocation2 + $0x24] sm:$0xf] %vm695, %v812
      %865 = vst.msk [vmem:[#allocation2 + $0x28] sm:$0xf] %vm695, %v814
      %866 = vst.msk [vmem:[#allocation2 + $0x2c] sm:$0xf] %vm695, %v816
      %867 = vst.msk [vmem:[#allocation2 + $0x30] sm:$0xf] %vm695, %v818
      %868 = vst.msk [vmem:[#allocation2 + $0x34] sm:$0xf] %vm695, %v820
      %869 = vst.msk [vmem:[#allocation2 + $0x38] sm:$0xf] %vm695, %v822
      %870 = vst.msk [vmem:[#allocation2 + $0x3c] sm:$0xf] %vm695, %v824
      %871 = vst.msk [vmem:[#allocation2 + $0x40] sm:$0xf] %vm695, %v826
      %872 = vst.msk [vmem:[#allocation2 + $0x44] sm:$0xf] %vm695, %v828
      %873 = vst.msk [vmem:[#allocation2 + $0x48] sm:$0xf] %vm695, %v830
      %874 = vst.msk [vmem:[#allocation2 + $0x4c] sm:$0xf] %vm695, %v832
      %875 = vst.msk [vmem:[#allocation2 + $0x50] sm:$0xf] %vm695, %v834
      %876 = vst.msk [vmem:[#allocation2 + $0x54] sm:$0xf] %vm695, %v836
      %877 = vst.msk [vmem:[#allocation2 + $0x58] sm:$0x3] %vm725, %v838
      %v881 = vrot.slane %v651, 6
      %v882 = vrot.slane %v881, 4
      %v883 = vrot.slane %v652, 6
      %v884 = vsel %vm747, %v882, %v883
      %v885 = vrot.slane %v883, 4
      %v886 = vrot.slane %v653, 6
      %v887 = vsel %vm747, %v885, %v886
      %888 = vrot.lane.b32.xlu0 %v881, 4
      %v889 = vpop.permute.xlu0 %888
      %890 = vrot.lane.b32.xlu0 %v884, 4
      %v891 = vpop.permute.xlu0 %890
      %892 = vrot.lane.b32.xlu0 %v887, 4
      %v893 = vpop.permute.xlu0 %892
      %897 = vst.msk [vmem:[#allocation2 + $0x58] sm:$0xc] %vm858, %v889
      %898 = vst.msk [vmem:[#allocation2 + $0x5c] sm:$0xf] %vm695, %v891
      %vm899 = vcmask 59424
      %900 = vst.msk [vmem:[#allocation2 + $0x60] sm:$0x7] %vm899, %v893
      %vm904 = vcmask 1042432
      %vm905 = vcmask 1046532
      %vm906 = vmor %vm904, %vm905
      %v907 = vrot.slane %v662, 5
      %v908 = vrot.slane %v907, 4
      %v909 = vrot.slane %v663, 5
      %v910 = vsel %vm906, %v908, %v909
      %v911 = vrot.slane %v909, 4
      %v912 = vrot.slane %v664, 5
      %v913 = vsel %vm906, %v911, %v912
      %914 = vrot.lane.b32.xlu0 %v907, 4
      %v915 = vpop.permute.xlu0 %914
      %916 = vrot.lane.b32.xlu0 %v910, 4
      %v917 = vpop.permute.xlu0 %916
      %918 = vrot.lane.b32.xlu0 %v913, 4
      %v919 = vpop.permute.xlu0 %918
      %vm923 = vcmask 60451
      %924 = vst.msk [vmem:[#allocation2 + $0x60] sm:$0x8] %vm923, %v915
      %925 = vst.msk [vmem:[#allocation2 + $0x64] sm:$0xf] %vm695, %v917
      %926 = vst.msk [vmem:[#allocation2 + $0x68] sm:$0xf] %vm695, %v919
      %vm927 = vcmask 24576
      %vm928 = vsmask.f32 256
      %vm929 = vmand %vm927, %vm928
      %v930 = vld [vmem:[#allocation2] sm:$0x1]
      %v931 = vsel %vm929, 0, %v930
      %932 = vst [vmem:[#allocation2] sm:$0x1] %v931
      %v933 = vld [vmem:[#allocation2] sm:$0xf]
      %v934 = vld [vmem:[#allocation2 + $0x4] sm:$0xf]
      %v935 = vld [vmem:[#allocation2 + $0x8] sm:$0xf]
      %v936 = vld [vmem:[#allocation2 + $0xc] sm:$0xf]
      %v937 = vld [vmem:[#allocation2 + $0x10] sm:$0xf]
      %v938 = vld [vmem:[#allocation2 + $0x14] sm:$0xf]
      %v939 = vld [vmem:[#allocation2 + $0x18] sm:$0xf]
      %v940 = vld [vmem:[#allocation2 + $0x1c] sm:$0xf]
      %v941 = vld [vmem:[#allocation2 + $0x20] sm:$0xf]
      %v942 = vld [vmem:[#allocation2 + $0x24] sm:$0xf]
      %v943 = vld [vmem:[#allocation2 + $0x28] sm:$0xf]
      %v944 = vld [vmem:[#allocation2 + $0x2c] sm:$0xf]
      %v945 = vld [vmem:[#allocation2 + $0x30] sm:$0xf]
      %v946 = vld [vmem:[#allocation2 + $0x34] sm:$0xf]
      %v947 = vld [vmem:[#allocation2 + $0x38] sm:$0xf]
      %v948 = vld [vmem:[#allocation2 + $0x3c] sm:$0xf]
      %v949 = vld [vmem:[#allocation2 + $0x40] sm:$0xf]
      %v950 = vld [vmem:[#allocation2 + $0x44] sm:$0xf]
      %v951 = vld [vmem:[#allocation2 + $0x48] sm:$0xf]
      %v952 = vld [vmem:[#allocation2 + $0x4c] sm:$0xf]
      %v953 = vld [vmem:[#allocation2 + $0x50] sm:$0xf]
      %v954 = vld [vmem:[#allocation2 + $0x54] sm:$0xf]
      %v955 = vld [vmem:[#allocation2 + $0x58] sm:$0xf]
      %v956 = vld [vmem:[#allocation2 + $0x5c] sm:$0xf]
      %v957 = vld [vmem:[#allocation2 + $0x60] sm:$0xf]
      %v958 = vld [vmem:[#allocation2 + $0x64] sm:$0xf]
      %v959 = vld [vmem:[#allocation2 + $0x68] sm:$0xf]
      %vm960 = vsmask.f32 4368
      %vm961 = vmor %vm928, %vm960
      %v963 = vshrl.u32 %v933, 16
      %v965 = vrot.slane %v963, 7
      %v966 = vshll.u32 %v933, 16
      %v968 = vor.u32 %v965, %v966
      %v969 = vrot.slane %v965, 4
      %v971 = vshrl.u32 %v934, 16
      %v973 = vrot.slane %v971, 7
      %v974 = vshll.u32 %v934, 16
      %v976 = vor.u32 %v973, %v974
      %v977 = vsel %vm961, %v969, %v976
      %v978 = vrot.slane %v973, 4
      %v980 = vshrl.u32 %v935, 16
      %v982 = vrot.slane %v980, 7
      %v983 = vshll.u32 %v935, 16
      %v985 = vor.u32 %v982, %v983
      %v986 = vsel %vm961, %v978, %v985
      %v987 = vrot.slane %v982, 4
      %v989 = vshrl.u32 %v936, 16
      %v991 = vrot.slane %v989, 7
      %v992 = vshll.u32 %v936, 16
      %v994 = vor.u32 %v991, %v992
      %v995 = vsel %vm961, %v987, %v994
      %v996 = vrot.slane %v991, 4
      %v998 = vshrl.u32 %v937, 16
      %v1000 = vrot.slane %v998, 7
      %v1001 = vshll.u32 %v937, 16
      %v1003 = vor.u32 %v1000, %v1001
      %v1004 = vsel %vm961, %v996, %v1003
      %v1005 = vrot.slane %v1000, 4
      %v1007 = vshrl.u32 %v938, 16
      %v1009 = vrot.slane %v1007, 7
      %v1010 = vshll.u32 %v938, 16
      %v1012 = vor.u32 %v1009, %v1010
      %v1013 = vsel %vm961, %v1005, %v1012
      %v1014 = vrot.slane %v1009, 4
      %v1016 = vshrl.u32 %v939, 16
      %v1018 = vrot.slane %v1016, 7
      %v1019 = vshll.u32 %v939, 16
      %v1021 = vor.u32 %v1018, %v1019
      %v1022 = vsel %vm961, %v1014, %v1021
      %v1023 = vrot.slane %v1018, 4
      %v1025 = vshrl.u32 %v940, 16
      %v1027 = vrot.slane %v1025, 7
      %v1028 = vshll.u32 %v940, 16
      %v1030 = vor.u32 %v1027, %v1028
      %v1031 = vsel %vm961, %v1023, %v1030
      %v1032 = vrot.slane %v1027, 4
      %v1034 = vshrl.u32 %v941, 16
      %v1036 = vrot.slane %v1034, 7
      %v1037 = vshll.u32 %v941, 16
      %v1039 = vor.u32 %v1036, %v1037
      %v1040 = vsel %vm961, %v1032, %v1039
      %v1041 = vrot.slane %v1036, 4
      %v1043 = vshrl.u32 %v942, 16
      %v1045 = vrot.slane %v1043, 7
      %v1046 = vshll.u32 %v942, 16
      %v1048 = vor.u32 %v1045, %v1046
      %v1049 = vsel %vm961, %v1041, %v1048
      %v1050 = vrot.slane %v1045, 4
      %v1052 = vshrl.u32 %v943, 16
      %v1054 = vrot.slane %v1052, 7
      %v1055 = vshll.u32 %v943, 16
      %v1057 = vor.u32 %v1054, %v1055
      %v1058 = vsel %vm961, %v1050, %v1057
      %v1059 = vrot.slane %v1054, 4
      %v1061 = vshrl.u32 %v944, 16
      %v1063 = vrot.slane %v1061, 7
      %v1064 = vshll.u32 %v944, 16
      %v1066 = vor.u32 %v1063, %v1064
      %v1067 = vsel %vm961, %v1059, %v1066
      %v1068 = vrot.slane %v1063, 4
      %v1070 = vshrl.u32 %v945, 16
      %v1072 = vrot.slane %v1070, 7
      %v1073 = vshll.u32 %v945, 16
      %v1075 = vor.u32 %v1072, %v1073
      %v1076 = vsel %vm961, %v1068, %v1075
      %v1077 = vrot.slane %v1072, 4
      %v1079 = vshrl.u32 %v946, 16
      %v1081 = vrot.slane %v1079, 7
      %v1082 = vshll.u32 %v946, 16
      %v1084 = vor.u32 %v1081, %v1082
      %v1085 = vsel %vm961, %v1077, %v1084
      %v1086 = vrot.slane %v1081, 4
      %v1088 = vshrl.u32 %v947, 16
      %v1090 = vrot.slane %v1088, 7
      %v1091 = vshll.u32 %v947, 16
      %v1093 = vor.u32 %v1090, %v1091
      %v1094 = vsel %vm961, %v1086, %v1093
      %v1095 = vrot.slane %v1090, 4
      %v1097 = vshrl.u32 %v948, 16
      %v1099 = vrot.slane %v1097, 7
      %v1100 = vshll.u32 %v948, 16
      %v1102 = vor.u32 %v1099, %v1100
      %v1103 = vsel %vm961, %v1095, %v1102
      %v1104 = vrot.slane %v1099, 4
      %v1106 = vshrl.u32 %v949, 16
      %v1108 = vrot.slane %v1106, 7
      %v1109 = vshll.u32 %v949, 16
      %v1111 = vor.u32 %v1108, %v1109
      %v1112 = vsel %vm961, %v1104, %v1111
      %v1113 = vrot.slane %v1108, 4
      %v1115 = vshrl.u32 %v950, 16
      %v1117 = vrot.slane %v1115, 7
      %v1118 = vshll.u32 %v950, 16
      %v1120 = vor.u32 %v1117, %v1118
      %v1121 = vsel %vm961, %v1113, %v1120
      %v1122 = vrot.slane %v1117, 4
      %v1124 = vshrl.u32 %v951, 16
      %v1126 = vrot.slane %v1124, 7
      %v1127 = vshll.u32 %v951, 16
      %v1129 = vor.u32 %v1126, %v1127
      %v1130 = vsel %vm961, %v1122, %v1129
      %v1131 = vrot.slane %v1126, 4
      %v1133 = vshrl.u32 %v952, 16
      %v1135 = vrot.slane %v1133, 7
      %v1136 = vshll.u32 %v952, 16
      %v1138 = vor.u32 %v1135, %v1136
      %v1139 = vsel %vm961, %v1131, %v1138
      %v1140 = vrot.slane %v1135, 4
      %v1142 = vshrl.u32 %v953, 16
      %v1144 = vrot.slane %v1142, 7
      %v1145 = vshll.u32 %v953, 16
      %v1147 = vor.u32 %v1144, %v1145
      %v1148 = vsel %vm961, %v1140, %v1147
      %v1149 = vrot.slane %v1144, 4
      %v1151 = vshrl.u32 %v954, 16
      %v1153 = vrot.slane %v1151, 7
      %v1154 = vshll.u32 %v954, 16
      %v1156 = vor.u32 %v1153, %v1154
      %v1157 = vsel %vm961, %v1149, %v1156
      %v1158 = vrot.slane %v1153, 4
      %v1160 = vshrl.u32 %v955, 16
      %v1162 = vrot.slane %v1160, 7
      %v1163 = vshll.u32 %v955, 16
      %v1165 = vor.u32 %v1162, %v1163
      %v1166 = vsel %vm961, %v1158, %v1165
      %v1167 = vrot.slane %v1162, 4
      %v1169 = vshrl.u32 %v956, 16
      %v1171 = vrot.slane %v1169, 7
      %v1172 = vshll.u32 %v956, 16
      %v1174 = vor.u32 %v1171, %v1172
      %v1175 = vsel %vm961, %v1167, %v1174
      %v1176 = vrot.slane %v1171, 4
      %v1178 = vshrl.u32 %v957, 16
      %v1180 = vrot.slane %v1178, 7
      %v1181 = vshll.u32 %v957, 16
      %v1183 = vor.u32 %v1180, %v1181
      %v1184 = vsel %vm961, %v1176, %v1183
      %v1185 = vrot.slane %v1180, 4
      %v1187 = vshrl.u32 %v958, 16
      %v1189 = vrot.slane %v1187, 7
      %v1190 = vshll.u32 %v958, 16
      %v1192 = vor.u32 %v1189, %v1190
      %v1193 = vsel %vm961, %v1185, %v1192
      %v1194 = vrot.slane %v1189, 4
      %v1196 = vshrl.u32 %v959, 16
      %v1198 = vrot.slane %v1196, 7
      %v1199 = vshll.u32 %v959, 16
      %v1201 = vor.u32 %v1198, %v1199
      %v1202 = vsel %vm961, %v1194, %v1201
      %1203 = vrot.lane.b32.xlu0 %v968, 124
      %v1204 = vpop.permute.xlu0 %1203
      %1205 = vrot.lane.b32.xlu0 %v977, 124
      %v1206 = vpop.permute.xlu0 %1205
      %1207 = vrot.lane.b32.xlu0 %v986, 124
      %v1208 = vpop.permute.xlu0 %1207
      %1209 = vrot.lane.b32.xlu0 %v995, 124
      %v1210 = vpop.permute.xlu0 %1209
      %1211 = vrot.lane.b32.xlu0 %v1004, 124
      %v1212 = vpop.permute.xlu0 %1211
      %1213 = vrot.lane.b32.xlu0 %v1013, 124
      %v1214 = vpop.permute.xlu0 %1213
      %1215 = vrot.lane.b32.xlu0 %v1022, 124
      %v1216 = vpop.permute.xlu0 %1215
      %1217 = vrot.lane.b32.xlu0 %v1031, 124
      %v1218 = vpop.permute.xlu0 %1217
      %1219 = vrot.lane.b32.xlu0 %v1040, 124
      %v1220 = vpop.permute.xlu0 %1219
      %1221 = vrot.lane.b32.xlu0 %v1049, 124
      %v1222 = vpop.permute.xlu0 %1221
      %1223 = vrot.lane.b32.xlu0 %v1058, 124
      %v1224 = vpop.permute.xlu0 %1223
      %1225 = vrot.lane.b32.xlu0 %v1067, 124
      %v1226 = vpop.permute.xlu0 %1225
      %1227 = vrot.lane.b32.xlu0 %v1076, 124
      %v1228 = vpop.permute.xlu0 %1227
      %1229 = vrot.lane.b32.xlu0 %v1085, 124
      %v1230 = vpop.permute.xlu0 %1229
      %1231 = vrot.lane.b32.xlu0 %v1094, 124
      %v1232 = vpop.permute.xlu0 %1231
      %1233 = vrot.lane.b32.xlu0 %v1103, 124
      %v1234 = vpop.permute.xlu0 %1233
      %1235 = vrot.lane.b32.xlu0 %v1112, 124
      %v1236 = vpop.permute.xlu0 %1235
      %1237 = vrot.lane.b32.xlu0 %v1121, 124
      %v1238 = vpop.permute.xlu0 %1237
      %1239 = vrot.lane.b32.xlu0 %v1130, 124
      %v1240 = vpop.permute.xlu0 %1239
      %1241 = vrot.lane.b32.xlu0 %v1139, 124
      %v1242 = vpop.permute.xlu0 %1241
      %1243 = vrot.lane.b32.xlu0 %v1148, 124
      %v1244 = vpop.permute.xlu0 %1243
      %1245 = vrot.lane.b32.xlu0 %v1157, 124
      %v1246 = vpop.permute.xlu0 %1245
      %1247 = vrot.lane.b32.xlu0 %v1166, 124
      %v1248 = vpop.permute.xlu0 %1247
      %1249 = vrot.lane.b32.xlu0 %v1175, 124
      %v1250 = vpop.permute.xlu0 %1249
      %1251 = vrot.lane.b32.xlu0 %v1184, 124
      %v1252 = vpop.permute.xlu0 %1251
      %1253 = vrot.lane.b32.xlu0 %v1193, 124
      %v1254 = vpop.permute.xlu0 %1253
      %1255 = vrot.lane.b32.xlu0 %v1202, 124
      %v1256 = vpop.permute.xlu0 %1255
      %vm1284 = vcmask 27648
      %vm1285 = vsmask.f32 7938
      %vm1286 = vmand %vm1284, %vm1285
      %v1287 = vsel %vm1286, %v1204, %v933
      %1288 = vst [vmem:[#allocation2] sm:$0xf] %v1287
      %vm1289 = vcmask 27648
      %1290 = vst.msk [vmem:[#allocation2 + $0x4] sm:$0xf] %vm1289, %v1206
      %1291 = vst.msk [vmem:[#allocation2 + $0x8] sm:$0xf] %vm1289, %v1208
      %1292 = vst.msk [vmem:[#allocation2 + $0xc] sm:$0xf] %vm1289, %v1210
      %1293 = vst.msk [vmem:[#allocation2 + $0x10] sm:$0xf] %vm1289, %v1212
      %1294 = vst.msk [vmem:[#allocation2 + $0x14] sm:$0xf] %vm1289, %v1214
      %1295 = vst.msk [vmem:[#allocation2 + $0x18] sm:$0xf] %vm1289, %v1216
      %1296 = vst.msk [vmem:[#allocation2 + $0x1c] sm:$0xf] %vm1289, %v1218
      %1297 = vst.msk [vmem:[#allocation2 + $0x20] sm:$0xf] %vm1289, %v1220
      %1298 = vst.msk [vmem:[#allocation2 + $0x24] sm:$0xf] %vm1289, %v1222
      %1299 = vst.msk [vmem:[#allocation2 + $0x28] sm:$0xf] %vm1289, %v1224
      %1300 = vst.msk [vmem:[#allocation2 + $0x2c] sm:$0xf] %vm1289, %v1226
      %1301 = vst.msk [vmem:[#allocation2 + $0x30] sm:$0xf] %vm1289, %v1228
      %1302 = vst.msk [vmem:[#allocation2 + $0x34] sm:$0xf] %vm1289, %v1230
      %1303 = vst.msk [vmem:[#allocation2 + $0x38] sm:$0xf] %vm1289, %v1232
      %1304 = vst.msk [vmem:[#allocation2 + $0x3c] sm:$0xf] %vm1289, %v1234
      %1305 = vst.msk [vmem:[#allocation2 + $0x40] sm:$0xf] %vm1289, %v1236
      %1306 = vst.msk [vmem:[#allocation2 + $0x44] sm:$0xf] %vm1289, %v1238
      %1307 = vst.msk [vmem:[#allocation2 + $0x48] sm:$0xf] %vm1289, %v1240
      %1308 = vst.msk [vmem:[#allocation2 + $0x4c] sm:$0xf] %vm1289, %v1242
      %1309 = vst.msk [vmem:[#allocation2 + $0x50] sm:$0xf] %vm1289, %v1244
      %1310 = vst.msk [vmem:[#allocation2 + $0x54] sm:$0xf] %vm1289, %v1246
      %1311 = vst.msk [vmem:[#allocation2 + $0x58] sm:$0xf] %vm1289, %v1248
      %1312 = vst.msk [vmem:[#allocation2 + $0x5c] sm:$0xf] %vm1289, %v1250
      %1313 = vst.msk [vmem:[#allocation2 + $0x60] sm:$0xf] %vm1289, %v1252
      %1314 = vst.msk [vmem:[#allocation2 + $0x64] sm:$0xf] %vm1289, %v1254
      %1315 = vst.msk [vmem:[#allocation2 + $0x68] sm:$0xf] %vm1289, %v1256
      %v1316 = vld [vmem:[#allocation2] sm:$0xf]
      %v1317 = vld [vmem:[#allocation2 + $0x4] sm:$0xf]
      %v1318 = vld [vmem:[#allocation2 + $0x8] sm:$0xf]
      %v1319 = vld [vmem:[#allocation2 + $0xc] sm:$0xf]
      %v1320 = vld [vmem:[#allocation2 + $0x10] sm:$0xf]
      %v1321 = vld [vmem:[#allocation2 + $0x14] sm:$0xf]
      %v1322 = vld [vmem:[#allocation2 + $0x18] sm:$0xf]
      %v1323 = vld [vmem:[#allocation2 + $0x1c] sm:$0xf]
      %v1324 = vld [vmem:[#allocation2 + $0x20] sm:$0xf]
      %v1325 = vld [vmem:[#allocation2 + $0x24] sm:$0xf]
      %v1326 = vld [vmem:[#allocation2 + $0x28] sm:$0xf]
      %v1327 = vld [vmem:[#allocation2 + $0x2c] sm:$0xf]
      %v1328 = vld [vmem:[#allocation2 + $0x30] sm:$0xf]
      %v1329 = vld [vmem:[#allocation2 + $0x34] sm:$0xf]
      %v1330 = vld [vmem:[#allocation2 + $0x38] sm:$0xf]
      %v1331 = vld [vmem:[#allocation2 + $0x3c] sm:$0xf]
      %v1332 = vld [vmem:[#allocation2 + $0x40] sm:$0xf]
      %v1333 = vld [vmem:[#allocation2 + $0x44] sm:$0xf]
      %v1334 = vld [vmem:[#allocation2 + $0x48] sm:$0xf]
      %v1335 = vld [vmem:[#allocation2 + $0x4c] sm:$0xf]
      %v1336 = vld [vmem:[#allocation2 + $0x50] sm:$0xf]
      %v1337 = vld [vmem:[#allocation2 + $0x54] sm:$0xf]
      %v1338 = vld [vmem:[#allocation2 + $0x58] sm:$0xf]
      %v1339 = vld [vmem:[#allocation2 + $0x5c] sm:$0xf]
      %v1340 = vld [vmem:[#allocation2 + $0x60] sm:$0xf]
      %v1341 = vld [vmem:[#allocation2 + $0x64] sm:$0xf]
      %v1342 = vld [vmem:[#allocation2 + $0x68] sm:$0xf]
      %vm1343 = vsmask.f32 3328
      %vm1344 = vsmask.f32 7440
      %vm1345 = vmor %vm1343, %vm1344
      %v1347 = vshrl.u32 %v1316, 16
      %v1349 = vrot.slane %v1347, 4
      %v1350 = vshll.u32 %v1316, 16
      %v1352 = vrot.slane %v1350, 5
      %v1353 = vor.u32 %v1349, %v1352
      %v1354 = vrot.slane %v1353, 4
      %v1356 = vshll.u32 %v1317, 16
      %v1358 = vrot.slane %v1356, 5
      %v1359 = vsel %vm1345, %v1354, %v1358
      %v1360 = vshrl.u32 %v1317, 16
      %v1362 = vrot.slane %v1360, 4
      %v1363 = vor.u32 %v1362, %v1358
      %v1364 = vrot.slane %v1363, 4
      %v1366 = vshll.u32 %v1318, 16
      %v1368 = vrot.slane %v1366, 5
      %v1369 = vsel %vm1345, %v1364, %v1368
      %v1370 = vshrl.u32 %v1318, 16
      %v1372 = vrot.slane %v1370, 4
      %v1373 = vor.u32 %v1372, %v1368
      %v1374 = vrot.slane %v1373, 4
      %v1376 = vshll.u32 %v1319, 16
      %v1378 = vrot.slane %v1376, 5
      %v1379 = vsel %vm1345, %v1374, %v1378
      %v1380 = vshrl.u32 %v1319, 16
      %v1382 = vrot.slane %v1380, 4
      %v1383 = vor.u32 %v1382, %v1378
      %v1384 = vrot.slane %v1383, 4
      %v1386 = vshll.u32 %v1320, 16
      %v1388 = vrot.slane %v1386, 5
      %v1389 = vsel %vm1345, %v1384, %v1388
      %v1390 = vshrl.u32 %v1320, 16
      %v1392 = vrot.slane %v1390, 4
      %v1393 = vor.u32 %v1392, %v1388
      %v1394 = vrot.slane %v1393, 4
      %v1396 = vshll.u32 %v1321, 16
      %v1398 = vrot.slane %v1396, 5
      %v1399 = vsel %vm1345, %v1394, %v1398
      %v1400 = vshrl.u32 %v1321, 16
      %v1402 = vrot.slane %v1400, 4
      %v1403 = vor.u32 %v1402, %v1398
      %v1404 = vrot.slane %v1403, 4
      %v1406 = vshll.u32 %v1322, 16
      %v1408 = vrot.slane %v1406, 5
      %v1409 = vsel %vm1345, %v1404, %v1408
      %v1410 = vshrl.u32 %v1322, 16
      %v1412 = vrot.slane %v1410, 4
      %v1413 = vor.u32 %v1412, %v1408
      %v1414 = vrot.slane %v1413, 4
      %v1416 = vshll.u32 %v1323, 16
      %v1418 = vrot.slane %v1416, 5
      %v1419 = vsel %vm1345, %v1414, %v1418
      %v1420 = vshrl.u32 %v1323, 16
      %v1422 = vrot.slane %v1420, 4
      %v1423 = vor.u32 %v1422, %v1418
      %v1424 = vrot.slane %v1423, 4
      %v1426 = vshll.u32 %v1324, 16
      %v1428 = vrot.slane %v1426, 5
      %v1429 = vsel %vm1345, %v1424, %v1428
      %v1430 = vshrl.u32 %v1324, 16
      %v1432 = vrot.slane %v1430, 4
      %v1433 = vor.u32 %v1432, %v1428
      %v1434 = vrot.slane %v1433, 4
      %v1436 = vshll.u32 %v1325, 16
      %v1438 = vrot.slane %v1436, 5
      %v1439 = vsel %vm1345, %v1434, %v1438
      %v1440 = vshrl.u32 %v1325, 16
      %v1442 = vrot.slane %v1440, 4
      %v1443 = vor.u32 %v1442, %v1438
      %v1444 = vrot.slane %v1443, 4
      %v1446 = vshll.u32 %v1326, 16
      %v1448 = vrot.slane %v1446, 5
      %v1449 = vsel %vm1345, %v1444, %v1448
      %v1450 = vshrl.u32 %v1326, 16
      %v1452 = vrot.slane %v1450, 4
      %v1453 = vor.u32 %v1452, %v1448
      %v1454 = vrot.slane %v1453, 4
      %v1456 = vshll.u32 %v1327, 16
      %v1458 = vrot.slane %v1456, 5
      %v1459 = vsel %vm1345, %v1454, %v1458
      %v1460 = vshrl.u32 %v1327, 16
      %v1462 = vrot.slane %v1460, 4
      %v1463 = vor.u32 %v1462, %v1458
      %v1464 = vrot.slane %v1463, 4
      %v1466 = vshll.u32 %v1328, 16
      %v1468 = vrot.slane %v1466, 5
      %v1469 = vsel %vm1345, %v1464, %v1468
      %v1470 = vshrl.u32 %v1328, 16
      %v1472 = vrot.slane %v1470, 4
      %v1473 = vor.u32 %v1472, %v1468
      %v1474 = vrot.slane %v1473, 4
      %v1476 = vshll.u32 %v1329, 16
      %v1478 = vrot.slane %v1476, 5
      %v1479 = vsel %vm1345, %v1474, %v1478
      %v1480 = vshrl.u32 %v1329, 16
      %v1482 = vrot.slane %v1480, 4
      %v1483 = vor.u32 %v1482, %v1478
      %v1484 = vrot.slane %v1483, 4
      %v1486 = vshll.u32 %v1330, 16
      %v1488 = vrot.slane %v1486, 5
      %v1489 = vsel %vm1345, %v1484, %v1488
      %v1490 = vshrl.u32 %v1330, 16
      %v1492 = vrot.slane %v1490, 4
      %v1493 = vor.u32 %v1492, %v1488
      %v1494 = vrot.slane %v1493, 4
      %v1496 = vshll.u32 %v1331, 16
      %v1498 = vrot.slane %v1496, 5
      %v1499 = vsel %vm1345, %v1494, %v1498
      %v1500 = vshrl.u32 %v1331, 16
      %v1502 = vrot.slane %v1500, 4
      %v1503 = vor.u32 %v1502, %v1498
      %v1504 = vrot.slane %v1503, 4
      %v1506 = vshll.u32 %v1332, 16
      %v1508 = vrot.slane %v1506, 5
      %v1509 = vsel %vm1345, %v1504, %v1508
      %v1510 = vshrl.u32 %v1332, 16
      %v1512 = vrot.slane %v1510, 4
      %v1513 = vor.u32 %v1512, %v1508
      %v1514 = vrot.slane %v1513, 4
      %v1516 = vshll.u32 %v1333, 16
      %v1518 = vrot.slane %v1516, 5
      %v1519 = vsel %vm1345, %v1514, %v1518
      %v1520 = vshrl.u32 %v1333, 16
      %v1522 = vrot.slane %v1520, 4
      %v1523 = vor.u32 %v1522, %v1518
      %v1524 = vrot.slane %v1523, 4
      %v1526 = vshll.u32 %v1334, 16
      %v1528 = vrot.slane %v1526, 5
      %v1529 = vsel %vm1345, %v1524, %v1528
      %v1530 = vshrl.u32 %v1334, 16
      %v1532 = vrot.slane %v1530, 4
      %v1533 = vor.u32 %v1532, %v1528
      %v1534 = vrot.slane %v1533, 4
      %v1536 = vshll.u32 %v1335, 16
      %v1538 = vrot.slane %v1536, 5
      %v1539 = vsel %vm1345, %v1534, %v1538
      %v1540 = vshrl.u32 %v1335, 16
      %v1542 = vrot.slane %v1540, 4
      %v1543 = vor.u32 %v1542, %v1538
      %v1544 = vrot.slane %v1543, 4
      %v1546 = vshll.u32 %v1336, 16
      %v1548 = vrot.slane %v1546, 5
      %v1549 = vsel %vm1345, %v1544, %v1548
      %v1550 = vshrl.u32 %v1336, 16
      %v1552 = vrot.slane %v1550, 4
      %v1553 = vor.u32 %v1552, %v1548
      %v1554 = vrot.slane %v1553, 4
      %v1556 = vshll.u32 %v1337, 16
      %v1558 = vrot.slane %v1556, 5
      %v1559 = vsel %vm1345, %v1554, %v1558
      %v1560 = vshrl.u32 %v1337, 16
      %v1562 = vrot.slane %v1560, 4
      %v1563 = vor.u32 %v1562, %v1558
      %v1564 = vrot.slane %v1563, 4
      %v1566 = vshll.u32 %v1338, 16
      %v1568 = vrot.slane %v1566, 5
      %v1569 = vsel %vm1345, %v1564, %v1568
      %v1570 = vshrl.u32 %v1338, 16
      %v1572 = vrot.slane %v1570, 4
      %v1573 = vor.u32 %v1572, %v1568
      %v1574 = vrot.slane %v1573, 4
      %v1576 = vshll.u32 %v1339, 16
      %v1578 = vrot.slane %v1576, 5
      %v1579 = vsel %vm1345, %v1574, %v1578
      %v1580 = vshrl.u32 %v1339, 16
      %v1582 = vrot.slane %v1580, 4
      %v1583 = vor.u32 %v1582, %v1578
      %v1584 = vrot.slane %v1583, 4
      %v1586 = vshll.u32 %v1340, 16
      %v1588 = vrot.slane %v1586, 5
      %v1589 = vsel %vm1345, %v1584, %v1588
      %v1590 = vshrl.u32 %v1340, 16
      %v1592 = vrot.slane %v1590, 4
      %v1593 = vor.u32 %v1592, %v1588
      %v1594 = vrot.slane %v1593, 4
      %v1596 = vshll.u32 %v1341, 16
      %v1598 = vrot.slane %v1596, 5
      %v1599 = vsel %vm1345, %v1594, %v1598
      %v1600 = vshrl.u32 %v1341, 16
      %v1602 = vrot.slane %v1600, 4
      %v1603 = vor.u32 %v1602, %v1598
      %v1604 = vrot.slane %v1603, 4
      %v1606 = vshll.u32 %v1342, 16
      %v1608 = vrot.slane %v1606, 5
      %v1609 = vsel %vm1345, %v1604, %v1608
      %v1610 = vshrl.u32 %v1342, 16
      %v1612 = vrot.slane %v1610, 4
      %v1613 = vor.u32 %v1612, %v1608
      %v1614 = vrot.slane %v1613, 4
      %1615 = vrot.lane.b32.xlu0 %v1359, 4
      %v1616 = vpop.permute.xlu0 %1615
      %1617 = vrot.lane.b32.xlu0 %v1369, 4
      %v1618 = vpop.permute.xlu0 %1617
      %1619 = vrot.lane.b32.xlu0 %v1379, 4
      %v1620 = vpop.permute.xlu0 %1619
      %1621 = vrot.lane.b32.xlu0 %v1389, 4
      %v1622 = vpop.permute.xlu0 %1621
      %1623 = vrot.lane.b32.xlu0 %v1399, 4
      %v1624 = vpop.permute.xlu0 %1623
      %1625 = vrot.lane.b32.xlu0 %v1409, 4
      %v1626 = vpop.permute.xlu0 %1625
      %1627 = vrot.lane.b32.xlu0 %v1419, 4
      %v1628 = vpop.permute.xlu0 %1627
      %1629 = vrot.lane.b32.xlu0 %v1429, 4
      %v1630 = vpop.permute.xlu0 %1629
      %1631 = vrot.lane.b32.xlu0 %v1439, 4
      %v1632 = vpop.permute.xlu0 %1631
      %1633 = vrot.lane.b32.xlu0 %v1449, 4
      %v1634 = vpop.permute.xlu0 %1633
      %1635 = vrot.lane.b32.xlu0 %v1459, 4
      %v1636 = vpop.permute.xlu0 %1635
      %1637 = vrot.lane.b32.xlu0 %v1469, 4
      %v1638 = vpop.permute.xlu0 %1637
      %1639 = vrot.lane.b32.xlu0 %v1479, 4
      %v1640 = vpop.permute.xlu0 %1639
      %1641 = vrot.lane.b32.xlu0 %v1489, 4
      %v1642 = vpop.permute.xlu0 %1641
      %1643 = vrot.lane.b32.xlu0 %v1499, 4
      %v1644 = vpop.permute.xlu0 %1643
      %1645 = vrot.lane.b32.xlu0 %v1509, 4
      %v1646 = vpop.permute.xlu0 %1645
      %1647 = vrot.lane.b32.xlu0 %v1519, 4
      %v1648 = vpop.permute.xlu0 %1647
      %1649 = vrot.lane.b32.xlu0 %v1529, 4
      %v1650 = vpop.permute.xlu0 %1649
      %1651 = vrot.lane.b32.xlu0 %v1539, 4
      %v1652 = vpop.permute.xlu0 %1651
      %1653 = vrot.lane.b32.xlu0 %v1549, 4
      %v1654 = vpop.permute.xlu0 %1653
      %1655 = vrot.lane.b32.xlu0 %v1559, 4
      %v1656 = vpop.permute.xlu0 %1655
      %1657 = vrot.lane.b32.xlu0 %v1569, 4
      %v1658 = vpop.permute.xlu0 %1657
      %1659 = vrot.lane.b32.xlu0 %v1579, 4
      %v1660 = vpop.permute.xlu0 %1659
      %1661 = vrot.lane.b32.xlu0 %v1589, 4
      %v1662 = vpop.permute.xlu0 %1661
      %1663 = vrot.lane.b32.xlu0 %v1599, 4
      %v1664 = vpop.permute.xlu0 %1663
      %1665 = vrot.lane.b32.xlu0 %v1609, 4
      %v1666 = vpop.permute.xlu0 %1665
      %1667 = vrot.lane.b32.xlu0 %v1614, 4
      %v1668 = vpop.permute.xlu0 %1667
      %vm1696 = vcmask 93248
      %1697 = vst.msk [vmem:[#allocation2] sm:$0xf] %vm1696, %v1616
      %1698 = vst.msk [vmem:[#allocation2 + $0x4] sm:$0xf] %vm1696, %v1618
      %1699 = vst.msk [vmem:[#allocation2 + $0x8] sm:$0xf] %vm1696, %v1620
      %1700 = vst.msk [vmem:[#allocation2 + $0xc] sm:$0xf] %vm1696, %v1622
      %1701 = vst.msk [vmem:[#allocation2 + $0x10] sm:$0xf] %vm1696, %v1624
      %1702 = vst.msk [vmem:[#allocation2 + $0x14] sm:$0xf] %vm1696, %v1626
      %1703 = vst.msk [vmem:[#allocation2 + $0x18] sm:$0xf] %vm1696, %v1628
      %1704 = vst.msk [vmem:[#allocation2 + $0x1c] sm:$0xf] %vm1696, %v1630
      %1705 = vst.msk [vmem:[#allocation2 + $0x20] sm:$0xf] %vm1696, %v1632
      %1706 = vst.msk [vmem:[#allocation2 + $0x24] sm:$0xf] %vm1696, %v1634
      %1707 = vst.msk [vmem:[#allocation2 + $0x28] sm:$0xf] %vm1696, %v1636
      %1708 = vst.msk [vmem:[#allocation2 + $0x2c] sm:$0xf] %vm1696, %v1638
      %1709 = vst.msk [vmem:[#allocation2 + $0x30] sm:$0xf] %vm1696, %v1640
      %1710 = vst.msk [vmem:[#allocation2 + $0x34] sm:$0xf] %vm1696, %v1642
      %1711 = vst.msk [vmem:[#allocation2 + $0x38] sm:$0xf] %vm1696, %v1644
      %1712 = vst.msk [vmem:[#allocation2 + $0x3c] sm:$0xf] %vm1696, %v1646
      %1713 = vst.msk [vmem:[#allocation2 + $0x40] sm:$0xf] %vm1696, %v1648
      %1714 = vst.msk [vmem:[#allocation2 + $0x44] sm:$0xf] %vm1696, %v1650
      %1715 = vst.msk [vmem:[#allocation2 + $0x48] sm:$0xf] %vm1696, %v1652
      %1716 = vst.msk [vmem:[#allocation2 + $0x4c] sm:$0xf] %vm1696, %v1654
      %1717 = vst.msk [vmem:[#allocation2 + $0x50] sm:$0xf] %vm1696, %v1656
      %1718 = vst.msk [vmem:[#allocation2 + $0x54] sm:$0xf] %vm1696, %v1658
      %1719 = vst.msk [vmem:[#allocation2 + $0x58] sm:$0xf] %vm1696, %v1660
      %1720 = vst.msk [vmem:[#allocation2 + $0x5c] sm:$0xf] %vm1696, %v1662
      %1721 = vst.msk [vmem:[#allocation2 + $0x60] sm:$0xf] %vm1696, %v1664
      %1722 = vst.msk [vmem:[#allocation2 + $0x64] sm:$0xf] %vm1696, %v1666
      %vm1723 = vcmask 93248
      %vm1724 = vmand %vm1723, %vm1343
      %v1725 = vld [vmem:[#allocation2 + $0x68] sm:$0xf]
      %v1726 = vsel %vm1724, %v1668, %v1725
      %1727 = vst [vmem:[#allocation2 + $0x68] sm:$0xf] %v1726
      %vm1728 = vcmask 93251
      %vm1729 = vsmask.f32 7950
      %vm1730 = vmand %vm1728, %vm1729
      %v1731 = vld [vmem:[#allocation2 + $0x68] sm:$0x8]
      %v1732 = vsel %vm1730, 0, %v1731
      %1733 = vst [vmem:[#allocation2 + $0x68] sm:$0x8] %v1732
      %v1734 = vld [vmem:[#allocation2] sm:$0xf]
      %v1735 = vld [vmem:[#allocation2 + $0x4] sm:$0xf]
      %v1736 = vld [vmem:[#allocation2 + $0x8] sm:$0xf]
      %v1737 = vld [vmem:[#allocation2 + $0xc] sm:$0xf]
      %v1738 = vld [vmem:[#allocation2 + $0x10] sm:$0xf]
      %v1739 = vld [vmem:[#allocation2 + $0x14] sm:$0xf]
      %v1740 = vld [vmem:[#allocation2 + $0x18] sm:$0xf]
      %v1741 = vld [vmem:[#allocation2 + $0x1c] sm:$0xf]
      %v1742 = vld [vmem:[#allocation2 + $0x20] sm:$0xf]
      %v1743 = vld [vmem:[#allocation2 + $0x24] sm:$0xf]
      %v1744 = vld [vmem:[#allocation2 + $0x28] sm:$0xf]
      %v1745 = vld [vmem:[#allocation2 + $0x2c] sm:$0xf]
      %v1746 = vld [vmem:[#allocation2 + $0x30] sm:$0xf]
      %v1747 = vld [vmem:[#allocation2 + $0x34] sm:$0xf]
      %v1748 = vld [vmem:[#allocation2 + $0x38] sm:$0xf]
      %v1749 = vld [vmem:[#allocation2 + $0x3c] sm:$0xf]
      %v1750 = vld [vmem:[#allocation2 + $0x40] sm:$0xf]
      %v1751 = vld [vmem:[#allocation2 + $0x44] sm:$0xf]
      %v1752 = vld [vmem:[#allocation2 + $0x48] sm:$0xf]
      %v1753 = vld [vmem:[#allocation2 + $0x4c] sm:$0xf]
      %v1754 = vld [vmem:[#allocation2 + $0x50] sm:$0xf]
      %v1755 = vld [vmem:[#allocation2 + $0x54] sm:$0xf]
      %v1756 = vld [vmem:[#allocation2 + $0x58] sm:$0x3]
      %v1757 = vld [vmem:[%s5] sm:$0xf]
      %v1758 = vld [vmem:[%s5 + $0x4] sm:$0x3]
      %v1759 = vld [vmem:[#allocation2 + $0x8] sm:$0xe]
      %v1760 = vld [vmem:[#allocation2 + $0x58] sm:$0xf]
      %v1761 = vld [vmem:[#allocation2 + $0x5c] sm:$0xf]
      %v1762 = vld [vmem:[#allocation2 + $0x60] sm:$0x7]
      %s1763 = scalar_lea.vmem %s5, 8
      %v1764 = vld [vmem:[%s1763] sm:$0xf]
      %v1765 = vld [vmem:[%s1763 + $0x4] sm:$0x3]
      %v1789 = vunpack.c.l.b16 %v1759
      %v1790 = vunpack.c.l.b16 %v1737
      %v1791 = vunpack.c.l.b16 %v1738
      %v1792 = vunpack.c.l.b16 %v1739
      %v1793 = vunpack.c.l.b16 %v1740
      %v1794 = vunpack.c.l.b16 %v1741
      %v1795 = vunpack.c.l.b16 %v1742
      %v1796 = vunpack.c.l.b16 %v1743
      %v1797 = vunpack.c.l.b16 %v1744
      %v1798 = vunpack.c.l.b16 %v1745
      %v1799 = vunpack.c.l.b16 %v1746
      %v1800 = vunpack.c.l.b16 %v1747
      %v1801 = vunpack.c.l.b16 %v1748
      %v1802 = vunpack.c.l.b16 %v1749
      %v1803 = vunpack.c.l.b16 %v1750
      %v1804 = vunpack.c.l.b16 %v1751
      %v1805 = vunpack.c.l.b16 %v1752
      %v1806 = vunpack.c.l.b16 %v1753
      %v1807 = vunpack.c.l.b16 %v1754
      %v1808 = vunpack.c.l.b16 %v1755
      %v1809 = vunpack.c.l.b16 %v1760
      %v1810 = vunpack.c.l.b16 %v1761
      %v1811 = vunpack.c.l.b16 %v1762
      %v1812 = vpack.c.b16 %v1790, %v1789
      %v1813 = vpack.c.b16 %v1792, %v1791
      %v1814 = vpack.c.b16 %v1794, %v1793
      %v1815 = vpack.c.b16 %v1796, %v1795
      %v1816 = vpack.c.b16 %v1798, %v1797
      %v1817 = vpack.c.b16 %v1800, %v1799
      %v1818 = vpack.c.b16 %v1802, %v1801
      %v1819 = vpack.c.b16 %v1804, %v1803
      %v1820 = vpack.c.b16 %v1806, %v1805
      %v1821 = vpack.c.b16 %v1808, %v1807
      %v1822 = vpack.c.b16 %v1810, %v1809
      %v1823 = vpack.c.b16 %v1811, %v1811
      %vm1824 = vcmask 1046528
      %v1825 = vrot.slane %v1812, 1
      %v1826 = vrot.slane %v1813, 1
      %v1827 = vsel %vm1824, %v1825, %v1826
      %v1828 = vrot.slane %v1814, 1
      %v1829 = vsel %vm1824, %v1826, %v1828
      %v1830 = vrot.slane %v1815, 1
      %v1831 = vsel %vm1824, %v1828, %v1830
      %v1832 = vrot.slane %v1816, 1
      %v1833 = vsel %vm1824, %v1830, %v1832
      %v1834 = vrot.slane %v1817, 1
      %v1835 = vsel %vm1824, %v1832, %v1834
      %v1836 = vrot.slane %v1818, 1
      %v1837 = vsel %vm1824, %v1834, %v1836
      %v1838 = vrot.slane %v1819, 1
      %v1839 = vsel %vm1824, %v1836, %v1838
      %v1840 = vrot.slane %v1820, 1
      %v1841 = vsel %vm1824, %v1838, %v1840
      %v1842 = vrot.slane %v1821, 1
      %v1843 = vsel %vm1824, %v1840, %v1842
      %v1844 = vrot.slane %v1822, 1
      %v1845 = vsel %vm1824, %v1842, %v1844
      %v1846 = vrot.slane %v1823, 1
      %v1847 = vsel %vm1824, %v1844, %v1846
      %v1850 = vunpack.c.l.b16 %v1764
      %v1851 = vunpack.c.l.b16 %v1765
      %v1852 = vpack.c.b16 %v1851, %v1850
      %vm1853 = vcmask 97280
      %v1855 = vsel %vm1853, %v1827, 0
      %v1858 = vsel %vm1853, %v1829, 0
      %v1861 = vsel %vm1853, %v1831, 0
      %v1864 = vsel %vm1853, %v1833, 0
      %v1867 = vsel %vm1853, %v1835, 0
      %v1870 = vsel %vm1853, %v1837, 0
      %v1873 = vsel %vm1853, %v1839, 0
      %v1876 = vsel %vm1853, %v1841, 0
      %v1879 = vsel %vm1853, %v1843, 0
      %v1882 = vsel %vm1853, %v1845, 0
      %v1885 = vsel %vm1853, %v1847, 0
      %v1888 = vsel %vm1853, %v1846, 0
      %vm1890 = vcmask 1045504
      %v1892 = vsel %vm1890, %v1852, 0
      %1894 = vmatpush.bf16.msra.mxu0 0
      %1895 = vmatpush.bf16.msra.mxu0 0
      %1896 = vmatpush.bf16.msra.mxu0 0
      %1897 = vmatpush.bf16.msra.mxu0 0
      %1898 = vmatpush.bf16.msra.mxu0 0
      %1899 = vmatpush.bf16.msra.mxu0 0
      %1900 = vmatpush.bf16.msra.mxu0 0
      %1901 = vmatpush.bf16.msra.mxu0 %v1892
      %1902 = vmatmul.bf16.gmra.mxu0 %v1855
      %v1903 = vpop.f32.mrf.mxu0
      %v1904 = vadd.f32 0.0, %v1903
      %v1905 = vpop.f32.mrf.mxu0
      %v1906 = vadd.f32 0.0, %v1905
      %1907 = vmatmul.bf16.gmra.mxu0 %v1858
      %v1908 = vpop.f32.mrf.mxu0
      %v1909 = vadd.f32 0.0, %v1908
      %v1910 = vpop.f32.mrf.mxu0
      %v1911 = vadd.f32 0.0, %v1910
      %1912 = vmatmul.bf16.gmra.mxu0 %v1861
      %v1913 = vpop.f32.mrf.mxu0
      %v1914 = vadd.f32 0.0, %v1913
      %v1915 = vpop.f32.mrf.mxu0
      %v1916 = vadd.f32 0.0, %v1915
      %1917 = vmatmul.bf16.gmra.mxu0 %v1864
      %v1918 = vpop.f32.mrf.mxu0
      %v1919 = vadd.f32 0.0, %v1918
      %v1920 = vpop.f32.mrf.mxu0
      %v1921 = vadd.f32 0.0, %v1920
      %1922 = vmatmul.bf16.gmra.mxu0 %v1867
      %v1923 = vpop.f32.mrf.mxu0
      %v1924 = vadd.f32 0.0, %v1923
      %v1925 = vpop.f32.mrf.mxu0
      %v1926 = vadd.f32 0.0, %v1925
      %1927 = vmatmul.bf16.gmra.mxu0 %v1870
      %v1928 = vpop.f32.mrf.mxu0
      %v1929 = vadd.f32 0.0, %v1928
      %v1930 = vpop.f32.mrf.mxu0
      %v1931 = vadd.f32 0.0, %v1930
      %1932 = vmatmul.bf16.gmra.mxu0 %v1873
      %v1933 = vpop.f32.mrf.mxu0
      %v1934 = vadd.f32 0.0, %v1933
      %v1935 = vpop.f32.mrf.mxu0
      %v1936 = vadd.f32 0.0, %v1935
      %1937 = vmatmul.bf16.gmra.mxu0 %v1876
      %v1938 = vpop.f32.mrf.mxu0
      %v1939 = vadd.f32 0.0, %v1938
      %v1940 = vpop.f32.mrf.mxu0
      %v1941 = vadd.f32 0.0, %v1940
      %1942 = vmatmul.bf16.gmra.mxu0 %v1879
      %v1943 = vpop.f32.mrf.mxu0
      %v1944 = vadd.f32 0.0, %v1943
      %v1945 = vpop.f32.mrf.mxu0
      %v1946 = vadd.f32 0.0, %v1945
      %1947 = vmatmul.bf16.gmra.mxu0 %v1882
      %v1948 = vpop.f32.mrf.mxu0
      %v1949 = vadd.f32 0.0, %v1948
      %v1950 = vpop.f32.mrf.mxu0
      %v1951 = vadd.f32 0.0, %v1950
      %1952 = vmatmul.bf16.gmra.mxu0 %v1885
      %v1953 = vpop.f32.mrf.mxu0
      %v1954 = vadd.f32 0.0, %v1953
      %v1955 = vpop.f32.mrf.mxu0
      %v1956 = vadd.f32 0.0, %v1955
      %1957 = vmatmul.bf16.gmra.mxu0 %v1888
      %v1958 = vpop.f32.mrf.mxu0
      %v1959 = vadd.f32 0.0, %v1958
      %v1960 = vpop.f32.mrf.mxu0
      %1961 = vdwg.mxu0
      %v1966 = vunpack.c.l.b16 %v1734
      %v1967 = vunpack.c.l.b16 %v1735
      %v1968 = vunpack.c.l.b16 %v1736
      %v1969 = vunpack.c.l.b16 %v1756
      %v1970 = vpack.c.b16 %v1967, %v1966
      %v1971 = vpack.c.b16 %v1790, %v1968
      %v1972 = vpack.c.b16 %v1969, %v1969
      %v1975 = vunpack.c.l.b16 %v1757
      %v1976 = vunpack.c.l.b16 %v1758
      %v1977 = vpack.c.b16 %v1976, %v1975
      %v1979 = vsel %vm1853, %v1970, 0
      %v1982 = vsel %vm1853, %v1971, 0
      %v1985 = vsel %vm1853, %v1813, 0
      %v1988 = vsel %vm1853, %v1814, 0
      %v1991 = vsel %vm1853, %v1815, 0
      %v1994 = vsel %vm1853, %v1816, 0
      %v1997 = vsel %vm1853, %v1817, 0
      %v2000 = vsel %vm1853, %v1818, 0
      %v2003 = vsel %vm1853, %v1819, 0
      %v2006 = vsel %vm1853, %v1820, 0
      %v2009 = vsel %vm1853, %v1821, 0
      %v2012 = vsel %vm1853, %v1972, 0
      %v2015 = vsel %vm1890, %v1977, 0
      %2017 = vmatpush.bf16.msra.mxu0 0
      %2018 = vmatpush.bf16.msra.mxu0 0
      %2019 = vmatpush.bf16.msra.mxu0 0
      %2020 = vmatpush.bf16.msra.mxu0 0
      %2021 = vmatpush.bf16.msra.mxu0 0
      %2022 = vmatpush.bf16.msra.mxu0 0
      %2023 = vmatpush.bf16.msra.mxu0 0
      %2024 = vmatpush.bf16.msra.mxu0 %v2015
      %2025 = vmatmul.bf16.gmra.mxu0 %v1979
      %v2026 = vpop.f32.mrf.mxu0
      %v2027 = vadd.f32 %v1904, %v2026
      %v2028 = vpop.f32.mrf.mxu0
      %v2029 = vadd.f32 %v1906, %v2028
      %2030 = vmatmul.bf16.gmra.mxu0 %v1982
      %v2031 = vpop.f32.mrf.mxu0
      %v2032 = vadd.f32 %v1909, %v2031
      %v2033 = vpop.f32.mrf.mxu0
      %v2034 = vadd.f32 %v1911, %v2033
      %2035 = vmatmul.bf16.gmra.mxu0 %v1985
      %v2036 = vpop.f32.mrf.mxu0
      %v2037 = vadd.f32 %v1914, %v2036
      %v2038 = vpop.f32.mrf.mxu0
      %v2039 = vadd.f32 %v1916, %v2038
      %2040 = vmatmul.bf16.gmra.mxu0 %v1988
      %v2041 = vpop.f32.mrf.mxu0
      %v2042 = vadd.f32 %v1919, %v2041
      %v2043 = vpop.f32.mrf.mxu0
      %v2044 = vadd.f32 %v1921, %v2043
      %2045 = vmatmul.bf16.gmra.mxu0 %v1991
      %v2046 = vpop.f32.mrf.mxu0
      %v2047 = vadd.f32 %v1924, %v2046
      %v2048 = vpop.f32.mrf.mxu0
      %v2049 = vadd.f32 %v1926, %v2048
      %2050 = vmatmul.bf16.gmra.mxu0 %v1994
      %v2051 = vpop.f32.mrf.mxu0
      %v2052 = vadd.f32 %v1929, %v2051
      %v2053 = vpop.f32.mrf.mxu0
      %v2054 = vadd.f32 %v1931, %v2053
      %2055 = vmatmul.bf16.gmra.mxu0 %v1997
      %v2056 = vpop.f32.mrf.mxu0
      %v2057 = vadd.f32 %v1934, %v2056
      %v2058 = vpop.f32.mrf.mxu0
      %v2059 = vadd.f32 %v1936, %v2058
      %2060 = vmatmul.bf16.gmra.mxu0 %v2000
      %v2061 = vpop.f32.mrf.mxu0
      %v2062 = vadd.f32 %v1939, %v2061
      %v2063 = vpop.f32.mrf.mxu0
      %v2064 = vadd.f32 %v1941, %v2063
      %2065 = vmatmul.bf16.gmra.mxu0 %v2003
      %v2066 = vpop.f32.mrf.mxu0
      %v2067 = vadd.f32 %v1944, %v2066
      %v2068 = vpop.f32.mrf.mxu0
      %v2069 = vadd.f32 %v1946, %v2068
      %2070 = vmatmul.bf16.gmra.mxu0 %v2006
      %v2071 = vpop.f32.mrf.mxu0
      %v2072 = vadd.f32 %v1949, %v2071
      %v2073 = vpop.f32.mrf.mxu0
      %v2074 = vadd.f32 %v1951, %v2073
      %2075 = vmatmul.bf16.gmra.mxu0 %v2009
      %v2076 = vpop.f32.mrf.mxu0
      %v2077 = vadd.f32 %v1954, %v2076
      %v2078 = vpop.f32.mrf.mxu0
      %v2079 = vadd.f32 %v1956, %v2078
      %2080 = vmatmul.bf16.gmra.mxu0 %v2012
      %v2081 = vpop.f32.mrf.mxu0
      %v2082 = vadd.f32 %v1959, %v2081
      %v2083 = vpop.f32.mrf.mxu0
      %2084 = vdwg.mxu0
      %v2085 = vld [vmem:[#allocation2 + $0x10] sm:$0xc]
      %v2086 = vld [vmem:[#allocation2 + $0x14] sm:$0xf]
      %v2087 = vld [vmem:[#allocation2 + $0x18] sm:$0xf]
      %v2088 = vld [vmem:[#allocation2 + $0x1c] sm:$0xf]
      %v2089 = vld [vmem:[#allocation2 + $0x20] sm:$0xf]
      %v2090 = vld [vmem:[#allocation2 + $0x24] sm:$0xf]
      %v2091 = vld [vmem:[#allocation2 + $0x28] sm:$0xf]
      %v2092 = vld [vmem:[#allocation2 + $0x2c] sm:$0xf]
      %v2093 = vld [vmem:[#allocation2 + $0x30] sm:$0xf]
      %v2094 = vld [vmem:[#allocation2 + $0x34] sm:$0xf]
      %v2095 = vld [vmem:[#allocation2 + $0x38] sm:$0xf]
      %v2096 = vld [vmem:[#allocation2 + $0x3c] sm:$0xf]
      %v2097 = vld [vmem:[#allocation2 + $0x40] sm:$0xf]
      %v2098 = vld [vmem:[#allocation2 + $0x44] sm:$0xf]
      %v2099 = vld [vmem:[#allocation2 + $0x48] sm:$0xf]
      %v2100 = vld [vmem:[#allocation2 + $0x4c] sm:$0xf]
      %v2101 = vld [vmem:[#allocation2 + $0x50] sm:$0xf]
      %v2102 = vld [vmem:[#allocation2 + $0x54] sm:$0xf]
      %v2103 = vld [vmem:[#allocation2 + $0x58] sm:$0xf]
      %v2104 = vld [vmem:[#allocation2 + $0x5c] sm:$0xf]
      %v2105 = vld [vmem:[#allocation2 + $0x60] sm:$0xf]
      %v2106 = vld [vmem:[#allocation2 + $0x64] sm:$0xf]
      %v2107 = vld [vmem:[#allocation2 + $0x68] sm:$0xf]
      %s2108 = scalar_lea.vmem %s5, 16
      %v2109 = vld [vmem:[%s2108] sm:$0xf]
      %v2110 = vld [vmem:[%s2108 + $0x4] sm:$0x3]
      %v2134 = vunpack.c.l.b16 %v2085
      %v2135 = vunpack.c.l.b16 %v2086
      %v2136 = vunpack.c.l.b16 %v2087
      %v2137 = vunpack.c.l.b16 %v2088
      %v2138 = vunpack.c.l.b16 %v2089
      %v2139 = vunpack.c.l.b16 %v2090
      %v2140 = vunpack.c.l.b16 %v2091
      %v2141 = vunpack.c.l.b16 %v2092
      %v2142 = vunpack.c.l.b16 %v2093
      %v2143 = vunpack.c.l.b16 %v2094
      %v2144 = vunpack.c.l.b16 %v2095
      %v2145 = vunpack.c.l.b16 %v2096
      %v2146 = vunpack.c.l.b16 %v2097
      %v2147 = vunpack.c.l.b16 %v2098
      %v2148 = vunpack.c.l.b16 %v2099
      %v2149 = vunpack.c.l.b16 %v2100
      %v2150 = vunpack.c.l.b16 %v2101
      %v2151 = vunpack.c.l.b16 %v2102
      %v2152 = vunpack.c.l.b16 %v2103
      %v2153 = vunpack.c.l.b16 %v2104
      %v2154 = vunpack.c.l.b16 %v2105
      %v2155 = vunpack.c.l.b16 %v2106
      %v2156 = vunpack.c.l.b16 %v2107
      %v2157 = vpack.c.b16 %v2135, %v2134
      %v2158 = vpack.c.b16 %v2137, %v2136
      %v2159 = vpack.c.b16 %v2139, %v2138
      %v2160 = vpack.c.b16 %v2141, %v2140
      %v2161 = vpack.c.b16 %v2143, %v2142
      %v2162 = vpack.c.b16 %v2145, %v2144
      %v2163 = vpack.c.b16 %v2147, %v2146
      %v2164 = vpack.c.b16 %v2149, %v2148
      %v2165 = vpack.c.b16 %v2151, %v2150
      %v2166 = vpack.c.b16 %v2153, %v2152
      %v2167 = vpack.c.b16 %v2155, %v2154
      %v2168 = vpack.c.b16 %v2156, %v2156
      %vm2169 = vcmask 1045504
      %v2170 = vrot.slane %v2157, 2
      %v2171 = vrot.slane %v2158, 2
      %v2172 = vsel %vm2169, %v2170, %v2171
      %v2173 = vrot.slane %v2159, 2
      %v2174 = vsel %vm2169, %v2171, %v2173
      %v2175 = vrot.slane %v2160, 2
      %v2176 = vsel %vm2169, %v2173, %v2175
      %v2177 = vrot.slane %v2161, 2
      %v2178 = vsel %vm2169, %v2175, %v2177
      %v2179 = vrot.slane %v2162, 2
      %v2180 = vsel %vm2169, %v2177, %v2179
      %v2181 = vrot.slane %v2163, 2
      %v2182 = vsel %vm2169, %v2179, %v2181
      %v2183 = vrot.slane %v2164, 2
      %v2184 = vsel %vm2169, %v2181, %v2183
      %v2185 = vrot.slane %v2165, 2
      %v2186 = vsel %vm2169, %v2183, %v2185
      %v2187 = vrot.slane %v2166, 2
      %v2188 = vsel %vm2169, %v2185, %v2187
      %v2189 = vrot.slane %v2167, 2
      %v2190 = vsel %vm2169, %v2187, %v2189
      %v2191 = vrot.slane %v2168, 2
      %v2192 = vsel %vm2169, %v2189, %v2191
      %v2195 = vunpack.c.l.b16 %v2109
      %v2196 = vunpack.c.l.b16 %v2110
      %v2197 = vpack.c.b16 %v2196, %v2195
      %v2199 = vsel %vm1853, %v2172, 0
      %v2202 = vsel %vm1853, %v2174, 0
      %v2205 = vsel %vm1853, %v2176, 0
      %v2208 = vsel %vm1853, %v2178, 0
      %v2211 = vsel %vm1853, %v2180, 0
      %v2214 = vsel %vm1853, %v2182, 0
      %v2217 = vsel %vm1853, %v2184, 0
      %v2220 = vsel %vm1853, %v2186, 0
      %v2223 = vsel %vm1853, %v2188, 0
      %v2226 = vsel %vm1853, %v2190, 0
      %v2229 = vsel %vm1853, %v2192, 0
      %v2232 = vsel %vm1853, %v2191, 0
      %v2235 = vsel %vm1890, %v2197, 0
      %2237 = vmatpush.bf16.msra.mxu0 0
      %2238 = vmatpush.bf16.msra.mxu0 0
      %2239 = vmatpush.bf16.msra.mxu0 0
      %2240 = vmatpush.bf16.msra.mxu0 0
      %2241 = vmatpush.bf16.msra.mxu0 0
      %2242 = vmatpush.bf16.msra.mxu0 0
      %2243 = vmatpush.bf16.msra.mxu0 0
      %2244 = vmatpush.bf16.msra.mxu0 %v2235
      %2245 = vmatmul.bf16.gmra.mxu0 %v2199
      %v2246 = vpop.f32.mrf.mxu0
      %v2247 = vadd.f32 0.0, %v2246
      %v2248 = vpop.f32.mrf.mxu0
      %v2249 = vadd.f32 0.0, %v2248
      %2250 = vmatmul.bf16.gmra.mxu0 %v2202
      %v2251 = vpop.f32.mrf.mxu0
      %v2252 = vadd.f32 0.0, %v2251
      %v2253 = vpop.f32.mrf.mxu0
      %v2254 = vadd.f32 0.0, %v2253
      %2255 = vmatmul.bf16.gmra.mxu0 %v2205
      %v2256 = vpop.f32.mrf.mxu0
      %v2257 = vadd.f32 0.0, %v2256
      %v2258 = vpop.f32.mrf.mxu0
      %v2259 = vadd.f32 0.0, %v2258
      %2260 = vmatmul.bf16.gmra.mxu0 %v2208
      %v2261 = vpop.f32.mrf.mxu0
      %v2262 = vadd.f32 0.0, %v2261
      %v2263 = vpop.f32.mrf.mxu0
      %v2264 = vadd.f32 0.0, %v2263
      %2265 = vmatmul.bf16.gmra.mxu0 %v2211
      %v2266 = vpop.f32.mrf.mxu0
      %v2267 = vadd.f32 0.0, %v2266
      %v2268 = vpop.f32.mrf.mxu0
      %v2269 = vadd.f32 0.0, %v2268
      %2270 = vmatmul.bf16.gmra.mxu0 %v2214
      %v2271 = vpop.f32.mrf.mxu0
      %v2272 = vadd.f32 0.0, %v2271
      %v2273 = vpop.f32.mrf.mxu0
      %v2274 = vadd.f32 0.0, %v2273
      %2275 = vmatmul.bf16.gmra.mxu0 %v2217
      %v2276 = vpop.f32.mrf.mxu0
      %v2277 = vadd.f32 0.0, %v2276
      %v2278 = vpop.f32.mrf.mxu0
      %v2279 = vadd.f32 0.0, %v2278
      %2280 = vmatmul.bf16.gmra.mxu0 %v2220
      %v2281 = vpop.f32.mrf.mxu0
      %v2282 = vadd.f32 0.0, %v2281
      %v2283 = vpop.f32.mrf.mxu0
      %v2284 = vadd.f32 0.0, %v2283
      %2285 = vmatmul.bf16.gmra.mxu0 %v2223
      %v2286 = vpop.f32.mrf.mxu0
      %v2287 = vadd.f32 0.0, %v2286
      %v2288 = vpop.f32.mrf.mxu0
      %v2289 = vadd.f32 0.0, %v2288
      %2290 = vmatmul.bf16.gmra.mxu0 %v2226
      %v2291 = vpop.f32.mrf.mxu0
      %v2292 = vadd.f32 0.0, %v2291
      %v2293 = vpop.f32.mrf.mxu0
      %v2294 = vadd.f32 0.0, %v2293
      %2295 = vmatmul.bf16.gmra.mxu0 %v2229
      %v2296 = vpop.f32.mrf.mxu0
      %v2297 = vadd.f32 0.0, %v2296
      %v2298 = vpop.f32.mrf.mxu0
      %v2299 = vadd.f32 0.0, %v2298
      %2300 = vmatmul.bf16.gmra.mxu0 %v2232
      %v2301 = vpop.f32.mrf.mxu0
      %v2302 = vadd.f32 0.0, %v2301
      %v2303 = vpop.f32.mrf.mxu0
      %2304 = vdwg.mxu0
      %v2305 = vadd.f32 %v2027, %v2247
      %v2306 = vadd.f32 %v2029, %v2249
      %v2307 = vadd.f32 %v2032, %v2252
      %v2308 = vadd.f32 %v2034, %v2254
      %v2309 = vadd.f32 %v2037, %v2257
      %v2310 = vadd.f32 %v2039, %v2259
      %v2311 = vadd.f32 %v2042, %v2262
      %v2312 = vadd.f32 %v2044, %v2264
      %v2313 = vadd.f32 %v2047, %v2267
      %v2314 = vadd.f32 %v2049, %v2269
      %v2315 = vadd.f32 %v2052, %v2272
      %v2316 = vadd.f32 %v2054, %v2274
      %v2317 = vadd.f32 %v2057, %v2277
      %v2318 = vadd.f32 %v2059, %v2279
      %v2319 = vadd.f32 %v2062, %v2282
      %v2320 = vadd.f32 %v2064, %v2284
      %v2321 = vadd.f32 %v2067, %v2287
      %v2322 = vadd.f32 %v2069, %v2289
      %v2323 = vadd.f32 %v2072, %v2292
      %v2324 = vadd.f32 %v2074, %v2294
      %v2325 = vadd.f32 %v2077, %v2297
      %v2326 = vadd.f32 %v2079, %v2299
      %v2327 = vadd.f32 %v2082, %v2302
      %v2328 = vld [vmem:[%s6] sm:$0x1]
      %v2330 = vperm.slane %v2328, 0
      %v2332 = vadd.f32 %v2305, %v2330
      %v2333 = vadd.f32 %v2306, %v2330
      %v2334 = vadd.f32 %v2307, %v2330
      %v2335 = vadd.f32 %v2308, %v2330
      %v2336 = vadd.f32 %v2309, %v2330
      %v2337 = vadd.f32 %v2310, %v2330
      %v2338 = vadd.f32 %v2311, %v2330
      %v2339 = vadd.f32 %v2312, %v2330
      %v2340 = vadd.f32 %v2313, %v2330
      %v2341 = vadd.f32 %v2314, %v2330
      %v2342 = vadd.f32 %v2315, %v2330
      %v2343 = vadd.f32 %v2316, %v2330
      %v2344 = vadd.f32 %v2317, %v2330
      %v2345 = vadd.f32 %v2318, %v2330
      %v2346 = vadd.f32 %v2319, %v2330
      %v2347 = vadd.f32 %v2320, %v2330
      %v2348 = vadd.f32 %v2321, %v2330
      %v2349 = vadd.f32 %v2322, %v2330
      %v2350 = vadd.f32 %v2323, %v2330
      %v2351 = vadd.f32 %v2324, %v2330
      %v2352 = vadd.f32 %v2325, %v2330
      %v2353 = vadd.f32 %v2326, %v2330
      %v2354 = vadd.f32 %v2327, %v2330
      %v2355 = vmax.f32 %v2332, 0.0
      %v2356 = vmax.f32 %v2333, 0.0
      %v2357 = vmax.f32 %v2334, 0.0
      %v2358 = vmax.f32 %v2335, 0.0
      %v2359 = vmax.f32 %v2336, 0.0
      %v2360 = vmax.f32 %v2337, 0.0
      %v2361 = vmax.f32 %v2338, 0.0
      %v2362 = vmax.f32 %v2339, 0.0
      %v2363 = vmax.f32 %v2340, 0.0
      %v2364 = vmax.f32 %v2341, 0.0
      %v2365 = vmax.f32 %v2342, 0.0
      %v2366 = vmax.f32 %v2343, 0.0
      %v2367 = vmax.f32 %v2344, 0.0
      %v2368 = vmax.f32 %v2345, 0.0
      %v2369 = vmax.f32 %v2346, 0.0
      %v2370 = vmax.f32 %v2347, 0.0
      %v2371 = vmax.f32 %v2348, 0.0
      %v2372 = vmax.f32 %v2349, 0.0
      %v2373 = vmax.f32 %v2350, 0.0
      %v2374 = vmax.f32 %v2351, 0.0
      %v2375 = vmax.f32 %v2352, 0.0
      %v2376 = vmax.f32 %v2353, 0.0
      %v2377 = vmax.f32 %v2354, 0.0
      %v2378 = vlaneseq
      %v2379 = vshrl.u32 %v2378, 7
      %v2380 = vadd.s32 %v2379, 8
      %v2381 = vadd.s32 %v2379, 16
      %v2382 = vadd.s32 %v2379, 24
      %v2383 = vadd.s32 %v2379, 32
      %v2384 = vadd.s32 %v2379, 40
      %v2385 = vadd.s32 %v2379, 48
      %v2386 = vadd.s32 %v2379, 56
      %v2387 = vadd.s32 %v2379, 64
      %v2388 = vadd.s32 %v2379, 72
      %v2389 = vadd.s32 %v2379, 80
      %v2390 = vadd.s32 %v2379, 88
      %v2391 = vadd.s32 %v2379, 96
      %v2392 = vadd.s32 %v2379, 104
      %v2393 = vadd.s32 %v2379, 112
      %v2394 = vadd.s32 %v2379, 120
      %v2395 = vadd.s32 %v2379, 128
      %v2396 = vadd.s32 %v2379, 136
      %v2397 = vadd.s32 %v2379, 144
      %v2398 = vadd.s32 %v2379, 152
      %v2399 = vadd.s32 %v2379, 160
      %v2400 = vadd.s32 %v2379, 168
      %v2401 = vadd.s32 %v2379, 176
      %vm2402 = vcmp.lt.s32.totalorder %v2379, 0
      %v2403 = vsub.s32 0, %v2379
      %v2404 = vsel %vm2402, %v2403, %v2379
      %v2405 = vand.u32 %v2404, 65535
      %v2406 = vshrl.u32 %v2404, 16
      %v2408 = vmul.u32 %v2405, 14564
      %v2409 = vmul.u32 %v2405, 58254
      %v2410 = vmul.u32 %v2406, 14564
      %v2411 = vmul.u32 %v2406, 58254
      %v2412 = vshll.u32 %v2409, 16
      %v2413 = vshrl.u32 %v2409, 16
      %v2414 = vshll.u32 %v2410, 16
      %v2415 = vshrl.u32 %v2410, 16
      %vm2416 = vc.u32 %v2408, %v2412
      %v2417 = vsel %vm2416, 1, 0
      %v2418 = vadd.s32 %v2408, %v2412
      %v2419 = vadd.s32 %v2411, %v2417
      %vm2420 = vc.u32 %v2418, %v2414
      %v2421 = vsel %vm2420, 1, 0
      %v2422 = vadd.s32 %v2418, %v2414
      %v2423 = vadd.s32 %v2419, %v2421
      %v2424 = vadd.s32 %v2423, %v2413
      %v2425 = vadd.s32 %v2424, %v2415
      %v2426 = vshrl.u32 %v2425, 4
      %v2427 = vmul.u32 %v2426, 18
      %v2428 = vsub.s32 %v2404, %v2427
      %v2429 = vsub.s32 0, %v2428
      %v2430 = vsel %vm2402, %v2429, %v2428
      %vm2431 = vcmp.lt.s32.totalorder %v2380, 0
      %v2432 = vsub.s32 0, %v2380
      %v2433 = vsel %vm2431, %v2432, %v2380
      %v2434 = vand.u32 %v2433, 65535
      %v2435 = vshrl.u32 %v2433, 16
      %v2437 = vmul.u32 %v2434, 14564
      %v2438 = vmul.u32 %v2434, 58254
      %v2439 = vmul.u32 %v2435, 14564
      %v2440 = vmul.u32 %v2435, 58254
      %v2441 = vshll.u32 %v2438, 16
      %v2442 = vshrl.u32 %v2438, 16
      %v2443 = vshll.u32 %v2439, 16
      %v2444 = vshrl.u32 %v2439, 16
      %vm2445 = vc.u32 %v2437, %v2441
      %v2446 = vsel %vm2445, 1, 0
      %v2447 = vadd.s32 %v2437, %v2441
      %v2448 = vadd.s32 %v2440, %v2446
      %vm2449 = vc.u32 %v2447, %v2443
      %v2450 = vsel %vm2449, 1, 0
      %v2451 = vadd.s32 %v2447, %v2443
      %v2452 = vadd.s32 %v2448, %v2450
      %v2453 = vadd.s32 %v2452, %v2442
      %v2454 = vadd.s32 %v2453, %v2444
      %v2455 = vshrl.u32 %v2454, 4
      %v2456 = vmul.u32 %v2455, 18
      %v2457 = vsub.s32 %v2433, %v2456
      %v2458 = vsub.s32 0, %v2457
      %v2459 = vsel %vm2431, %v2458, %v2457
      %vm2460 = vcmp.lt.s32.totalorder %v2381, 0
      %v2461 = vsub.s32 0, %v2381
      %v2462 = vsel %vm2460, %v2461, %v2381
      %v2463 = vand.u32 %v2462, 65535
      %v2464 = vshrl.u32 %v2462, 16
      %v2466 = vmul.u32 %v2463, 14564
      %v2467 = vmul.u32 %v2463, 58254
      %v2468 = vmul.u32 %v2464, 14564
      %v2469 = vmul.u32 %v2464, 58254
      %v2470 = vshll.u32 %v2467, 16
      %v2471 = vshrl.u32 %v2467, 16
      %v2472 = vshll.u32 %v2468, 16
      %v2473 = vshrl.u32 %v2468, 16
      %vm2474 = vc.u32 %v2466, %v2470
      %v2475 = vsel %vm2474, 1, 0
      %v2476 = vadd.s32 %v2466, %v2470
      %v2477 = vadd.s32 %v2469, %v2475
      %vm2478 = vc.u32 %v2476, %v2472
      %v2479 = vsel %vm2478, 1, 0
      %v2480 = vadd.s32 %v2476, %v2472
      %v2481 = vadd.s32 %v2477, %v2479
      %v2482 = vadd.s32 %v2481, %v2471
      %v2483 = vadd.s32 %v2482, %v2473
      %v2484 = vshrl.u32 %v2483, 4
      %v2485 = vmul.u32 %v2484, 18
      %v2486 = vsub.s32 %v2462, %v2485
      %v2487 = vsub.s32 0, %v2486
      %v2488 = vsel %vm2460, %v2487, %v2486
      %vm2489 = vcmp.lt.s32.totalorder %v2382, 0
      %v2490 = vsub.s32 0, %v2382
      %v2491 = vsel %vm2489, %v2490, %v2382
      %v2492 = vand.u32 %v2491, 65535
      %v2493 = vshrl.u32 %v2491, 16
      %v2495 = vmul.u32 %v2492, 14564
      %v2496 = vmul.u32 %v2492, 58254
      %v2497 = vmul.u32 %v2493, 14564
      %v2498 = vmul.u32 %v2493, 58254
      %v2499 = vshll.u32 %v2496, 16
      %v2500 = vshrl.u32 %v2496, 16
      %v2501 = vshll.u32 %v2497, 16
      %v2502 = vshrl.u32 %v2497, 16
      %vm2503 = vc.u32 %v2495, %v2499
      %v2504 = vsel %vm2503, 1, 0
      %v2505 = vadd.s32 %v2495, %v2499
      %v2506 = vadd.s32 %v2498, %v2504
      %vm2507 = vc.u32 %v2505, %v2501
      %v2508 = vsel %vm2507, 1, 0
      %v2509 = vadd.s32 %v2505, %v2501
      %v2510 = vadd.s32 %v2506, %v2508
      %v2511 = vadd.s32 %v2510, %v2500
      %v2512 = vadd.s32 %v2511, %v2502
      %v2513 = vshrl.u32 %v2512, 4
      %v2514 = vmul.u32 %v2513, 18
      %v2515 = vsub.s32 %v2491, %v2514
      %v2516 = vsub.s32 0, %v2515
      %v2517 = vsel %vm2489, %v2516, %v2515
      %vm2518 = vcmp.lt.s32.totalorder %v2383, 0
      %v2519 = vsub.s32 0, %v2383
      %v2520 = vsel %vm2518, %v2519, %v2383
      %v2521 = vand.u32 %v2520, 65535
      %v2522 = vshrl.u32 %v2520, 16
      %v2524 = vmul.u32 %v2521, 14564
      %v2525 = vmul.u32 %v2521, 58254
      %v2526 = vmul.u32 %v2522, 14564
      %v2527 = vmul.u32 %v2522, 58254
      %v2528 = vshll.u32 %v2525, 16
      %v2529 = vshrl.u32 %v2525, 16
      %v2530 = vshll.u32 %v2526, 16
      %v2531 = vshrl.u32 %v2526, 16
      %vm2532 = vc.u32 %v2524, %v2528
      %v2533 = vsel %vm2532, 1, 0
      %v2534 = vadd.s32 %v2524, %v2528
      %v2535 = vadd.s32 %v2527, %v2533
      %vm2536 = vc.u32 %v2534, %v2530
      %v2537 = vsel %vm2536, 1, 0
      %v2538 = vadd.s32 %v2534, %v2530
      %v2539 = vadd.s32 %v2535, %v2537
      %v2540 = vadd.s32 %v2539, %v2529
      %v2541 = vadd.s32 %v2540, %v2531
      %v2542 = vshrl.u32 %v2541, 4
      %v2543 = vmul.u32 %v2542, 18
      %v2544 = vsub.s32 %v2520, %v2543
      %v2545 = vsub.s32 0, %v2544
      %v2546 = vsel %vm2518, %v2545, %v2544
      %vm2547 = vcmp.lt.s32.totalorder %v2384, 0
      %v2548 = vsub.s32 0, %v2384
      %v2549 = vsel %vm2547, %v2548, %v2384
      %v2550 = vand.u32 %v2549, 65535
      %v2551 = vshrl.u32 %v2549, 16
      %v2553 = vmul.u32 %v2550, 14564
      %v2554 = vmul.u32 %v2550, 58254
      %v2555 = vmul.u32 %v2551, 14564
      %v2556 = vmul.u32 %v2551, 58254
      %v2557 = vshll.u32 %v2554, 16
      %v2558 = vshrl.u32 %v2554, 16
      %v2559 = vshll.u32 %v2555, 16
      %v2560 = vshrl.u32 %v2555, 16
      %vm2561 = vc.u32 %v2553, %v2557
      %v2562 = vsel %vm2561, 1, 0
      %v2563 = vadd.s32 %v2553, %v2557
      %v2564 = vadd.s32 %v2556, %v2562
      %vm2565 = vc.u32 %v2563, %v2559
      %v2566 = vsel %vm2565, 1, 0
      %v2567 = vadd.s32 %v2563, %v2559
      %v2568 = vadd.s32 %v2564, %v2566
      %v2569 = vadd.s32 %v2568, %v2558
      %v2570 = vadd.s32 %v2569, %v2560
      %v2571 = vshrl.u32 %v2570, 4
      %v2572 = vmul.u32 %v2571, 18
      %v2573 = vsub.s32 %v2549, %v2572
      %v2574 = vsub.s32 0, %v2573
      %v2575 = vsel %vm2547, %v2574, %v2573
      %vm2576 = vcmp.lt.s32.totalorder %v2385, 0
      %v2577 = vsub.s32 0, %v2385
      %v2578 = vsel %vm2576, %v2577, %v2385
      %v2579 = vand.u32 %v2578, 65535
      %v2580 = vshrl.u32 %v2578, 16
      %v2582 = vmul.u32 %v2579, 14564
      %v2583 = vmul.u32 %v2579, 58254
      %v2584 = vmul.u32 %v2580, 14564
      %v2585 = vmul.u32 %v2580, 58254
      %v2586 = vshll.u32 %v2583, 16
      %v2587 = vshrl.u32 %v2583, 16
      %v2588 = vshll.u32 %v2584, 16
      %v2589 = vshrl.u32 %v2584, 16
      %vm2590 = vc.u32 %v2582, %v2586
      %v2591 = vsel %vm2590, 1, 0
      %v2592 = vadd.s32 %v2582, %v2586
      %v2593 = vadd.s32 %v2585, %v2591
      %vm2594 = vc.u32 %v2592, %v2588
      %v2595 = vsel %vm2594, 1, 0
      %v2596 = vadd.s32 %v2592, %v2588
      %v2597 = vadd.s32 %v2593, %v2595
      %v2598 = vadd.s32 %v2597, %v2587
      %v2599 = vadd.s32 %v2598, %v2589
      %v2600 = vshrl.u32 %v2599, 4
      %v2601 = vmul.u32 %v2600, 18
      %v2602 = vsub.s32 %v2578, %v2601
      %v2603 = vsub.s32 0, %v2602
      %v2604 = vsel %vm2576, %v2603, %v2602
      %vm2605 = vcmp.lt.s32.totalorder %v2386, 0
      %v2606 = vsub.s32 0, %v2386
      %v2607 = vsel %vm2605, %v2606, %v2386
      %v2608 = vand.u32 %v2607, 65535
      %v2609 = vshrl.u32 %v2607, 16
      %v2611 = vmul.u32 %v2608, 14564
      %v2612 = vmul.u32 %v2608, 58254
      %v2613 = vmul.u32 %v2609, 14564
      %v2614 = vmul.u32 %v2609, 58254
      %v2615 = vshll.u32 %v2612, 16
      %v2616 = vshrl.u32 %v2612, 16
      %v2617 = vshll.u32 %v2613, 16
      %v2618 = vshrl.u32 %v2613, 16
      %vm2619 = vc.u32 %v2611, %v2615
      %v2620 = vsel %vm2619, 1, 0
      %v2621 = vadd.s32 %v2611, %v2615
      %v2622 = vadd.s32 %v2614, %v2620
      %vm2623 = vc.u32 %v2621, %v2617
      %v2624 = vsel %vm2623, 1, 0
      %v2625 = vadd.s32 %v2621, %v2617
      %v2626 = vadd.s32 %v2622, %v2624
      %v2627 = vadd.s32 %v2626, %v2616
      %v2628 = vadd.s32 %v2627, %v2618
      %v2629 = vshrl.u32 %v2628, 4
      %v2630 = vmul.u32 %v2629, 18
      %v2631 = vsub.s32 %v2607, %v2630
      %v2632 = vsub.s32 0, %v2631
      %v2633 = vsel %vm2605, %v2632, %v2631
      %vm2634 = vcmp.lt.s32.totalorder %v2387, 0
      %v2635 = vsub.s32 0, %v2387
      %v2636 = vsel %vm2634, %v2635, %v2387
      %v2637 = vand.u32 %v2636, 65535
      %v2638 = vshrl.u32 %v2636, 16
      %v2640 = vmul.u32 %v2637, 14564
      %v2641 = vmul.u32 %v2637, 58254
      %v2642 = vmul.u32 %v2638, 14564
      %v2643 = vmul.u32 %v2638, 58254
      %v2644 = vshll.u32 %v2641, 16
      %v2645 = vshrl.u32 %v2641, 16
      %v2646 = vshll.u32 %v2642, 16
      %v2647 = vshrl.u32 %v2642, 16
      %vm2648 = vc.u32 %v2640, %v2644
      %v2649 = vsel %vm2648, 1, 0
      %v2650 = vadd.s32 %v2640, %v2644
      %v2651 = vadd.s32 %v2643, %v2649
      %vm2652 = vc.u32 %v2650, %v2646
      %v2653 = vsel %vm2652, 1, 0
      %v2654 = vadd.s32 %v2650, %v2646
      %v2655 = vadd.s32 %v2651, %v2653
      %v2656 = vadd.s32 %v2655, %v2645
      %v2657 = vadd.s32 %v2656, %v2647
      %v2658 = vshrl.u32 %v2657, 4
      %v2659 = vmul.u32 %v2658, 18
      %v2660 = vsub.s32 %v2636, %v2659
      %v2661 = vsub.s32 0, %v2660
      %v2662 = vsel %vm2634, %v2661, %v2660
      %vm2663 = vcmp.lt.s32.totalorder %v2388, 0
      %v2664 = vsub.s32 0, %v2388
      %v2665 = vsel %vm2663, %v2664, %v2388
      %v2666 = vand.u32 %v2665, 65535
      %v2667 = vshrl.u32 %v2665, 16
      %v2669 = vmul.u32 %v2666, 14564
      %v2670 = vmul.u32 %v2666, 58254
      %v2671 = vmul.u32 %v2667, 14564
      %v2672 = vmul.u32 %v2667, 58254
      %v2673 = vshll.u32 %v2670, 16
      %v2674 = vshrl.u32 %v2670, 16
      %v2675 = vshll.u32 %v2671, 16
      %v2676 = vshrl.u32 %v2671, 16
      %vm2677 = vc.u32 %v2669, %v2673
      %v2678 = vsel %vm2677, 1, 0
      %v2679 = vadd.s32 %v2669, %v2673
      %v2680 = vadd.s32 %v2672, %v2678
      %vm2681 = vc.u32 %v2679, %v2675
      %v2682 = vsel %vm2681, 1, 0
      %v2683 = vadd.s32 %v2679, %v2675
      %v2684 = vadd.s32 %v2680, %v2682
      %v2685 = vadd.s32 %v2684, %v2674
      %v2686 = vadd.s32 %v2685, %v2676
      %v2687 = vshrl.u32 %v2686, 4
      %v2688 = vmul.u32 %v2687, 18
      %v2689 = vsub.s32 %v2665, %v2688
      %v2690 = vsub.s32 0, %v2689
      %v2691 = vsel %vm2663, %v2690, %v2689
      %vm2692 = vcmp.lt.s32.totalorder %v2389, 0
      %v2693 = vsub.s32 0, %v2389
      %v2694 = vsel %vm2692, %v2693, %v2389
      %v2695 = vand.u32 %v2694, 65535
      %v2696 = vshrl.u32 %v2694, 16
      %v2698 = vmul.u32 %v2695, 14564
      %v2699 = vmul.u32 %v2695, 58254
      %v2700 = vmul.u32 %v2696, 14564
      %v2701 = vmul.u32 %v2696, 58254
      %v2702 = vshll.u32 %v2699, 16
      %v2703 = vshrl.u32 %v2699, 16
      %v2704 = vshll.u32 %v2700, 16
      %v2705 = vshrl.u32 %v2700, 16
      %vm2706 = vc.u32 %v2698, %v2702
      %v2707 = vsel %vm2706, 1, 0
      %v2708 = vadd.s32 %v2698, %v2702
      %v2709 = vadd.s32 %v2701, %v2707
      %vm2710 = vc.u32 %v2708, %v2704
      %v2711 = vsel %vm2710, 1, 0
      %v2712 = vadd.s32 %v2708, %v2704
      %v2713 = vadd.s32 %v2709, %v2711
      %v2714 = vadd.s32 %v2713, %v2703
      %v2715 = vadd.s32 %v2714, %v2705
      %v2716 = vshrl.u32 %v2715, 4
      %v2717 = vmul.u32 %v2716, 18
      %v2718 = vsub.s32 %v2694, %v2717
      %v2719 = vsub.s32 0, %v2718
      %v2720 = vsel %vm2692, %v2719, %v2718
      %vm2721 = vcmp.lt.s32.totalorder %v2390, 0
      %v2722 = vsub.s32 0, %v2390
      %v2723 = vsel %vm2721, %v2722, %v2390
      %v2724 = vand.u32 %v2723, 65535
      %v2725 = vshrl.u32 %v2723, 16
      %v2727 = vmul.u32 %v2724, 14564
      %v2728 = vmul.u32 %v2724, 58254
      %v2729 = vmul.u32 %v2725, 14564
      %v2730 = vmul.u32 %v2725, 58254
      %v2731 = vshll.u32 %v2728, 16
      %v2732 = vshrl.u32 %v2728, 16
      %v2733 = vshll.u32 %v2729, 16
      %v2734 = vshrl.u32 %v2729, 16
      %vm2735 = vc.u32 %v2727, %v2731
      %v2736 = vsel %vm2735, 1, 0
      %v2737 = vadd.s32 %v2727, %v2731
      %v2738 = vadd.s32 %v2730, %v2736
      %vm2739 = vc.u32 %v2737, %v2733
      %v2740 = vsel %vm2739, 1, 0
      %v2741 = vadd.s32 %v2737, %v2733
      %v2742 = vadd.s32 %v2738, %v2740
      %v2743 = vadd.s32 %v2742, %v2732
      %v2744 = vadd.s32 %v2743, %v2734
      %v2745 = vshrl.u32 %v2744, 4
      %v2746 = vmul.u32 %v2745, 18
      %v2747 = vsub.s32 %v2723, %v2746
      %v2748 = vsub.s32 0, %v2747
      %v2749 = vsel %vm2721, %v2748, %v2747
      %vm2750 = vcmp.lt.s32.totalorder %v2391, 0
      %v2751 = vsub.s32 0, %v2391
      %v2752 = vsel %vm2750, %v2751, %v2391
      %v2753 = vand.u32 %v2752, 65535
      %v2754 = vshrl.u32 %v2752, 16
      %v2756 = vmul.u32 %v2753, 14564
      %v2757 = vmul.u32 %v2753, 58254
      %v2758 = vmul.u32 %v2754, 14564
      %v2759 = vmul.u32 %v2754, 58254
      %v2760 = vshll.u32 %v2757, 16
      %v2761 = vshrl.u32 %v2757, 16
      %v2762 = vshll.u32 %v2758, 16
      %v2763 = vshrl.u32 %v2758, 16
      %vm2764 = vc.u32 %v2756, %v2760
      %v2765 = vsel %vm2764, 1, 0
      %v2766 = vadd.s32 %v2756, %v2760
      %v2767 = vadd.s32 %v2759, %v2765
      %vm2768 = vc.u32 %v2766, %v2762
      %v2769 = vsel %vm2768, 1, 0
      %v2770 = vadd.s32 %v2766, %v2762
      %v2771 = vadd.s32 %v2767, %v2769
      %v2772 = vadd.s32 %v2771, %v2761
      %v2773 = vadd.s32 %v2772, %v2763
      %v2774 = vshrl.u32 %v2773, 4
      %v2775 = vmul.u32 %v2774, 18
      %v2776 = vsub.s32 %v2752, %v2775
      %v2777 = vsub.s32 0, %v2776
      %v2778 = vsel %vm2750, %v2777, %v2776
      %vm2779 = vcmp.lt.s32.totalorder %v2392, 0
      %v2780 = vsub.s32 0, %v2392
      %v2781 = vsel %vm2779, %v2780, %v2392
      %v2782 = vand.u32 %v2781, 65535
      %v2783 = vshrl.u32 %v2781, 16
      %v2785 = vmul.u32 %v2782, 14564
      %v2786 = vmul.u32 %v2782, 58254
      %v2787 = vmul.u32 %v2783, 14564
      %v2788 = vmul.u32 %v2783, 58254
      %v2789 = vshll.u32 %v2786, 16
      %v2790 = vshrl.u32 %v2786, 16
      %v2791 = vshll.u32 %v2787, 16
      %v2792 = vshrl.u32 %v2787, 16
      %vm2793 = vc.u32 %v2785, %v2789
      %v2794 = vsel %vm2793, 1, 0
      %v2795 = vadd.s32 %v2785, %v2789
      %v2796 = vadd.s32 %v2788, %v2794
      %vm2797 = vc.u32 %v2795, %v2791
      %v2798 = vsel %vm2797, 1, 0
      %v2799 = vadd.s32 %v2795, %v2791
      %v2800 = vadd.s32 %v2796, %v2798
      %v2801 = vadd.s32 %v2800, %v2790
      %v2802 = vadd.s32 %v2801, %v2792
      %v2803 = vshrl.u32 %v2802, 4
      %v2804 = vmul.u32 %v2803, 18
      %v2805 = vsub.s32 %v2781, %v2804
      %v2806 = vsub.s32 0, %v2805
      %v2807 = vsel %vm2779, %v2806, %v2805
      %vm2808 = vcmp.lt.s32.totalorder %v2393, 0
      %v2809 = vsub.s32 0, %v2393
      %v2810 = vsel %vm2808, %v2809, %v2393
      %v2811 = vand.u32 %v2810, 65535
      %v2812 = vshrl.u32 %v2810, 16
      %v2814 = vmul.u32 %v2811, 14564
      %v2815 = vmul.u32 %v2811, 58254
      %v2816 = vmul.u32 %v2812, 14564
      %v2817 = vmul.u32 %v2812, 58254
      %v2818 = vshll.u32 %v2815, 16
      %v2819 = vshrl.u32 %v2815, 16
      %v2820 = vshll.u32 %v2816, 16
      %v2821 = vshrl.u32 %v2816, 16
      %vm2822 = vc.u32 %v2814, %v2818
      %v2823 = vsel %vm2822, 1, 0
      %v2824 = vadd.s32 %v2814, %v2818
      %v2825 = vadd.s32 %v2817, %v2823
      %vm2826 = vc.u32 %v2824, %v2820
      %v2827 = vsel %vm2826, 1, 0
      %v2828 = vadd.s32 %v2824, %v2820
      %v2829 = vadd.s32 %v2825, %v2827
      %v2830 = vadd.s32 %v2829, %v2819
      %v2831 = vadd.s32 %v2830, %v2821
      %v2832 = vshrl.u32 %v2831, 4
      %v2833 = vmul.u32 %v2832, 18
      %v2834 = vsub.s32 %v2810, %v2833
      %v2835 = vsub.s32 0, %v2834
      %v2836 = vsel %vm2808, %v2835, %v2834
      %vm2837 = vcmp.lt.s32.totalorder %v2394, 0
      %v2838 = vsub.s32 0, %v2394
      %v2839 = vsel %vm2837, %v2838, %v2394
      %v2840 = vand.u32 %v2839, 65535
      %v2841 = vshrl.u32 %v2839, 16
      %v2843 = vmul.u32 %v2840, 14564
      %v2844 = vmul.u32 %v2840, 58254
      %v2845 = vmul.u32 %v2841, 14564
      %v2846 = vmul.u32 %v2841, 58254
      %v2847 = vshll.u32 %v2844, 16
      %v2848 = vshrl.u32 %v2844, 16
      %v2849 = vshll.u32 %v2845, 16
      %v2850 = vshrl.u32 %v2845, 16
      %vm2851 = vc.u32 %v2843, %v2847
      %v2852 = vsel %vm2851, 1, 0
      %v2853 = vadd.s32 %v2843, %v2847
      %v2854 = vadd.s32 %v2846, %v2852
      %vm2855 = vc.u32 %v2853, %v2849
      %v2856 = vsel %vm2855, 1, 0
      %v2857 = vadd.s32 %v2853, %v2849
      %v2858 = vadd.s32 %v2854, %v2856
      %v2859 = vadd.s32 %v2858, %v2848
      %v2860 = vadd.s32 %v2859, %v2850
      %v2861 = vshrl.u32 %v2860, 4
      %v2862 = vmul.u32 %v2861, 18
      %v2863 = vsub.s32 %v2839, %v2862
      %v2864 = vsub.s32 0, %v2863
      %v2865 = vsel %vm2837, %v2864, %v2863
      %vm2866 = vcmp.lt.s32.totalorder %v2395, 0
      %v2867 = vsub.s32 0, %v2395
      %v2868 = vsel %vm2866, %v2867, %v2395
      %v2869 = vand.u32 %v2868, 65535
      %v2870 = vshrl.u32 %v2868, 16
      %v2872 = vmul.u32 %v2869, 14564
      %v2873 = vmul.u32 %v2869, 58254
      %v2874 = vmul.u32 %v2870, 14564
      %v2875 = vmul.u32 %v2870, 58254
      %v2876 = vshll.u32 %v2873, 16
      %v2877 = vshrl.u32 %v2873, 16
      %v2878 = vshll.u32 %v2874, 16
      %v2879 = vshrl.u32 %v2874, 16
      %vm2880 = vc.u32 %v2872, %v2876
      %v2881 = vsel %vm2880, 1, 0
      %v2882 = vadd.s32 %v2872, %v2876
      %v2883 = vadd.s32 %v2875, %v2881
      %vm2884 = vc.u32 %v2882, %v2878
      %v2885 = vsel %vm2884, 1, 0
      %v2886 = vadd.s32 %v2882, %v2878
      %v2887 = vadd.s32 %v2883, %v2885
      %v2888 = vadd.s32 %v2887, %v2877
      %v2889 = vadd.s32 %v2888, %v2879
      %v2890 = vshrl.u32 %v2889, 4
      %v2891 = vmul.u32 %v2890, 18
      %v2892 = vsub.s32 %v2868, %v2891
      %v2893 = vsub.s32 0, %v2892
      %v2894 = vsel %vm2866, %v2893, %v2892
      %vm2895 = vcmp.lt.s32.totalorder %v2396, 0
      %v2896 = vsub.s32 0, %v2396
      %v2897 = vsel %vm2895, %v2896, %v2396
      %v2898 = vand.u32 %v2897, 65535
      %v2899 = vshrl.u32 %v2897, 16
      %v2901 = vmul.u32 %v2898, 14564
      %v2902 = vmul.u32 %v2898, 58254
      %v2903 = vmul.u32 %v2899, 14564
      %v2904 = vmul.u32 %v2899, 58254
      %v2905 = vshll.u32 %v2902, 16
      %v2906 = vshrl.u32 %v2902, 16
      %v2907 = vshll.u32 %v2903, 16
      %v2908 = vshrl.u32 %v2903, 16
      %vm2909 = vc.u32 %v2901, %v2905
      %v2910 = vsel %vm2909, 1, 0
      %v2911 = vadd.s32 %v2901, %v2905
      %v2912 = vadd.s32 %v2904, %v2910
      %vm2913 = vc.u32 %v2911, %v2907
      %v2914 = vsel %vm2913, 1, 0
      %v2915 = vadd.s32 %v2911, %v2907
      %v2916 = vadd.s32 %v2912, %v2914
      %v2917 = vadd.s32 %v2916, %v2906
      %v2918 = vadd.s32 %v2917, %v2908
      %v2919 = vshrl.u32 %v2918, 4
      %v2920 = vmul.u32 %v2919, 18
      %v2921 = vsub.s32 %v2897, %v2920
      %v2922 = vsub.s32 0, %v2921
      %v2923 = vsel %vm2895, %v2922, %v2921
      %vm2924 = vcmp.lt.s32.totalorder %v2397, 0
      %v2925 = vsub.s32 0, %v2397
      %v2926 = vsel %vm2924, %v2925, %v2397
      %v2927 = vand.u32 %v2926, 65535
      %v2928 = vshrl.u32 %v2926, 16
      %v2930 = vmul.u32 %v2927, 14564
      %v2931 = vmul.u32 %v2927, 58254
      %v2932 = vmul.u32 %v2928, 14564
      %v2933 = vmul.u32 %v2928, 58254
      %v2934 = vshll.u32 %v2931, 16
      %v2935 = vshrl.u32 %v2931, 16
      %v2936 = vshll.u32 %v2932, 16
      %v2937 = vshrl.u32 %v2932, 16
      %vm2938 = vc.u32 %v2930, %v2934
      %v2939 = vsel %vm2938, 1, 0
      %v2940 = vadd.s32 %v2930, %v2934
      %v2941 = vadd.s32 %v2933, %v2939
      %vm2942 = vc.u32 %v2940, %v2936
      %v2943 = vsel %vm2942, 1, 0
      %v2944 = vadd.s32 %v2940, %v2936
      %v2945 = vadd.s32 %v2941, %v2943
      %v2946 = vadd.s32 %v2945, %v2935
      %v2947 = vadd.s32 %v2946, %v2937
      %v2948 = vshrl.u32 %v2947, 4
      %v2949 = vmul.u32 %v2948, 18
      %v2950 = vsub.s32 %v2926, %v2949
      %v2951 = vsub.s32 0, %v2950
      %v2952 = vsel %vm2924, %v2951, %v2950
      %vm2953 = vcmp.lt.s32.totalorder %v2398, 0
      %v2954 = vsub.s32 0, %v2398
      %v2955 = vsel %vm2953, %v2954, %v2398
      %v2956 = vand.u32 %v2955, 65535
      %v2957 = vshrl.u32 %v2955, 16
      %v2959 = vmul.u32 %v2956, 14564
      %v2960 = vmul.u32 %v2956, 58254
      %v2961 = vmul.u32 %v2957, 14564
      %v2962 = vmul.u32 %v2957, 58254
      %v2963 = vshll.u32 %v2960, 16
      %v2964 = vshrl.u32 %v2960, 16
      %v2965 = vshll.u32 %v2961, 16
      %v2966 = vshrl.u32 %v2961, 16
      %vm2967 = vc.u32 %v2959, %v2963
      %v2968 = vsel %vm2967, 1, 0
      %v2969 = vadd.s32 %v2959, %v2963
      %v2970 = vadd.s32 %v2962, %v2968
      %vm2971 = vc.u32 %v2969, %v2965
      %v2972 = vsel %vm2971, 1, 0
      %v2973 = vadd.s32 %v2969, %v2965
      %v2974 = vadd.s32 %v2970, %v2972
      %v2975 = vadd.s32 %v2974, %v2964
      %v2976 = vadd.s32 %v2975, %v2966
      %v2977 = vshrl.u32 %v2976, 4
      %v2978 = vmul.u32 %v2977, 18
      %v2979 = vsub.s32 %v2955, %v2978
      %v2980 = vsub.s32 0, %v2979
      %v2981 = vsel %vm2953, %v2980, %v2979
      %vm2982 = vcmp.lt.s32.totalorder %v2399, 0
      %v2983 = vsub.s32 0, %v2399
      %v2984 = vsel %vm2982, %v2983, %v2399
      %v2985 = vand.u32 %v2984, 65535
      %v2986 = vshrl.u32 %v2984, 16
      %v2988 = vmul.u32 %v2985, 14564
      %v2989 = vmul.u32 %v2985, 58254
      %v2990 = vmul.u32 %v2986, 14564
      %v2991 = vmul.u32 %v2986, 58254
      %v2992 = vshll.u32 %v2989, 16
      %v2993 = vshrl.u32 %v2989, 16
      %v2994 = vshll.u32 %v2990, 16
      %v2995 = vshrl.u32 %v2990, 16
      %vm2996 = vc.u32 %v2988, %v2992
      %v2997 = vsel %vm2996, 1, 0
      %v2998 = vadd.s32 %v2988, %v2992
      %v2999 = vadd.s32 %v2991, %v2997
      %vm3000 = vc.u32 %v2998, %v2994
      %v3001 = vsel %vm3000, 1, 0
      %v3002 = vadd.s32 %v2998, %v2994
      %v3003 = vadd.s32 %v2999, %v3001
      %v3004 = vadd.s32 %v3003, %v2993
      %v3005 = vadd.s32 %v3004, %v2995
      %v3006 = vshrl.u32 %v3005, 4
      %v3007 = vmul.u32 %v3006, 18
      %v3008 = vsub.s32 %v2984, %v3007
      %v3009 = vsub.s32 0, %v3008
      %v3010 = vsel %vm2982, %v3009, %v3008
      %vm3011 = vcmp.lt.s32.totalorder %v2400, 0
      %v3012 = vsub.s32 0, %v2400
      %v3013 = vsel %vm3011, %v3012, %v2400
      %v3014 = vand.u32 %v3013, 65535
      %v3015 = vshrl.u32 %v3013, 16
      %v3017 = vmul.u32 %v3014, 14564
      %v3018 = vmul.u32 %v3014, 58254
      %v3019 = vmul.u32 %v3015, 14564
      %v3020 = vmul.u32 %v3015, 58254
      %v3021 = vshll.u32 %v3018, 16
      %v3022 = vshrl.u32 %v3018, 16
      %v3023 = vshll.u32 %v3019, 16
      %v3024 = vshrl.u32 %v3019, 16
      %vm3025 = vc.u32 %v3017, %v3021
      %v3026 = vsel %vm3025, 1, 0
      %v3027 = vadd.s32 %v3017, %v3021
      %v3028 = vadd.s32 %v3020, %v3026
      %vm3029 = vc.u32 %v3027, %v3023
      %v3030 = vsel %vm3029, 1, 0
      %v3031 = vadd.s32 %v3027, %v3023
      %v3032 = vadd.s32 %v3028, %v3030
      %v3033 = vadd.s32 %v3032, %v3022
      %v3034 = vadd.s32 %v3033, %v3024
      %v3035 = vshrl.u32 %v3034, 4
      %v3036 = vmul.u32 %v3035, 18
      %v3037 = vsub.s32 %v3013, %v3036
      %v3038 = vsub.s32 0, %v3037
      %v3039 = vsel %vm3011, %v3038, %v3037
      %vm3040 = vcmp.lt.s32.totalorder %v2401, 0
      %v3041 = vsub.s32 0, %v2401
      %v3042 = vsel %vm3040, %v3041, %v2401
      %v3043 = vand.u32 %v3042, 65535
      %v3044 = vshrl.u32 %v3042, 16
      %v3046 = vmul.u32 %v3043, 14564
      %v3047 = vmul.u32 %v3043, 58254
      %v3048 = vmul.u32 %v3044, 14564
      %v3049 = vmul.u32 %v3044, 58254
      %v3050 = vshll.u32 %v3047, 16
      %v3051 = vshrl.u32 %v3047, 16
      %v3052 = vshll.u32 %v3048, 16
      %v3053 = vshrl.u32 %v3048, 16
      %vm3054 = vc.u32 %v3046, %v3050
      %v3055 = vsel %vm3054, 1, 0
      %v3056 = vadd.s32 %v3046, %v3050
      %v3057 = vadd.s32 %v3049, %v3055
      %vm3058 = vc.u32 %v3056, %v3052
      %v3059 = vsel %vm3058, 1, 0
      %v3060 = vadd.s32 %v3056, %v3052
      %v3061 = vadd.s32 %v3057, %v3059
      %v3062 = vadd.s32 %v3061, %v3051
      %v3063 = vadd.s32 %v3062, %v3053
      %v3064 = vshrl.u32 %v3063, 4
      %v3065 = vmul.u32 %v3064, 18
      %v3066 = vsub.s32 %v3042, %v3065
      %v3067 = vsub.s32 0, %v3066
      %v3068 = vsel %vm3040, %v3067, %v3066
      %vm3069 = vcmp.ne.s32.totalorder %v2430, 0
      %vm3070 = vcmp.ne.s32.totalorder %v2459, 0
      %vm3071 = vcmp.ne.s32.totalorder %v2488, 0
      %vm3072 = vcmp.ne.s32.totalorder %v2517, 0
      %vm3073 = vcmp.ne.s32.totalorder %v2546, 0
      %vm3074 = vcmp.ne.s32.totalorder %v2575, 0
      %vm3075 = vcmp.ne.s32.totalorder %v2604, 0
      %vm3076 = vcmp.ne.s32.totalorder %v2633, 0
      %vm3077 = vcmp.ne.s32.totalorder %v2662, 0
      %vm3078 = vcmp.ne.s32.totalorder %v2691, 0
      %vm3079 = vcmp.ne.s32.totalorder %v2720, 0
      %vm3080 = vcmp.ne.s32.totalorder %v2749, 0
      %vm3081 = vcmp.ne.s32.totalorder %v2778, 0
      %vm3082 = vcmp.ne.s32.totalorder %v2807, 0
      %vm3083 = vcmp.ne.s32.totalorder %v2836, 0
      %vm3084 = vcmp.ne.s32.totalorder %v2865, 0
      %vm3085 = vcmp.ne.s32.totalorder %v2894, 0
      %vm3086 = vcmp.ne.s32.totalorder %v2923, 0
      %vm3087 = vcmp.ne.s32.totalorder %v2952, 0
      %vm3088 = vcmp.ne.s32.totalorder %v2981, 0
      %vm3089 = vcmp.ne.s32.totalorder %v3010, 0
      %vm3090 = vcmp.ne.s32.totalorder %v3039, 0
      %vm3091 = vcmp.ne.s32.totalorder %v3068, 0
      %vm3092 = vcmp.lt.s32.totalorder %v2430, 0
      %vm3093 = vcmp.lt.s32.totalorder %v2459, 0
      %vm3094 = vcmp.lt.s32.totalorder %v2488, 0
      %vm3095 = vcmp.lt.s32.totalorder %v2517, 0
      %vm3096 = vcmp.lt.s32.totalorder %v2546, 0
      %vm3097 = vcmp.lt.s32.totalorder %v2575, 0
      %vm3098 = vcmp.lt.s32.totalorder %v2604, 0
      %vm3099 = vcmp.lt.s32.totalorder %v2633, 0
      %vm3100 = vcmp.lt.s32.totalorder %v2662, 0
      %vm3101 = vcmp.lt.s32.totalorder %v2691, 0
      %vm3102 = vcmp.lt.s32.totalorder %v2720, 0
      %vm3103 = vcmp.lt.s32.totalorder %v2749, 0
      %vm3104 = vcmp.lt.s32.totalorder %v2778, 0
      %vm3105 = vcmp.lt.s32.totalorder %v2807, 0
      %vm3106 = vcmp.lt.s32.totalorder %v2836, 0
      %vm3107 = vcmp.lt.s32.totalorder %v2865, 0
      %vm3108 = vcmp.lt.s32.totalorder %v2894, 0
      %vm3109 = vcmp.lt.s32.totalorder %v2923, 0
      %vm3110 = vcmp.lt.s32.totalorder %v2952, 0
      %vm3111 = vcmp.lt.s32.totalorder %v2981, 0
      %vm3112 = vcmp.lt.s32.totalorder %v3010, 0
      %vm3113 = vcmp.lt.s32.totalorder %v3039, 0
      %vm3114 = vcmp.lt.s32.totalorder %v3068, 0
      %vm3115 = vmand %vm3092, %vm3069
      %vm3116 = vmand %vm3093, %vm3070
      %vm3117 = vmand %vm3094, %vm3071
      %vm3118 = vmand %vm3095, %vm3072
      %vm3119 = vmand %vm3096, %vm3073
      %vm3120 = vmand %vm3097, %vm3074
      %vm3121 = vmand %vm3098, %vm3075
      %vm3122 = vmand %vm3099, %vm3076
      %vm3123 = vmand %vm3100, %vm3077
      %vm3124 = vmand %vm3101, %vm3078
      %vm3125 = vmand %vm3102, %vm3079
      %vm3126 = vmand %vm3103, %vm3080
      %vm3127 = vmand %vm3104, %vm3081
      %vm3128 = vmand %vm3105, %vm3082
      %vm3129 = vmand %vm3106, %vm3083
      %vm3130 = vmand %vm3107, %vm3084
      %vm3131 = vmand %vm3108, %vm3085
      %vm3132 = vmand %vm3109, %vm3086
      %vm3133 = vmand %vm3110, %vm3087
      %vm3134 = vmand %vm3111, %vm3088
      %vm3135 = vmand %vm3112, %vm3089
      %vm3136 = vmand %vm3113, %vm3090
      %vm3137 = vmand %vm3114, %vm3091
      %v3138 = vadd.s32 %v2430, 18
      %v3139 = vadd.s32 %v2459, 18
      %v3140 = vadd.s32 %v2488, 18
      %v3141 = vadd.s32 %v2517, 18
      %v3142 = vadd.s32 %v2546, 18
      %v3143 = vadd.s32 %v2575, 18
      %v3144 = vadd.s32 %v2604, 18
      %v3145 = vadd.s32 %v2633, 18
      %v3146 = vadd.s32 %v2662, 18
      %v3147 = vadd.s32 %v2691, 18
      %v3148 = vadd.s32 %v2720, 18
      %v3149 = vadd.s32 %v2749, 18
      %v3150 = vadd.s32 %v2778, 18
      %v3151 = vadd.s32 %v2807, 18
      %v3152 = vadd.s32 %v2836, 18
      %v3153 = vadd.s32 %v2865, 18
      %v3154 = vadd.s32 %v2894, 18
      %v3155 = vadd.s32 %v2923, 18
      %v3156 = vadd.s32 %v2952, 18
      %v3157 = vadd.s32 %v2981, 18
      %v3158 = vadd.s32 %v3010, 18
      %v3159 = vadd.s32 %v3039, 18
      %v3160 = vadd.s32 %v3068, 18
      %v3161 = vsel %vm3115, %v3138, %v2430
      %v3162 = vsel %vm3116, %v3139, %v2459
      %v3163 = vsel %vm3117, %v3140, %v2488
      %v3164 = vsel %vm3118, %v3141, %v2517
      %v3165 = vsel %vm3119, %v3142, %v2546
      %v3166 = vsel %vm3120, %v3143, %v2575
      %v3167 = vsel %vm3121, %v3144, %v2604
      %v3168 = vsel %vm3122, %v3145, %v2633
      %v3169 = vsel %vm3123, %v3146, %v2662
      %v3170 = vsel %vm3124, %v3147, %v2691
      %v3171 = vsel %vm3125, %v3148, %v2720
      %v3172 = vsel %vm3126, %v3149, %v2749
      %v3173 = vsel %vm3127, %v3150, %v2778
      %v3174 = vsel %vm3128, %v3151, %v2807
      %v3175 = vsel %vm3129, %v3152, %v2836
      %v3176 = vsel %vm3130, %v3153, %v2865
      %v3177 = vsel %vm3131, %v3154, %v2894
      %v3178 = vsel %vm3132, %v3155, %v2923
      %v3179 = vsel %vm3133, %v3156, %v2952
      %v3180 = vsel %vm3134, %v3157, %v2981
      %v3181 = vsel %vm3135, %v3158, %v3010
      %v3182 = vsel %vm3136, %v3159, %v3039
      %v3183 = vsel %vm3137, %v3160, %v3068
      %vm3184 = vcmp.ge.s32.totalorder %v3161, 1
      %vm3185 = vcmp.ge.s32.totalorder %v3162, 1
      %vm3186 = vcmp.ge.s32.totalorder %v3163, 1
      %vm3187 = vcmp.ge.s32.totalorder %v3164, 1
      %vm3188 = vcmp.ge.s32.totalorder %v3165, 1
      %vm3189 = vcmp.ge.s32.totalorder %v3166, 1
      %vm3190 = vcmp.ge.s32.totalorder %v3167, 1
      %vm3191 = vcmp.ge.s32.totalorder %v3168, 1
      %vm3192 = vcmp.ge.s32.totalorder %v3169, 1
      %vm3193 = vcmp.ge.s32.totalorder %v3170, 1
      %vm3194 = vcmp.ge.s32.totalorder %v3171, 1
      %vm3195 = vcmp.ge.s32.totalorder %v3172, 1
      %vm3196 = vcmp.ge.s32.totalorder %v3173, 1
      %vm3197 = vcmp.ge.s32.totalorder %v3174, 1
      %vm3198 = vcmp.ge.s32.totalorder %v3175, 1
      %vm3199 = vcmp.ge.s32.totalorder %v3176, 1
      %vm3200 = vcmp.ge.s32.totalorder %v3177, 1
      %vm3201 = vcmp.ge.s32.totalorder %v3178, 1
      %vm3202 = vcmp.ge.s32.totalorder %v3179, 1
      %vm3203 = vcmp.ge.s32.totalorder %v3180, 1
      %vm3204 = vcmp.ge.s32.totalorder %v3181, 1
      %vm3205 = vcmp.ge.s32.totalorder %v3182, 1
      %vm3206 = vcmp.ge.s32.totalorder %v3183, 1
      %vm3207 = vcmp.le.s32.totalorder %v3161, 16
      %vm3208 = vcmp.le.s32.totalorder %v3162, 16
      %vm3209 = vcmp.le.s32.totalorder %v3163, 16
      %vm3210 = vcmp.le.s32.totalorder %v3164, 16
      %vm3211 = vcmp.le.s32.totalorder %v3165, 16
      %vm3212 = vcmp.le.s32.totalorder %v3166, 16
      %vm3213 = vcmp.le.s32.totalorder %v3167, 16
      %vm3214 = vcmp.le.s32.totalorder %v3168, 16
      %vm3215 = vcmp.le.s32.totalorder %v3169, 16
      %vm3216 = vcmp.le.s32.totalorder %v3170, 16
      %vm3217 = vcmp.le.s32.totalorder %v3171, 16
      %vm3218 = vcmp.le.s32.totalorder %v3172, 16
      %vm3219 = vcmp.le.s32.totalorder %v3173, 16
      %vm3220 = vcmp.le.s32.totalorder %v3174, 16
      %vm3221 = vcmp.le.s32.totalorder %v3175, 16
      %vm3222 = vcmp.le.s32.totalorder %v3176, 16
      %vm3223 = vcmp.le.s32.totalorder %v3177, 16
      %vm3224 = vcmp.le.s32.totalorder %v3178, 16
      %vm3225 = vcmp.le.s32.totalorder %v3179, 16
      %vm3226 = vcmp.le.s32.totalorder %v3180, 16
      %vm3227 = vcmp.le.s32.totalorder %v3181, 16
      %vm3228 = vcmp.le.s32.totalorder %v3182, 16
      %vm3229 = vcmp.le.s32.totalorder %v3183, 16
      %vm3230 = vmand %vm3184, %vm3207
      %vm3231 = vmand %vm3185, %vm3208
      %vm3232 = vmand %vm3186, %vm3209
      %vm3233 = vmand %vm3187, %vm3210
      %vm3234 = vmand %vm3188, %vm3211
      %vm3235 = vmand %vm3189, %vm3212
      %vm3236 = vmand %vm3190, %vm3213
      %vm3237 = vmand %vm3191, %vm3214
      %vm3238 = vmand %vm3192, %vm3215
      %vm3239 = vmand %vm3193, %vm3216
      %vm3240 = vmand %vm3194, %vm3217
      %vm3241 = vmand %vm3195, %vm3218
      %vm3242 = vmand %vm3196, %vm3219
      %vm3243 = vmand %vm3197, %vm3220
      %vm3244 = vmand %vm3198, %vm3221
      %vm3245 = vmand %vm3199, %vm3222
      %vm3246 = vmand %vm3200, %vm3223
      %vm3247 = vmand %vm3201, %vm3224
      %vm3248 = vmand %vm3202, %vm3225
      %vm3249 = vmand %vm3203, %vm3226
      %vm3250 = vmand %vm3204, %vm3227
      %vm3251 = vmand %vm3205, %vm3228
      %vm3252 = vmand %vm3206, %vm3229
      %vm3253 = vcmp.ge.s32.totalorder %v2379, 18
      %vm3254 = vcmp.ge.s32.totalorder %v2380, 18
      %vm3255 = vcmp.ge.s32.totalorder %v2381, 18
      %vm3256 = vcmp.ge.s32.totalorder %v2382, 18
      %vm3257 = vcmp.ge.s32.totalorder %v2383, 18
      %vm3258 = vcmp.ge.s32.totalorder %v2384, 18
      %vm3259 = vcmp.ge.s32.totalorder %v2385, 18
      %vm3260 = vcmp.ge.s32.totalorder %v2386, 18
      %vm3261 = vcmp.ge.s32.totalorder %v2387, 18
      %vm3262 = vcmp.ge.s32.totalorder %v2388, 18
      %vm3263 = vcmp.ge.s32.totalorder %v2389, 18
      %vm3264 = vcmp.ge.s32.totalorder %v2390, 18
      %vm3265 = vcmp.ge.s32.totalorder %v2391, 18
      %vm3266 = vcmp.ge.s32.totalorder %v2392, 18
      %vm3267 = vcmp.ge.s32.totalorder %v2393, 18
      %vm3268 = vcmp.ge.s32.totalorder %v2394, 18
      %vm3269 = vcmp.ge.s32.totalorder %v2395, 18
      %vm3270 = vcmp.ge.s32.totalorder %v2396, 18
      %vm3271 = vcmp.ge.s32.totalorder %v2397, 18
      %vm3272 = vcmp.ge.s32.totalorder %v2398, 18
      %vm3273 = vcmp.ge.s32.totalorder %v2399, 18
      %vm3274 = vcmp.ge.s32.totalorder %v2400, 18
      %vm3275 = vcmp.ge.s32.totalorder %v2401, 18
      %vm3276 = vmor %vm3253, %vm638
      %vm3277 = vmor %vm3254, %vm638
      %vm3278 = vmor %vm3255, %vm638
      %vm3279 = vmor %vm3256, %vm638
      %vm3280 = vmor %vm3257, %vm638
      %vm3281 = vmor %vm3258, %vm638
      %vm3282 = vmor %vm3259, %vm638
      %vm3283 = vmor %vm3260, %vm638
      %vm3284 = vmor %vm3261, %vm638
      %vm3285 = vmor %vm3262, %vm638
      %vm3286 = vmor %vm3263, %vm638
      %vm3287 = vmor %vm3264, %vm638
      %vm3288 = vmor %vm3265, %vm638
      %vm3289 = vmor %vm3266, %vm638
      %vm3290 = vmor %vm3267, %vm638
      %vm3291 = vmor %vm3268, %vm638
      %vm3292 = vmor %vm3269, %vm638
      %vm3293 = vmor %vm3270, %vm638
      %vm3294 = vmor %vm3271, %vm638
      %vm3295 = vmor %vm3272, %vm638
      %vm3296 = vmor %vm3273, %vm638
      %vm3297 = vmor %vm3274, %vm638
      %vm3298 = vmor %vm3275, %vm638
      %vm3299 = vmand %vm3230, %vm3276
      %vm3300 = vmand %vm3231, %vm3277
      %vm3301 = vmand %vm3232, %vm3278
      %vm3302 = vmand %vm3233, %vm3279
      %vm3303 = vmand %vm3234, %vm3280
      %vm3304 = vmand %vm3235, %vm3281
      %vm3305 = vmand %vm3236, %vm3282
      %vm3306 = vmand %vm3237, %vm3283
      %vm3307 = vmand %vm3238, %vm3284
      %vm3308 = vmand %vm3239, %vm3285
      %vm3309 = vmand %vm3240, %vm3286
      %vm3310 = vmand %vm3241, %vm3287
      %vm3311 = vmand %vm3242, %vm3288
      %vm3312 = vmand %vm3243, %vm3289
      %vm3313 = vmand %vm3244, %vm3290
      %vm3314 = vmand %vm3245, %vm3291
      %vm3315 = vmand %vm3246, %vm3292
      %vm3316 = vmand %vm3247, %vm3293
      %vm3317 = vmand %vm3248, %vm3294
      %vm3318 = vmand %vm3249, %vm3295
      %vm3319 = vmand %vm3250, %vm3296
      %vm3320 = vmand %vm3251, %vm3297
      %vm3321 = vmand %vm3252, %vm3298
      %vm3322 = vcmp.lt.s32.totalorder %v2379, 162
      %vm3323 = vcmp.lt.s32.totalorder %v2380, 162
      %vm3324 = vcmp.lt.s32.totalorder %v2381, 162
      %vm3325 = vcmp.lt.s32.totalorder %v2382, 162
      %vm3326 = vcmp.lt.s32.totalorder %v2383, 162
      %vm3327 = vcmp.lt.s32.totalorder %v2384, 162
      %vm3328 = vcmp.lt.s32.totalorder %v2385, 162
      %vm3329 = vcmp.lt.s32.totalorder %v2386, 162
      %vm3330 = vcmp.lt.s32.totalorder %v2387, 162
      %vm3331 = vcmp.lt.s32.totalorder %v2388, 162
      %vm3332 = vcmp.lt.s32.totalorder %v2389, 162
      %vm3333 = vcmp.lt.s32.totalorder %v2390, 162
      %vm3334 = vcmp.lt.s32.totalorder %v2391, 162
      %vm3335 = vcmp.lt.s32.totalorder %v2392, 162
      %vm3336 = vcmp.lt.s32.totalorder %v2393, 162
      %vm3337 = vcmp.lt.s32.totalorder %v2394, 162
      %vm3338 = vcmp.lt.s32.totalorder %v2395, 162
      %vm3339 = vcmp.lt.s32.totalorder %v2396, 162
      %vm3340 = vcmp.lt.s32.totalorder %v2397, 162
      %vm3341 = vcmp.lt.s32.totalorder %v2398, 162
      %vm3342 = vcmp.lt.s32.totalorder %v2399, 162
      %vm3343 = vcmp.lt.s32.totalorder %v2400, 162
      %vm3344 = vcmp.lt.s32.totalorder %v2401, 162
      %vm3345 = vmor %vm3322, %vm650
      %vm3346 = vmor %vm3323, %vm650
      %vm3347 = vmor %vm3324, %vm650
      %vm3348 = vmor %vm3325, %vm650
      %vm3349 = vmor %vm3326, %vm650
      %vm3350 = vmor %vm3327, %vm650
      %vm3351 = vmor %vm3328, %vm650
      %vm3352 = vmor %vm3329, %vm650
      %vm3353 = vmor %vm3330, %vm650
      %vm3354 = vmor %vm3331, %vm650
      %vm3355 = vmor %vm3332, %vm650
      %vm3356 = vmor %vm3333, %vm650
      %vm3357 = vmor %vm3334, %vm650
      %vm3358 = vmor %vm3335, %vm650
      %vm3359 = vmor %vm3336, %vm650
      %vm3360 = vmor %vm3337, %vm650
      %vm3361 = vmor %vm3338, %vm650
      %vm3362 = vmor %vm3339, %vm650
      %vm3363 = vmor %vm3340, %vm650
      %vm3364 = vmor %vm3341, %vm650
      %vm3365 = vmor %vm3342, %vm650
      %vm3366 = vmor %vm3343, %vm650
      %vm3367 = vmor %vm3344, %vm650
      %vm3368 = vmand %vm3299, %vm3345
      %vm3369 = vmand %vm3300, %vm3346
      %vm3370 = vmand %vm3301, %vm3347
      %vm3371 = vmand %vm3302, %vm3348
      %vm3372 = vmand %vm3303, %vm3349
      %vm3373 = vmand %vm3304, %vm3350
      %vm3374 = vmand %vm3305, %vm3351
      %vm3375 = vmand %vm3306, %vm3352
      %vm3376 = vmand %vm3307, %vm3353
      %vm3377 = vmand %vm3308, %vm3354
      %vm3378 = vmand %vm3309, %vm3355
      %vm3379 = vmand %vm3310, %vm3356
      %vm3380 = vmand %vm3311, %vm3357
      %vm3381 = vmand %vm3312, %vm3358
      %vm3382 = vmand %vm3313, %vm3359
      %vm3383 = vmand %vm3314, %vm3360
      %vm3384 = vmand %vm3315, %vm3361
      %vm3385 = vmand %vm3316, %vm3362
      %vm3386 = vmand %vm3317, %vm3363
      %vm3387 = vmand %vm3318, %vm3364
      %vm3388 = vmand %vm3319, %vm3365
      %vm3389 = vmand %vm3320, %vm3366
      %vm3390 = vmand %vm3321, %vm3367
      %v3391 = vsel %vm3368, 1, 0
      %v3392 = vsel %vm3369, 1, 0
      %v3393 = vsel %vm3370, 1, 0
      %v3394 = vsel %vm3371, 1, 0
      %v3395 = vsel %vm3372, 1, 0
      %v3396 = vsel %vm3373, 1, 0
      %v3397 = vsel %vm3374, 1, 0
      %v3398 = vsel %vm3375, 1, 0
      %v3399 = vsel %vm3376, 1, 0
      %v3400 = vsel %vm3377, 1, 0
      %v3401 = vsel %vm3378, 1, 0
      %v3402 = vsel %vm3379, 1, 0
      %v3403 = vsel %vm3380, 1, 0
      %v3404 = vsel %vm3381, 1, 0
      %v3405 = vsel %vm3382, 1, 0
      %v3406 = vsel %vm3383, 1, 0
      %v3407 = vsel %vm3384, 1, 0
      %v3408 = vsel %vm3385, 1, 0
      %v3409 = vsel %vm3386, 1, 0
      %v3410 = vsel %vm3387, 1, 0
      %v3411 = vsel %vm3388, 1, 0
      %v3412 = vsel %vm3389, 1, 0
      %v3413 = vsel %vm3390, 1, 0
      %vm3414 = vcmp.eq.s32.totalorder %v3391, 1
      %vm3415 = vcmp.eq.s32.totalorder %v3392, 1
      %vm3416 = vcmp.eq.s32.totalorder %v3393, 1
      %vm3417 = vcmp.eq.s32.totalorder %v3394, 1
      %vm3418 = vcmp.eq.s32.totalorder %v3395, 1
      %vm3419 = vcmp.eq.s32.totalorder %v3396, 1
      %vm3420 = vcmp.eq.s32.totalorder %v3397, 1
      %vm3421 = vcmp.eq.s32.totalorder %v3398, 1
      %vm3422 = vcmp.eq.s32.totalorder %v3399, 1
      %vm3423 = vcmp.eq.s32.totalorder %v3400, 1
      %vm3424 = vcmp.eq.s32.totalorder %v3401, 1
      %vm3425 = vcmp.eq.s32.totalorder %v3402, 1
      %vm3426 = vcmp.eq.s32.totalorder %v3403, 1
      %vm3427 = vcmp.eq.s32.totalorder %v3404, 1
      %vm3428 = vcmp.eq.s32.totalorder %v3405, 1
      %vm3429 = vcmp.eq.s32.totalorder %v3406, 1
      %vm3430 = vcmp.eq.s32.totalorder %v3407, 1
      %vm3431 = vcmp.eq.s32.totalorder %v3408, 1
      %vm3432 = vcmp.eq.s32.totalorder %v3409, 1
      %vm3433 = vcmp.eq.s32.totalorder %v3410, 1
      %vm3434 = vcmp.eq.s32.totalorder %v3411, 1
      %vm3435 = vcmp.eq.s32.totalorder %v3412, 1
      %vm3436 = vcmp.eq.s32.totalorder %v3413, 1
      %v3437 = vsel %vm3414, %v2355, 0.0
      %v3438 = vsel %vm3415, %v2356, 0.0
      %v3439 = vsel %vm3416, %v2357, 0.0
      %v3440 = vsel %vm3417, %v2358, 0.0
      %v3441 = vsel %vm3418, %v2359, 0.0
      %v3442 = vsel %vm3419, %v2360, 0.0
      %v3443 = vsel %vm3420, %v2361, 0.0
      %v3444 = vsel %vm3421, %v2362, 0.0
      %v3445 = vsel %vm3422, %v2363, 0.0
      %v3446 = vsel %vm3423, %v2364, 0.0
      %v3447 = vsel %vm3424, %v2365, 0.0
      %v3448 = vsel %vm3425, %v2366, 0.0
      %v3449 = vsel %vm3426, %v2367, 0.0
      %v3450 = vsel %vm3427, %v2368, 0.0
      %v3451 = vsel %vm3428, %v2369, 0.0
      %v3452 = vsel %vm3429, %v2370, 0.0
      %v3453 = vsel %vm3430, %v2371, 0.0
      %v3454 = vsel %vm3431, %v2372, 0.0
      %v3455 = vsel %vm3432, %v2373, 0.0
      %v3456 = vsel %vm3433, %v2374, 0.0
      %v3457 = vsel %vm3434, %v2375, 0.0
      %v3458 = vsel %vm3435, %v2376, 0.0
      %v3459 = vsel %vm3436, %v2377, 0.0
      %v3460 = vpack.c.bf16 %v3437, %v3437
      %v3461 = vpack.c.bf16 %v3438, %v3438
      %v3462 = vpack.c.bf16 %v3439, %v3439
      %v3463 = vpack.c.bf16 %v3440, %v3440
      %v3464 = vpack.c.bf16 %v3441, %v3441
      %v3465 = vpack.c.bf16 %v3442, %v3442
      %v3466 = vpack.c.bf16 %v3443, %v3443
      %v3467 = vpack.c.bf16 %v3444, %v3444
      %v3468 = vpack.c.bf16 %v3445, %v3445
      %v3469 = vpack.c.bf16 %v3446, %v3446
      %v3470 = vpack.c.bf16 %v3447, %v3447
      %v3471 = vpack.c.bf16 %v3448, %v3448
      %v3472 = vpack.c.bf16 %v3449, %v3449
      %v3473 = vpack.c.bf16 %v3450, %v3450
      %v3474 = vpack.c.bf16 %v3451, %v3451
      %v3475 = vpack.c.bf16 %v3452, %v3452
      %v3476 = vpack.c.bf16 %v3453, %v3453
      %v3477 = vpack.c.bf16 %v3454, %v3454
      %v3478 = vpack.c.bf16 %v3455, %v3455
      %v3479 = vpack.c.bf16 %v3456, %v3456
      %v3480 = vpack.c.bf16 %v3457, %v3457
      %v3481 = vpack.c.bf16 %v3458, %v3458
      %v3482 = vpack.c.bf16 %v3459, %v3459
      %3506 = vrot.lane.b32.xlu0 %v3460, 4
      %v3507 = vpop.permute.xlu0 %3506
      %3508 = vrot.lane.b32.xlu0 %v3461, 4
      %v3509 = vpop.permute.xlu0 %3508
      %3510 = vrot.lane.b32.xlu0 %v3462, 4
      %v3511 = vpop.permute.xlu0 %3510
      %3512 = vrot.lane.b32.xlu0 %v3463, 4
      %v3513 = vpop.permute.xlu0 %3512
      %3514 = vrot.lane.b32.xlu0 %v3464, 4
      %v3515 = vpop.permute.xlu0 %3514
      %3516 = vrot.lane.b32.xlu0 %v3465, 4
      %v3517 = vpop.permute.xlu0 %3516
      %3518 = vrot.lane.b32.xlu0 %v3466, 4
      %v3519 = vpop.permute.xlu0 %3518
      %3520 = vrot.lane.b32.xlu0 %v3467, 4
      %v3521 = vpop.permute.xlu0 %3520
      %3522 = vrot.lane.b32.xlu0 %v3468, 4
      %v3523 = vpop.permute.xlu0 %3522
      %3524 = vrot.lane.b32.xlu0 %v3469, 4
      %v3525 = vpop.permute.xlu0 %3524
      %3526 = vrot.lane.b32.xlu0 %v3470, 4
      %v3527 = vpop.permute.xlu0 %3526
      %3528 = vrot.lane.b32.xlu0 %v3471, 4
      %v3529 = vpop.permute.xlu0 %3528
      %3530 = vrot.lane.b32.xlu0 %v3472, 4
      %v3531 = vpop.permute.xlu0 %3530
      %3532 = vrot.lane.b32.xlu0 %v3473, 4
      %v3533 = vpop.permute.xlu0 %3532
      %3534 = vrot.lane.b32.xlu0 %v3474, 4
      %v3535 = vpop.permute.xlu0 %3534
      %3536 = vrot.lane.b32.xlu0 %v3475, 4
      %v3537 = vpop.permute.xlu0 %3536
      %3538 = vrot.lane.b32.xlu0 %v3476, 4
      %v3539 = vpop.permute.xlu0 %3538
      %3540 = vrot.lane.b32.xlu0 %v3477, 4
      %v3541 = vpop.permute.xlu0 %3540
      %3542 = vrot.lane.b32.xlu0 %v3478, 4
      %v3543 = vpop.permute.xlu0 %3542
      %3544 = vrot.lane.b32.xlu0 %v3479, 4
      %v3545 = vpop.permute.xlu0 %3544
      %3546 = vrot.lane.b32.xlu0 %v3480, 4
      %v3547 = vpop.permute.xlu0 %3546
      %3548 = vrot.lane.b32.xlu0 %v3481, 4
      %v3549 = vpop.permute.xlu0 %3548
      %3550 = vrot.lane.b32.xlu0 %v3482, 4
      %v3551 = vpop.permute.xlu0 %3550
      %3575 = vst.msk [vmem:[#allocation3] sm:$0xf] %vm695, %v3507
      %3576 = vst.msk [vmem:[#allocation3 + $0x4] sm:$0xf] %vm695, %v3509
      %3577 = vst.msk [vmem:[#allocation3 + $0x8] sm:$0xf] %vm695, %v3511
      %3578 = vst.msk [vmem:[#allocation3 + $0xc] sm:$0xf] %vm695, %v3513
      %3579 = vst.msk [vmem:[#allocation3 + $0x10] sm:$0xf] %vm695, %v3515
      %3580 = vst.msk [vmem:[#allocation3 + $0x14] sm:$0xf] %vm695, %v3517
      %3581 = vst.msk [vmem:[#allocation3 + $0x18] sm:$0xf] %vm695, %v3519
      %3582 = vst.msk [vmem:[#allocation3 + $0x1c] sm:$0xf] %vm695, %v3521
      %3583 = vst.msk [vmem:[#allocation3 + $0x20] sm:$0xf] %vm695, %v3523
      %3584 = vst.msk [vmem:[#allocation3 + $0x24] sm:$0xf] %vm695, %v3525
      %3585 = vst.msk [vmem:[#allocation3 + $0x28] sm:$0xf] %vm695, %v3527
      %3586 = vst.msk [vmem:[#allocation3 + $0x2c] sm:$0xf] %vm695, %v3529
      %3587 = vst.msk [vmem:[#allocation3 + $0x30] sm:$0xf] %vm695, %v3531
      %3588 = vst.msk [vmem:[#allocation3 + $0x34] sm:$0xf] %vm695, %v3533
      %3589 = vst.msk [vmem:[#allocation3 + $0x38] sm:$0xf] %vm695, %v3535
      %3590 = vst.msk [vmem:[#allocation3 + $0x3c] sm:$0xf] %vm695, %v3537
      %3591 = vst.msk [vmem:[#allocation3 + $0x40] sm:$0xf] %vm695, %v3539
      %3592 = vst.msk [vmem:[#allocation3 + $0x44] sm:$0xf] %vm695, %v3541
      %3593 = vst.msk [vmem:[#allocation3 + $0x48] sm:$0xf] %vm695, %v3543
      %3594 = vst.msk [vmem:[#allocation3 + $0x4c] sm:$0xf] %vm695, %v3545
      %3595 = vst.msk [vmem:[#allocation3 + $0x50] sm:$0xf] %vm695, %v3547
      %3596 = vst.msk [vmem:[#allocation3 + $0x54] sm:$0xf] %vm695, %v3549
      %3597 = vst.msk [vmem:[#allocation3 + $0x58] sm:$0x3] %vm725, %v3551
      %v3598 = vld [vmem:[#allocation3] sm:$0x1]
      %v3599 = vsel %vm929, 0, %v3598
      %3600 = vst [vmem:[#allocation3] sm:$0x1] %v3599
      %v3602 = vshrl.u32 %v3460, 16
      %v3604 = vrot.slane %v3602, 7
      %v3605 = vshll.u32 %v3460, 16
      %v3607 = vor.u32 %v3604, %v3605
      %v3608 = vrot.slane %v3604, 4
      %v3610 = vshrl.u32 %v3461, 16
      %v3612 = vrot.slane %v3610, 7
      %v3613 = vshll.u32 %v3461, 16
      %v3615 = vor.u32 %v3612, %v3613
      %v3616 = vsel %vm961, %v3608, %v3615
      %v3617 = vrot.slane %v3612, 4
      %v3619 = vshrl.u32 %v3462, 16
      %v3621 = vrot.slane %v3619, 7
      %v3622 = vshll.u32 %v3462, 16
      %v3624 = vor.u32 %v3621, %v3622
      %v3625 = vsel %vm961, %v3617, %v3624
      %v3626 = vrot.slane %v3621, 4
      %v3628 = vshrl.u32 %v3463, 16
      %v3630 = vrot.slane %v3628, 7
      %v3631 = vshll.u32 %v3463, 16
      %v3633 = vor.u32 %v3630, %v3631
      %v3634 = vsel %vm961, %v3626, %v3633
      %v3635 = vrot.slane %v3630, 4
      %v3637 = vshrl.u32 %v3464, 16
      %v3639 = vrot.slane %v3637, 7
      %v3640 = vshll.u32 %v3464, 16
      %v3642 = vor.u32 %v3639, %v3640
      %v3643 = vsel %vm961, %v3635, %v3642
      %v3644 = vrot.slane %v3639, 4
      %v3646 = vshrl.u32 %v3465, 16
      %v3648 = vrot.slane %v3646, 7
      %v3649 = vshll.u32 %v3465, 16
      %v3651 = vor.u32 %v3648, %v3649
      %v3652 = vsel %vm961, %v3644, %v3651
      %v3653 = vrot.slane %v3648, 4
      %v3655 = vshrl.u32 %v3466, 16
      %v3657 = vrot.slane %v3655, 7
      %v3658 = vshll.u32 %v3466, 16
      %v3660 = vor.u32 %v3657, %v3658
      %v3661 = vsel %vm961, %v3653, %v3660
      %v3662 = vrot.slane %v3657, 4
      %v3664 = vshrl.u32 %v3467, 16
      %v3666 = vrot.slane %v3664, 7
      %v3667 = vshll.u32 %v3467, 16
      %v3669 = vor.u32 %v3666, %v3667
      %v3670 = vsel %vm961, %v3662, %v3669
      %v3671 = vrot.slane %v3666, 4
      %v3673 = vshrl.u32 %v3468, 16
      %v3675 = vrot.slane %v3673, 7
      %v3676 = vshll.u32 %v3468, 16
      %v3678 = vor.u32 %v3675, %v3676
      %v3679 = vsel %vm961, %v3671, %v3678
      %v3680 = vrot.slane %v3675, 4
      %v3682 = vshrl.u32 %v3469, 16
      %v3684 = vrot.slane %v3682, 7
      %v3685 = vshll.u32 %v3469, 16
      %v3687 = vor.u32 %v3684, %v3685
      %v3688 = vsel %vm961, %v3680, %v3687
      %v3689 = vrot.slane %v3684, 4
      %v3691 = vshrl.u32 %v3470, 16
      %v3693 = vrot.slane %v3691, 7
      %v3694 = vshll.u32 %v3470, 16
      %v3696 = vor.u32 %v3693, %v3694
      %v3697 = vsel %vm961, %v3689, %v3696
      %v3698 = vrot.slane %v3693, 4
      %v3700 = vshrl.u32 %v3471, 16
      %v3702 = vrot.slane %v3700, 7
      %v3703 = vshll.u32 %v3471, 16
      %v3705 = vor.u32 %v3702, %v3703
      %v3706 = vsel %vm961, %v3698, %v3705
      %v3707 = vrot.slane %v3702, 4
      %v3709 = vshrl.u32 %v3472, 16
      %v3711 = vrot.slane %v3709, 7
      %v3712 = vshll.u32 %v3472, 16
      %v3714 = vor.u32 %v3711, %v3712
      %v3715 = vsel %vm961, %v3707, %v3714
      %v3716 = vrot.slane %v3711, 4
      %v3718 = vshrl.u32 %v3473, 16
      %v3720 = vrot.slane %v3718, 7
      %v3721 = vshll.u32 %v3473, 16
      %v3723 = vor.u32 %v3720, %v3721
      %v3724 = vsel %vm961, %v3716, %v3723
      %v3725 = vrot.slane %v3720, 4
      %v3727 = vshrl.u32 %v3474, 16
      %v3729 = vrot.slane %v3727, 7
      %v3730 = vshll.u32 %v3474, 16
      %v3732 = vor.u32 %v3729, %v3730
      %v3733 = vsel %vm961, %v3725, %v3732
      %v3734 = vrot.slane %v3729, 4
      %v3736 = vshrl.u32 %v3475, 16
      %v3738 = vrot.slane %v3736, 7
      %v3739 = vshll.u32 %v3475, 16
      %v3741 = vor.u32 %v3738, %v3739
      %v3742 = vsel %vm961, %v3734, %v3741
      %v3743 = vrot.slane %v3738, 4
      %v3745 = vshrl.u32 %v3476, 16
      %v3747 = vrot.slane %v3745, 7
      %v3748 = vshll.u32 %v3476, 16
      %v3750 = vor.u32 %v3747, %v3748
      %v3751 = vsel %vm961, %v3743, %v3750
      %v3752 = vrot.slane %v3747, 4
      %v3754 = vshrl.u32 %v3477, 16
      %v3756 = vrot.slane %v3754, 7
      %v3757 = vshll.u32 %v3477, 16
      %v3759 = vor.u32 %v3756, %v3757
      %v3760 = vsel %vm961, %v3752, %v3759
      %v3761 = vrot.slane %v3756, 4
      %v3763 = vshrl.u32 %v3478, 16
      %v3765 = vrot.slane %v3763, 7
      %v3766 = vshll.u32 %v3478, 16
      %v3768 = vor.u32 %v3765, %v3766
      %v3769 = vsel %vm961, %v3761, %v3768
      %v3770 = vrot.slane %v3765, 4
      %v3772 = vshrl.u32 %v3479, 16
      %v3774 = vrot.slane %v3772, 7
      %v3775 = vshll.u32 %v3479, 16
      %v3777 = vor.u32 %v3774, %v3775
      %v3778 = vsel %vm961, %v3770, %v3777
      %v3779 = vrot.slane %v3774, 4
      %v3781 = vshrl.u32 %v3480, 16
      %v3783 = vrot.slane %v3781, 7
      %v3784 = vshll.u32 %v3480, 16
      %v3786 = vor.u32 %v3783, %v3784
      %v3787 = vsel %vm961, %v3779, %v3786
      %v3788 = vrot.slane %v3783, 4
      %v3790 = vshrl.u32 %v3481, 16
      %v3792 = vrot.slane %v3790, 7
      %v3793 = vshll.u32 %v3481, 16
      %v3795 = vor.u32 %v3792, %v3793
      %v3796 = vsel %vm961, %v3788, %v3795
      %v3797 = vrot.slane %v3792, 4
      %v3799 = vshrl.u32 %v3482, 16
      %v3801 = vrot.slane %v3799, 7
      %v3802 = vshll.u32 %v3482, 16
      %v3804 = vor.u32 %v3801, %v3802
      %v3805 = vsel %vm961, %v3797, %v3804
      %v3829 = vld [vmem:[#allocation3] sm:$0xf]
      %v3830 = vsel %vm1286, %v3607, %v3829
      %3831 = vst [vmem:[#allocation3] sm:$0xf] %v3830
      %3832 = vst.msk [vmem:[#allocation3 + $0x4] sm:$0xf] %vm1289, %v3616
      %3833 = vst.msk [vmem:[#allocation3 + $0x8] sm:$0xf] %vm1289, %v3625
      %3834 = vst.msk [vmem:[#allocation3 + $0xc] sm:$0xf] %vm1289, %v3634
      %3835 = vst.msk [vmem:[#allocation3 + $0x10] sm:$0xf] %vm1289, %v3643
      %3836 = vst.msk [vmem:[#allocation3 + $0x14] sm:$0xf] %vm1289, %v3652
      %3837 = vst.msk [vmem:[#allocation3 + $0x18] sm:$0xf] %vm1289, %v3661
      %3838 = vst.msk [vmem:[#allocation3 + $0x1c] sm:$0xf] %vm1289, %v3670
      %3839 = vst.msk [vmem:[#allocation3 + $0x20] sm:$0xf] %vm1289, %v3679
      %3840 = vst.msk [vmem:[#allocation3 + $0x24] sm:$0xf] %vm1289, %v3688
      %3841 = vst.msk [vmem:[#allocation3 + $0x28] sm:$0xf] %vm1289, %v3697
      %3842 = vst.msk [vmem:[#allocation3 + $0x2c] sm:$0xf] %vm1289, %v3706
      %3843 = vst.msk [vmem:[#allocation3 + $0x30] sm:$0xf] %vm1289, %v3715
      %3844 = vst.msk [vmem:[#allocation3 + $0x34] sm:$0xf] %vm1289, %v3724
      %3845 = vst.msk [vmem:[#allocation3 + $0x38] sm:$0xf] %vm1289, %v3733
      %3846 = vst.msk [vmem:[#allocation3 + $0x3c] sm:$0xf] %vm1289, %v3742
      %3847 = vst.msk [vmem:[#allocation3 + $0x40] sm:$0xf] %vm1289, %v3751
      %3848 = vst.msk [vmem:[#allocation3 + $0x44] sm:$0xf] %vm1289, %v3760
      %3849 = vst.msk [vmem:[#allocation3 + $0x48] sm:$0xf] %vm1289, %v3769
      %3850 = vst.msk [vmem:[#allocation3 + $0x4c] sm:$0xf] %vm1289, %v3778
      %3851 = vst.msk [vmem:[#allocation3 + $0x50] sm:$0xf] %vm1289, %v3787
      %3852 = vst.msk [vmem:[#allocation3 + $0x54] sm:$0xf] %vm1289, %v3796
      %vm3853 = vcmask 25600
      %3854 = vst.msk [vmem:[#allocation3 + $0x58] sm:$0x3] %vm3853, %v3805
      %v3855 = vrot.slane %v3602, 4
      %v3856 = vrot.slane %v3605, 5
      %v3857 = vor.u32 %v3855, %v3856
      %v3858 = vrot.slane %v3857, 4
      %v3859 = vrot.slane %v3613, 5
      %v3860 = vsel %vm1345, %v3858, %v3859
      %v3861 = vrot.slane %v3610, 4
      %v3862 = vor.u32 %v3861, %v3859
      %v3863 = vrot.slane %v3862, 4
      %v3864 = vrot.slane %v3622, 5
      %v3865 = vsel %vm1345, %v3863, %v3864
      %v3866 = vrot.slane %v3619, 4
      %v3867 = vor.u32 %v3866, %v3864
      %v3868 = vrot.slane %v3867, 4
      %v3869 = vrot.slane %v3631, 5
      %v3870 = vsel %vm1345, %v3868, %v3869
      %v3871 = vrot.slane %v3628, 4
      %v3872 = vor.u32 %v3871, %v3869
      %v3873 = vrot.slane %v3872, 4
      %v3874 = vrot.slane %v3640, 5
      %v3875 = vsel %vm1345, %v3873, %v3874
      %v3876 = vrot.slane %v3637, 4
      %v3877 = vor.u32 %v3876, %v3874
      %v3878 = vrot.slane %v3877, 4
      %v3879 = vrot.slane %v3649, 5
      %v3880 = vsel %vm1345, %v3878, %v3879
      %v3881 = vrot.slane %v3646, 4
      %v3882 = vor.u32 %v3881, %v3879
      %v3883 = vrot.slane %v3882, 4
      %v3884 = vrot.slane %v3658, 5
      %v3885 = vsel %vm1345, %v3883, %v3884
      %v3886 = vrot.slane %v3655, 4
      %v3887 = vor.u32 %v3886, %v3884
      %v3888 = vrot.slane %v3887, 4
      %v3889 = vrot.slane %v3667, 5
      %v3890 = vsel %vm1345, %v3888, %v3889
      %v3891 = vrot.slane %v3664, 4
      %v3892 = vor.u32 %v3891, %v3889
      %v3893 = vrot.slane %v3892, 4
      %v3894 = vrot.slane %v3676, 5
      %v3895 = vsel %vm1345, %v3893, %v3894
      %v3896 = vrot.slane %v3673, 4
      %v3897 = vor.u32 %v3896, %v3894
      %v3898 = vrot.slane %v3897, 4
      %v3899 = vrot.slane %v3685, 5
      %v3900 = vsel %vm1345, %v3898, %v3899
      %v3901 = vrot.slane %v3682, 4
      %v3902 = vor.u32 %v3901, %v3899
      %v3903 = vrot.slane %v3902, 4
      %v3904 = vrot.slane %v3694, 5
      %v3905 = vsel %vm1345, %v3903, %v3904
      %v3906 = vrot.slane %v3691, 4
      %v3907 = vor.u32 %v3906, %v3904
      %v3908 = vrot.slane %v3907, 4
      %v3909 = vrot.slane %v3703, 5
      %v3910 = vsel %vm1345, %v3908, %v3909
      %v3911 = vrot.slane %v3700, 4
      %v3912 = vor.u32 %v3911, %v3909
      %v3913 = vrot.slane %v3912, 4
      %v3914 = vrot.slane %v3712, 5
      %v3915 = vsel %vm1345, %v3913, %v3914
      %v3916 = vrot.slane %v3709, 4
      %v3917 = vor.u32 %v3916, %v3914
      %v3918 = vrot.slane %v3917, 4
      %v3919 = vrot.slane %v3721, 5
      %v3920 = vsel %vm1345, %v3918, %v3919
      %v3921 = vrot.slane %v3718, 4
      %v3922 = vor.u32 %v3921, %v3919
      %v3923 = vrot.slane %v3922, 4
      %v3924 = vrot.slane %v3730, 5
      %v3925 = vsel %vm1345, %v3923, %v3924
      %v3926 = vrot.slane %v3727, 4
      %v3927 = vor.u32 %v3926, %v3924
      %v3928 = vrot.slane %v3927, 4
      %v3929 = vrot.slane %v3739, 5
      %v3930 = vsel %vm1345, %v3928, %v3929
      %v3931 = vrot.slane %v3736, 4
      %v3932 = vor.u32 %v3931, %v3929
      %v3933 = vrot.slane %v3932, 4
      %v3934 = vrot.slane %v3748, 5
      %v3935 = vsel %vm1345, %v3933, %v3934
      %v3936 = vrot.slane %v3745, 4
      %v3937 = vor.u32 %v3936, %v3934
      %v3938 = vrot.slane %v3937, 4
      %v3939 = vrot.slane %v3757, 5
      %v3940 = vsel %vm1345, %v3938, %v3939
      %v3941 = vrot.slane %v3754, 4
      %v3942 = vor.u32 %v3941, %v3939
      %v3943 = vrot.slane %v3942, 4
      %v3944 = vrot.slane %v3766, 5
      %v3945 = vsel %vm1345, %v3943, %v3944
      %v3946 = vrot.slane %v3763, 4
      %v3947 = vor.u32 %v3946, %v3944
      %v3948 = vrot.slane %v3947, 4
      %v3949 = vrot.slane %v3775, 5
      %v3950 = vsel %vm1345, %v3948, %v3949
      %v3951 = vrot.slane %v3772, 4
      %v3952 = vor.u32 %v3951, %v3949
      %v3953 = vrot.slane %v3952, 4
      %v3954 = vrot.slane %v3784, 5
      %v3955 = vsel %vm1345, %v3953, %v3954
      %v3956 = vrot.slane %v3781, 4
      %v3957 = vor.u32 %v3956, %v3954
      %v3958 = vrot.slane %v3957, 4
      %v3959 = vrot.slane %v3793, 5
      %v3960 = vsel %vm1345, %v3958, %v3959
      %v3961 = vrot.slane %v3790, 4
      %v3962 = vor.u32 %v3961, %v3959
      %v3963 = vrot.slane %v3962, 4
      %v3964 = vrot.slane %v3802, 5
      %v3965 = vsel %vm1345, %v3963, %v3964
      %v3966 = vrot.slane %v3799, 4
      %v3967 = vor.u32 %v3966, %v3964
      %v3968 = vrot.slane %v3967, 4
      %3969 = vrot.lane.b32.xlu0 %v3860, 8
      %v3970 = vpop.permute.xlu0 %3969
      %3971 = vrot.lane.b32.xlu0 %v3865, 8
      %v3972 = vpop.permute.xlu0 %3971
      %3973 = vrot.lane.b32.xlu0 %v3870, 8
      %v3974 = vpop.permute.xlu0 %3973
      %3975 = vrot.lane.b32.xlu0 %v3875, 8
      %v3976 = vpop.permute.xlu0 %3975
      %3977 = vrot.lane.b32.xlu0 %v3880, 8
      %v3978 = vpop.permute.xlu0 %3977
      %3979 = vrot.lane.b32.xlu0 %v3885, 8
      %v3980 = vpop.permute.xlu0 %3979
      %3981 = vrot.lane.b32.xlu0 %v3890, 8
      %v3982 = vpop.permute.xlu0 %3981
      %3983 = vrot.lane.b32.xlu0 %v3895, 8
      %v3984 = vpop.permute.xlu0 %3983
      %3985 = vrot.lane.b32.xlu0 %v3900, 8
      %v3986 = vpop.permute.xlu0 %3985
      %3987 = vrot.lane.b32.xlu0 %v3905, 8
      %v3988 = vpop.permute.xlu0 %3987
      %3989 = vrot.lane.b32.xlu0 %v3910, 8
      %v3990 = vpop.permute.xlu0 %3989
      %3991 = vrot.lane.b32.xlu0 %v3915, 8
      %v3992 = vpop.permute.xlu0 %3991
      %3993 = vrot.lane.b32.xlu0 %v3920, 8
      %v3994 = vpop.permute.xlu0 %3993
      %3995 = vrot.lane.b32.xlu0 %v3925, 8
      %v3996 = vpop.permute.xlu0 %3995
      %3997 = vrot.lane.b32.xlu0 %v3930, 8
      %v3998 = vpop.permute.xlu0 %3997
      %3999 = vrot.lane.b32.xlu0 %v3935, 8
      %v4000 = vpop.permute.xlu0 %3999
      %4001 = vrot.lane.b32.xlu0 %v3940, 8
      %v4002 = vpop.permute.xlu0 %4001
      %4003 = vrot.lane.b32.xlu0 %v3945, 8
      %v4004 = vpop.permute.xlu0 %4003
      %4005 = vrot.lane.b32.xlu0 %v3950, 8
      %v4006 = vpop.permute.xlu0 %4005
      %4007 = vrot.lane.b32.xlu0 %v3955, 8
      %v4008 = vpop.permute.xlu0 %4007
      %4009 = vrot.lane.b32.xlu0 %v3960, 8
      %v4010 = vpop.permute.xlu0 %4009
      %4011 = vrot.lane.b32.xlu0 %v3965, 8
      %v4012 = vpop.permute.xlu0 %4011
      %4013 = vrot.lane.b32.xlu0 %v3968, 8
      %v4014 = vpop.permute.xlu0 %4013
      %4038 = vst.msk [vmem:[#allocation3] sm:$0xf] %vm1696, %v3970
      %4039 = vst.msk [vmem:[#allocation3 + $0x4] sm:$0xf] %vm1696, %v3972
      %4040 = vst.msk [vmem:[#allocation3 + $0x8] sm:$0xf] %vm1696, %v3974
      %4041 = vst.msk [vmem:[#allocation3 + $0xc] sm:$0xf] %vm1696, %v3976
      %4042 = vst.msk [vmem:[#allocation3 + $0x10] sm:$0xf] %vm1696, %v3978
      %4043 = vst.msk [vmem:[#allocation3 + $0x14] sm:$0xf] %vm1696, %v3980
      %4044 = vst.msk [vmem:[#allocation3 + $0x18] sm:$0xf] %vm1696, %v3982
      %4045 = vst.msk [vmem:[#allocation3 + $0x1c] sm:$0xf] %vm1696, %v3984
      %4046 = vst.msk [vmem:[#allocation3 + $0x20] sm:$0xf] %vm1696, %v3986
      %4047 = vst.msk [vmem:[#allocation3 + $0x24] sm:$0xf] %vm1696, %v3988
      %4048 = vst.msk [vmem:[#allocation3 + $0x28] sm:$0xf] %vm1696, %v3990
      %4049 = vst.msk [vmem:[#allocation3 + $0x2c] sm:$0xf] %vm1696, %v3992
      %4050 = vst.msk [vmem:[#allocation3 + $0x30] sm:$0xf] %vm1696, %v3994
      %4051 = vst.msk [vmem:[#allocation3 + $0x34] sm:$0xf] %vm1696, %v3996
      %4052 = vst.msk [vmem:[#allocation3 + $0x38] sm:$0xf] %vm1696, %v3998
      %4053 = vst.msk [vmem:[#allocation3 + $0x3c] sm:$0xf] %vm1696, %v4000
      %4054 = vst.msk [vmem:[#allocation3 + $0x40] sm:$0xf] %vm1696, %v4002
      %4055 = vst.msk [vmem:[#allocation3 + $0x44] sm:$0xf] %vm1696, %v4004
      %4056 = vst.msk [vmem:[#allocation3 + $0x48] sm:$0xf] %vm1696, %v4006
      %4057 = vst.msk [vmem:[#allocation3 + $0x4c] sm:$0xf] %vm1696, %v4008
      %4058 = vst.msk [vmem:[#allocation3 + $0x50] sm:$0xf] %vm1696, %v4010
      %4059 = vst.msk [vmem:[#allocation3 + $0x54] sm:$0xf] %vm1696, %v4012
      %vm4060 = vcmask 91200
      %vm4061 = vsmask.f32 1280
      %vm4062 = vmand %vm4060, %vm4061
      %v4063 = vld [vmem:[#allocation3 + $0x58] sm:$0x3]
      %v4064 = vsel %vm4062, %v4014, %v4063
      %4065 = vst [vmem:[#allocation3 + $0x58] sm:$0x3] %v4064
      %vm4066 = vcmask 91201
      %vm4067 = vsmask.f32 7942
      %vm4068 = vmand %vm4066, %vm4067
      %v4069 = vld [vmem:[#allocation3 + $0x58] sm:$0x2]
      %v4070 = vsel %vm4068, 0, %v4069
      %4071 = vst [vmem:[#allocation3 + $0x58] sm:$0x2] %v4070
      %v4072 = vld [vmem:[#allocation3] sm:$0xf]
      %v4073 = vld [vmem:[#allocation3 + $0x4] sm:$0xf]
      %v4074 = vld [vmem:[#allocation3 + $0x8] sm:$0xf]
      %v4075 = vld [vmem:[#allocation3 + $0xc] sm:$0xf]
      %v4076 = vld [vmem:[#allocation3 + $0x10] sm:$0xf]
      %v4077 = vld [vmem:[#allocation3 + $0x14] sm:$0xf]
      %v4078 = vld [vmem:[#allocation3 + $0x18] sm:$0xf]
      %v4079 = vld [vmem:[#allocation3 + $0x1c] sm:$0xf]
      %v4080 = vld [vmem:[#allocation3 + $0x20] sm:$0xf]
      %v4081 = vld [vmem:[#allocation3 + $0x24] sm:$0xf]
      %v4082 = vld [vmem:[#allocation3 + $0x28] sm:$0xf]
      %v4083 = vld [vmem:[#allocation3 + $0x2c] sm:$0xf]
      %v4084 = vld [vmem:[#allocation3 + $0x30] sm:$0xf]
      %v4085 = vld [vmem:[#allocation3 + $0x34] sm:$0xf]
      %v4086 = vld [vmem:[#allocation3 + $0x38] sm:$0xf]
      %v4087 = vld [vmem:[#allocation3 + $0x3c] sm:$0xf]
      %v4088 = vld [vmem:[#allocation3 + $0x40] sm:$0xf]
      %v4089 = vld [vmem:[#allocation3 + $0x44] sm:$0xf]
      %v4090 = vld [vmem:[%s7] sm:$0xf]
      %v4091 = vld [vmem:[%s7 + $0x4] sm:$0x3]
      %v4092 = vld [vmem:[#allocation3 + $0x8] sm:$0xe]
      %v4093 = vld [vmem:[#allocation3 + $0x48] sm:$0xf]
      %v4094 = vld [vmem:[#allocation3 + $0x4c] sm:$0xf]
      %v4095 = vld [vmem:[#allocation3 + $0x50] sm:$0x1]
      %s4096 = scalar_lea.vmem %s7, 8
      %v4097 = vld [vmem:[%s4096] sm:$0xf]
      %v4098 = vld [vmem:[%s4096 + $0x4] sm:$0x3]
      %v4118 = vunpack.c.l.b16 %v4092
      %v4119 = vunpack.c.l.b16 %v4075
      %v4120 = vunpack.c.l.b16 %v4076
      %v4121 = vunpack.c.l.b16 %v4077
      %v4122 = vunpack.c.l.b16 %v4078
      %v4123 = vunpack.c.l.b16 %v4079
      %v4124 = vunpack.c.l.b16 %v4080
      %v4125 = vunpack.c.l.b16 %v4081
      %v4126 = vunpack.c.l.b16 %v4082
      %v4127 = vunpack.c.l.b16 %v4083
      %v4128 = vunpack.c.l.b16 %v4084
      %v4129 = vunpack.c.l.b16 %v4085
      %v4130 = vunpack.c.l.b16 %v4086
      %v4131 = vunpack.c.l.b16 %v4087
      %v4132 = vunpack.c.l.b16 %v4088
      %v4133 = vunpack.c.l.b16 %v4089
      %v4134 = vunpack.c.l.b16 %v4093
      %v4135 = vunpack.c.l.b16 %v4094
      %v4136 = vunpack.c.l.b16 %v4095
      %v4137 = vpack.c.b16 %v4119, %v4118
      %v4138 = vpack.c.b16 %v4121, %v4120
      %v4139 = vpack.c.b16 %v4123, %v4122
      %v4140 = vpack.c.b16 %v4125, %v4124
      %v4141 = vpack.c.b16 %v4127, %v4126
      %v4142 = vpack.c.b16 %v4129, %v4128
      %v4143 = vpack.c.b16 %v4131, %v4130
      %v4144 = vpack.c.b16 %v4133, %v4132
      %v4145 = vpack.c.b16 %v4135, %v4134
      %v4146 = vpack.c.b16 %v4136, %v4136
      %v4147 = vrot.slane %v4137, 1
      %v4148 = vrot.slane %v4138, 1
      %v4149 = vsel %vm1824, %v4147, %v4148
      %v4150 = vrot.slane %v4139, 1
      %v4151 = vsel %vm1824, %v4148, %v4150
      %v4152 = vrot.slane %v4140, 1
      %v4153 = vsel %vm1824, %v4150, %v4152
      %v4154 = vrot.slane %v4141, 1
      %v4155 = vsel %vm1824, %v4152, %v4154
      %v4156 = vrot.slane %v4142, 1
      %v4157 = vsel %vm1824, %v4154, %v4156
      %v4158 = vrot.slane %v4143, 1
      %v4159 = vsel %vm1824, %v4156, %v4158
      %v4160 = vrot.slane %v4144, 1
      %v4161 = vsel %vm1824, %v4158, %v4160
      %v4162 = vrot.slane %v4145, 1
      %v4163 = vsel %vm1824, %v4160, %v4162
      %v4164 = vrot.slane %v4146, 1
      %v4165 = vsel %vm1824, %v4162, %v4164
      %v4168 = vunpack.c.l.b16 %v4097
      %v4169 = vunpack.c.l.b16 %v4098
      %v4170 = vpack.c.b16 %v4169, %v4168
      %v4172 = vsel %vm1853, %v4149, 0
      %v4175 = vsel %vm1853, %v4151, 0
      %v4178 = vsel %vm1853, %v4153, 0
      %v4181 = vsel %vm1853, %v4155, 0
      %v4184 = vsel %vm1853, %v4157, 0
      %v4187 = vsel %vm1853, %v4159, 0
      %v4190 = vsel %vm1853, %v4161, 0
      %v4193 = vsel %vm1853, %v4163, 0
      %v4196 = vsel %vm1853, %v4165, 0
      %v4199 = vsel %vm1890, %v4170, 0
      %4201 = vmatpush.bf16.msra.mxu0 0
      %4202 = vmatpush.bf16.msra.mxu0 0
      %4203 = vmatpush.bf16.msra.mxu0 0
      %4204 = vmatpush.bf16.msra.mxu0 0
      %4205 = vmatpush.bf16.msra.mxu0 0
      %4206 = vmatpush.bf16.msra.mxu0 0
      %4207 = vmatpush.bf16.msra.mxu0 0
      %4208 = vmatpush.bf16.msra.mxu0 %v4199
      %4209 = vmatmul.bf16.gmra.mxu0 %v4172
      %v4210 = vpop.f32.mrf.mxu0
      %v4211 = vadd.f32 0.0, %v4210
      %v4212 = vpop.f32.mrf.mxu0
      %v4213 = vadd.f32 0.0, %v4212
      %4214 = vmatmul.bf16.gmra.mxu0 %v4175
      %v4215 = vpop.f32.mrf.mxu0
      %v4216 = vadd.f32 0.0, %v4215
      %v4217 = vpop.f32.mrf.mxu0
      %v4218 = vadd.f32 0.0, %v4217
      %4219 = vmatmul.bf16.gmra.mxu0 %v4178
      %v4220 = vpop.f32.mrf.mxu0
      %v4221 = vadd.f32 0.0, %v4220
      %v4222 = vpop.f32.mrf.mxu0
      %v4223 = vadd.f32 0.0, %v4222
      %4224 = vmatmul.bf16.gmra.mxu0 %v4181
      %v4225 = vpop.f32.mrf.mxu0
      %v4226 = vadd.f32 0.0, %v4225
      %v4227 = vpop.f32.mrf.mxu0
      %v4228 = vadd.f32 0.0, %v4227
      %4229 = vmatmul.bf16.gmra.mxu0 %v4184
      %v4230 = vpop.f32.mrf.mxu0
      %v4231 = vadd.f32 0.0, %v4230
      %v4232 = vpop.f32.mrf.mxu0
      %v4233 = vadd.f32 0.0, %v4232
      %4234 = vmatmul.bf16.gmra.mxu0 %v4187
      %v4235 = vpop.f32.mrf.mxu0
      %v4236 = vadd.f32 0.0, %v4235
      %v4237 = vpop.f32.mrf.mxu0
      %v4238 = vadd.f32 0.0, %v4237
      %4239 = vmatmul.bf16.gmra.mxu0 %v4190
      %v4240 = vpop.f32.mrf.mxu0
      %v4241 = vadd.f32 0.0, %v4240
      %v4242 = vpop.f32.mrf.mxu0
      %v4243 = vadd.f32 0.0, %v4242
      %4244 = vmatmul.bf16.gmra.mxu0 %v4193
      %v4245 = vpop.f32.mrf.mxu0
      %v4246 = vadd.f32 0.0, %v4245
      %v4247 = vpop.f32.mrf.mxu0
      %v4248 = vadd.f32 0.0, %v4247
      %4249 = vmatmul.bf16.gmra.mxu0 %v4196
      %v4250 = vpop.f32.mrf.mxu0
      %v4251 = vadd.f32 0.0, %v4250
      %v4252 = vpop.f32.mrf.mxu0
      %v4253 = vadd.f32 0.0, %v4252
      %4254 = vdwg.mxu0
      %v4258 = vunpack.c.l.b16 %v4072
      %v4259 = vunpack.c.l.b16 %v4073
      %v4260 = vunpack.c.l.b16 %v4074
      %v4261 = vpack.c.b16 %v4259, %v4258
      %v4262 = vpack.c.b16 %v4119, %v4260
      %v4265 = vunpack.c.l.b16 %v4090
      %v4266 = vunpack.c.l.b16 %v4091
      %v4267 = vpack.c.b16 %v4266, %v4265
      %v4269 = vsel %vm1853, %v4261, 0
      %v4272 = vsel %vm1853, %v4262, 0
      %v4275 = vsel %vm1853, %v4138, 0
      %v4278 = vsel %vm1853, %v4139, 0
      %v4281 = vsel %vm1853, %v4140, 0
      %v4284 = vsel %vm1853, %v4141, 0
      %v4287 = vsel %vm1853, %v4142, 0
      %v4290 = vsel %vm1853, %v4143, 0
      %v4293 = vsel %vm1853, %v4144, 0
      %v4296 = vsel %vm1890, %v4267, 0
      %4298 = vmatpush.bf16.msra.mxu0 0
      %4299 = vmatpush.bf16.msra.mxu0 0
      %4300 = vmatpush.bf16.msra.mxu0 0
      %4301 = vmatpush.bf16.msra.mxu0 0
      %4302 = vmatpush.bf16.msra.mxu0 0
      %4303 = vmatpush.bf16.msra.mxu0 0
      %4304 = vmatpush.bf16.msra.mxu0 0
      %4305 = vmatpush.bf16.msra.mxu0 %v4296
      %4306 = vmatmul.bf16.gmra.mxu0 %v4269
      %v4307 = vpop.f32.mrf.mxu0
      %v4308 = vadd.f32 %v4211, %v4307
      %v4309 = vpop.f32.mrf.mxu0
      %v4310 = vadd.f32 %v4213, %v4309
      %4311 = vmatmul.bf16.gmra.mxu0 %v4272
      %v4312 = vpop.f32.mrf.mxu0
      %v4313 = vadd.f32 %v4216, %v4312
      %v4314 = vpop.f32.mrf.mxu0
      %v4315 = vadd.f32 %v4218, %v4314
      %4316 = vmatmul.bf16.gmra.mxu0 %v4275
      %v4317 = vpop.f32.mrf.mxu0
      %v4318 = vadd.f32 %v4221, %v4317
      %v4319 = vpop.f32.mrf.mxu0
      %v4320 = vadd.f32 %v4223, %v4319
      %4321 = vmatmul.bf16.gmra.mxu0 %v4278
      %v4322 = vpop.f32.mrf.mxu0
      %v4323 = vadd.f32 %v4226, %v4322
      %v4324 = vpop.f32.mrf.mxu0
      %v4325 = vadd.f32 %v4228, %v4324
      %4326 = vmatmul.bf16.gmra.mxu0 %v4281
      %v4327 = vpop.f32.mrf.mxu0
      %v4328 = vadd.f32 %v4231, %v4327
      %v4329 = vpop.f32.mrf.mxu0
      %v4330 = vadd.f32 %v4233, %v4329
      %4331 = vmatmul.bf16.gmra.mxu0 %v4284
      %v4332 = vpop.f32.mrf.mxu0
      %v4333 = vadd.f32 %v4236, %v4332
      %v4334 = vpop.f32.mrf.mxu0
      %v4335 = vadd.f32 %v4238, %v4334
      %4336 = vmatmul.bf16.gmra.mxu0 %v4287
      %v4337 = vpop.f32.mrf.mxu0
      %v4338 = vadd.f32 %v4241, %v4337
      %v4339 = vpop.f32.mrf.mxu0
      %v4340 = vadd.f32 %v4243, %v4339
      %4341 = vmatmul.bf16.gmra.mxu0 %v4290
      %v4342 = vpop.f32.mrf.mxu0
      %v4343 = vadd.f32 %v4246, %v4342
      %v4344 = vpop.f32.mrf.mxu0
      %v4345 = vadd.f32 %v4248, %v4344
      %4346 = vmatmul.bf16.gmra.mxu0 %v4293
      %v4347 = vpop.f32.mrf.mxu0
      %v4348 = vadd.f32 %v4251, %v4347
      %v4349 = vpop.f32.mrf.mxu0
      %v4350 = vadd.f32 %v4253, %v4349
      %4351 = vdwg.mxu0
      %v4352 = vld [vmem:[#allocation3 + $0x10] sm:$0xc]
      %v4353 = vld [vmem:[#allocation3 + $0x14] sm:$0xf]
      %v4354 = vld [vmem:[#allocation3 + $0x18] sm:$0xf]
      %v4355 = vld [vmem:[#allocation3 + $0x1c] sm:$0xf]
      %v4356 = vld [vmem:[#allocation3 + $0x20] sm:$0xf]
      %v4357 = vld [vmem:[#allocation3 + $0x24] sm:$0xf]
      %v4358 = vld [vmem:[#allocation3 + $0x28] sm:$0xf]
      %v4359 = vld [vmem:[#allocation3 + $0x2c] sm:$0xf]
      %v4360 = vld [vmem:[#allocation3 + $0x30] sm:$0xf]
      %v4361 = vld [vmem:[#allocation3 + $0x34] sm:$0xf]
      %v4362 = vld [vmem:[#allocation3 + $0x38] sm:$0xf]
      %v4363 = vld [vmem:[#allocation3 + $0x3c] sm:$0xf]
      %v4364 = vld [vmem:[#allocation3 + $0x40] sm:$0xf]
      %v4365 = vld [vmem:[#allocation3 + $0x44] sm:$0xf]
      %v4366 = vld [vmem:[#allocation3 + $0x48] sm:$0xf]
      %v4367 = vld [vmem:[#allocation3 + $0x4c] sm:$0xf]
      %v4368 = vld [vmem:[#allocation3 + $0x50] sm:$0xf]
      %v4369 = vld [vmem:[#allocation3 + $0x54] sm:$0xf]
      %v4370 = vld [vmem:[#allocation3 + $0x58] sm:$0x3]
      %s4371 = scalar_lea.vmem %s7, 16
      %v4372 = vld [vmem:[%s4371] sm:$0xf]
      %v4373 = vld [vmem:[%s4371 + $0x4] sm:$0x3]
      %v4393 = vunpack.c.l.b16 %v4352
      %v4394 = vunpack.c.l.b16 %v4353
      %v4395 = vunpack.c.l.b16 %v4354
      %v4396 = vunpack.c.l.b16 %v4355
      %v4397 = vunpack.c.l.b16 %v4356
      %v4398 = vunpack.c.l.b16 %v4357
      %v4399 = vunpack.c.l.b16 %v4358
      %v4400 = vunpack.c.l.b16 %v4359
      %v4401 = vunpack.c.l.b16 %v4360
      %v4402 = vunpack.c.l.b16 %v4361
      %v4403 = vunpack.c.l.b16 %v4362
      %v4404 = vunpack.c.l.b16 %v4363
      %v4405 = vunpack.c.l.b16 %v4364
      %v4406 = vunpack.c.l.b16 %v4365
      %v4407 = vunpack.c.l.b16 %v4366
      %v4408 = vunpack.c.l.b16 %v4367
      %v4409 = vunpack.c.l.b16 %v4368
      %v4410 = vunpack.c.l.b16 %v4369
      %v4411 = vunpack.c.l.b16 %v4370
      %v4412 = vpack.c.b16 %v4394, %v4393
      %v4413 = vpack.c.b16 %v4396, %v4395
      %v4414 = vpack.c.b16 %v4398, %v4397
      %v4415 = vpack.c.b16 %v4400, %v4399
      %v4416 = vpack.c.b16 %v4402, %v4401
      %v4417 = vpack.c.b16 %v4404, %v4403
      %v4418 = vpack.c.b16 %v4406, %v4405
      %v4419 = vpack.c.b16 %v4408, %v4407
      %v4420 = vpack.c.b16 %v4410, %v4409
      %v4421 = vpack.c.b16 %v4411, %v4411
      %v4422 = vrot.slane %v4412, 2
      %v4423 = vrot.slane %v4413, 2
      %v4424 = vsel %vm2169, %v4422, %v4423
      %v4425 = vrot.slane %v4414, 2
      %v4426 = vsel %vm2169, %v4423, %v4425
      %v4427 = vrot.slane %v4415, 2
      %v4428 = vsel %vm2169, %v4425, %v4427
      %v4429 = vrot.slane %v4416, 2
      %v4430 = vsel %vm2169, %v4427, %v4429
      %v4431 = vrot.slane %v4417, 2
      %v4432 = vsel %vm2169, %v4429, %v4431
      %v4433 = vrot.slane %v4418, 2
      %v4434 = vsel %vm2169, %v4431, %v4433
      %v4435 = vrot.slane %v4419, 2
      %v4436 = vsel %vm2169, %v4433, %v4435
      %v4437 = vrot.slane %v4420, 2
      %v4438 = vsel %vm2169, %v4435, %v4437
      %v4439 = vrot.slane %v4421, 2
      %v4440 = vsel %vm2169, %v4437, %v4439
      %v4443 = vunpack.c.l.b16 %v4372
      %v4444 = vunpack.c.l.b16 %v4373
      %v4445 = vpack.c.b16 %v4444, %v4443
      %v4447 = vsel %vm1853, %v4424, 0
      %v4450 = vsel %vm1853, %v4426, 0
      %v4453 = vsel %vm1853, %v4428, 0
      %v4456 = vsel %vm1853, %v4430, 0
      %v4459 = vsel %vm1853, %v4432, 0
      %v4462 = vsel %vm1853, %v4434, 0
      %v4465 = vsel %vm1853, %v4436, 0
      %v4468 = vsel %vm1853, %v4438, 0
      %v4471 = vsel %vm1853, %v4440, 0
      %v4474 = vsel %vm1890, %v4445, 0
      %4476 = vmatpush.bf16.msra.mxu0 0
      %4477 = vmatpush.bf16.msra.mxu0 0
      %4478 = vmatpush.bf16.msra.mxu0 0
      %4479 = vmatpush.bf16.msra.mxu0 0
      %4480 = vmatpush.bf16.msra.mxu0 0
      %4481 = vmatpush.bf16.msra.mxu0 0
      %4482 = vmatpush.bf16.msra.mxu0 0
      %4483 = vmatpush.bf16.msra.mxu0 %v4474
      %4484 = vmatmul.bf16.gmra.mxu0 %v4447
      %v4485 = vpop.f32.mrf.mxu0
      %v4486 = vadd.f32 0.0, %v4485
      %v4487 = vpop.f32.mrf.mxu0
      %v4488 = vadd.f32 0.0, %v4487
      %4489 = vmatmul.bf16.gmra.mxu0 %v4450
      %v4490 = vpop.f32.mrf.mxu0
      %v4491 = vadd.f32 0.0, %v4490
      %v4492 = vpop.f32.mrf.mxu0
      %v4493 = vadd.f32 0.0, %v4492
      %4494 = vmatmul.bf16.gmra.mxu0 %v4453
      %v4495 = vpop.f32.mrf.mxu0
      %v4496 = vadd.f32 0.0, %v4495
      %v4497 = vpop.f32.mrf.mxu0
      %v4498 = vadd.f32 0.0, %v4497
      %4499 = vmatmul.bf16.gmra.mxu0 %v4456
      %v4500 = vpop.f32.mrf.mxu0
      %v4501 = vadd.f32 0.0, %v4500
      %v4502 = vpop.f32.mrf.mxu0
      %v4503 = vadd.f32 0.0, %v4502
      %4504 = vmatmul.bf16.gmra.mxu0 %v4459
      %v4505 = vpop.f32.mrf.mxu0
      %v4506 = vadd.f32 0.0, %v4505
      %v4507 = vpop.f32.mrf.mxu0
      %v4508 = vadd.f32 0.0, %v4507
      %4509 = vmatmul.bf16.gmra.mxu0 %v4462
      %v4510 = vpop.f32.mrf.mxu0
      %v4511 = vadd.f32 0.0, %v4510
      %v4512 = vpop.f32.mrf.mxu0
      %v4513 = vadd.f32 0.0, %v4512
      %4514 = vmatmul.bf16.gmra.mxu0 %v4465
      %v4515 = vpop.f32.mrf.mxu0
      %v4516 = vadd.f32 0.0, %v4515
      %v4517 = vpop.f32.mrf.mxu0
      %v4518 = vadd.f32 0.0, %v4517
      %4519 = vmatmul.bf16.gmra.mxu0 %v4468
      %v4520 = vpop.f32.mrf.mxu0
      %v4521 = vadd.f32 0.0, %v4520
      %v4522 = vpop.f32.mrf.mxu0
      %v4523 = vadd.f32 0.0, %v4522
      %4524 = vmatmul.bf16.gmra.mxu0 %v4471
      %v4525 = vpop.f32.mrf.mxu0
      %v4526 = vadd.f32 0.0, %v4525
      %v4527 = vpop.f32.mrf.mxu0
      %v4528 = vadd.f32 0.0, %v4527
      %4529 = vdwg.mxu0
      %v4530 = vadd.f32 %v4308, %v4486
      %v4531 = vadd.f32 %v4310, %v4488
      %v4532 = vadd.f32 %v4313, %v4491
      %v4533 = vadd.f32 %v4315, %v4493
      %v4534 = vadd.f32 %v4318, %v4496
      %v4535 = vadd.f32 %v4320, %v4498
      %v4536 = vadd.f32 %v4323, %v4501
      %v4537 = vadd.f32 %v4325, %v4503
      %v4538 = vadd.f32 %v4328, %v4506
      %v4539 = vadd.f32 %v4330, %v4508
      %v4540 = vadd.f32 %v4333, %v4511
      %v4541 = vadd.f32 %v4335, %v4513
      %v4542 = vadd.f32 %v4338, %v4516
      %v4543 = vadd.f32 %v4340, %v4518
      %v4544 = vadd.f32 %v4343, %v4521
      %v4545 = vadd.f32 %v4345, %v4523
      %v4546 = vadd.f32 %v4348, %v4526
      %v4547 = vadd.f32 %v4350, %v4528
      %v4548 = vld [vmem:[%s8] sm:$0x1]
      %v4550 = vperm.slane %v4548, 0
      %v4552 = vadd.f32 %v4530, %v4550
      %v4553 = vadd.f32 %v4531, %v4550
      %v4554 = vadd.f32 %v4532, %v4550
      %v4555 = vadd.f32 %v4533, %v4550
      %v4556 = vadd.f32 %v4534, %v4550
      %v4557 = vadd.f32 %v4535, %v4550
      %v4558 = vadd.f32 %v4536, %v4550
      %v4559 = vadd.f32 %v4537, %v4550
      %v4560 = vadd.f32 %v4538, %v4550
      %v4561 = vadd.f32 %v4539, %v4550
      %v4562 = vadd.f32 %v4540, %v4550
      %v4563 = vadd.f32 %v4541, %v4550
      %v4564 = vadd.f32 %v4542, %v4550
      %v4565 = vadd.f32 %v4543, %v4550
      %v4566 = vadd.f32 %v4544, %v4550
      %v4567 = vadd.f32 %v4545, %v4550
      %v4568 = vadd.f32 %v4546, %v4550
      %v4569 = vadd.f32 %v4547, %v4550
      %v4570 = vunpack.c.l.bf16 %v665
      %v4571 = vunpack.c.l.bf16 %v666
      %v4572 = vunpack.c.l.bf16 %v667
      %v4573 = vunpack.c.l.bf16 %v668
      %v4574 = vunpack.c.l.bf16 %v669
      %v4575 = vunpack.c.l.bf16 %v670
      %v4576 = vunpack.c.l.bf16 %v671
      %v4577 = vunpack.c.l.bf16 %v672
      %v4578 = vunpack.c.l.bf16 %v673
      %v4579 = vunpack.c.l.bf16 %v674
      %v4580 = vunpack.c.l.bf16 %v675
      %v4581 = vunpack.c.l.bf16 %v676
      %v4582 = vunpack.c.l.bf16 %v677
      %v4583 = vunpack.c.l.bf16 %v678
      %v4584 = vunpack.c.l.bf16 %v679
      %v4585 = vunpack.c.l.bf16 %v680
      %v4586 = vunpack.c.l.bf16 %v681
      %v4587 = vunpack.c.l.bf16 %v682
      %v4588 = vadd.f32 %v4552, %v4570
      %v4589 = vadd.f32 %v4553, %v4571
      %v4590 = vadd.f32 %v4554, %v4572
      %v4591 = vadd.f32 %v4555, %v4573
      %v4592 = vadd.f32 %v4556, %v4574
      %v4593 = vadd.f32 %v4557, %v4575
      %v4594 = vadd.f32 %v4558, %v4576
      %v4595 = vadd.f32 %v4559, %v4577
      %v4596 = vadd.f32 %v4560, %v4578
      %v4597 = vadd.f32 %v4561, %v4579
      %v4598 = vadd.f32 %v4562, %v4580
      %v4599 = vadd.f32 %v4563, %v4581
      %v4600 = vadd.f32 %v4564, %v4582
      %v4601 = vadd.f32 %v4565, %v4583
      %v4602 = vadd.f32 %v4566, %v4584
      %v4603 = vadd.f32 %v4567, %v4585
      %v4604 = vadd.f32 %v4568, %v4586
      %v4605 = vadd.f32 %v4569, %v4587
      %vm4606 = vcmask 31744
      %4607 = vst.msk [vmem:[%s618] sm:$0xff] %vm4606, %v4588
      %4608 = vst.msk [vmem:[%s618 + $0x8] sm:$0xff] %vm4606, %v4589
      %4609 = vst.msk [vmem:[%s618 + $0x10] sm:$0xff] %vm4606, %v4590
      %4610 = vst.msk [vmem:[%s618 + $0x18] sm:$0xff] %vm4606, %v4591
      %4611 = vst.msk [vmem:[%s618 + $0x20] sm:$0xff] %vm4606, %v4592
      %4612 = vst.msk [vmem:[%s618 + $0x28] sm:$0xff] %vm4606, %v4593
      %4613 = vst.msk [vmem:[%s618 + $0x30] sm:$0xff] %vm4606, %v4594
      %4614 = vst.msk [vmem:[%s618 + $0x38] sm:$0xff] %vm4606, %v4595
      %4615 = vst.msk [vmem:[%s618 + $0x40] sm:$0xff] %vm4606, %v4596
      %4616 = vst.msk [vmem:[%s618 + $0x48] sm:$0xff] %vm4606, %v4597
      %4617 = vst.msk [vmem:[%s618 + $0x50] sm:$0xff] %vm4606, %v4598
      %4618 = vst.msk [vmem:[%s618 + $0x58] sm:$0xff] %vm4606, %v4599
      %4619 = vst.msk [vmem:[%s618 + $0x60] sm:$0xff] %vm4606, %v4600
      %4620 = vst.msk [vmem:[%s618 + $0x68] sm:$0xff] %vm4606, %v4601
      %4621 = vst.msk [vmem:[%s618 + $0x70] sm:$0xff] %vm4606, %v4602
      %4622 = vst.msk [vmem:[%s618 + $0x78] sm:$0xff] %vm4606, %v4603
      %4623 = vst.msk [vmem:[%s618 + $0x80] sm:$0xff] %vm4606, %v4604
      %4624 = vst.msk [vmem:[%s618 + $0x88] sm:$0xff] %vm4606, %v4605
      %s4625 = smul.u32 18, %s25
      %p4626 = scmp.lt.s32.totalorder %s24, 1
      %s4627 = scalar_select %p4626, %s24, 1
      %p4628 = scmp.lt.s32.totalorder %s4625, 35
      %s4629 = scalar_select %p4628, %s4625, 35
      %s4630 = smul.addr %s4627, 36
      %s4631 = sadd.s32 %s4629, %s4630
      %s4632 = smul.addr %s4631, 8
      %s4633 = scalar_lea.vmem %s9, %s4632
      // Predicated region
      $region57: #{tpu_custom_call.1} parent=55 // pred_check
        %p4634 = pneg %p308
      $region58: #{tpu_custom_call.1} parent=55 // pred_check_branch
        %4636 = sbr.rel (%p4634) target = $region60
      $region59: #{tpu_custom_call.1} parent=55 // pred_region
        %s4637 = smul.u32 18, %s25
      $region60: #{tpu_custom_call.1} parent=55 // pred_fallthru
        _
    $region56: #{tpu_custom_call.1} parent=5 // pred_fallthru
      _
    %p4638 = scmp.le.s32.totalorder 2, %s15
    // Predicated region
    $region61: #{tpu_custom_call.1} parent=5 // pred_check
      %p4639 = pneg %p4638
    $region62: #{tpu_custom_call.1} parent=5 // pred_check_branch
      %4641 = sbr.rel (%p4639) target = $region64
    $region63: #{tpu_custom_call.1} parent=5 // pred_region
      %s4642 = ssub.s32 %s15, 2
      // Predicated region
      $region65: #{tpu_custom_call.1} parent=63 // pred_check
        %p4643 = pneg %p314
      $region66: #{tpu_custom_call.1} parent=63 // pred_check_branch
        %4645 = sbr.rel (%p4643) target = $region68
      $region67: #{tpu_custom_call.1} parent=63 // pred_region
        %s4646 = smul.u32 18, %s27
        %p4647 = scmp.lt.s32.totalorder %s26, 1
        %s4648 = scalar_select %p4647, %s26, 1
        %p4649 = scmp.lt.s32.totalorder %s4646, 35
        %s4650 = scalar_select %p4649, %s4646, 35
        %s4651 = smul.addr %s4648, 36
        %s4652 = sadd.s32 %s4650, %s4651
        %s4653 = smul.addr %s4652, 8
        %s4654 = scalar_lea.vmem %s9, %s4653
      $region68: #{tpu_custom_call.1} parent=63 // pred_fallthru
        _
    $region64: #{tpu_custom_call.1} parent=5 // pred_fallthru
      _
  $region6: #{tpu_custom_call.1} parent=0 // loop_footer
    %s19 = sadd.s32 1, %s15
  $region7: #{tpu_custom_call.1} parent=0 // loop_footer_branch
    %14 = sbr.rel target = $region3
  $region8: #{tpu_custom_call.1} parent=0 // loop_exit
    _

</llo_original>
